<compile_context>
chip_gen: v7x
topology: tpu7x:2x2x1
jax: 0.10.0
libtpu: 0.0.40
codegen_flags: <defaults>
</compile_context>

<pallas_src>
import math
import functools

import jax
import jax.numpy as jnp
from jax import lax
from jax.experimental import pallas as pl
from jax.experimental.pallas import tpu as pltpu


# ------------------------------ kernel helpers ------------------------------

def _leaky(x, slope):
    return jnp.where(x >= 0, x, x * slope)


def _layernorm(x, g, b, eps=1e-5):
    mu = jnp.mean(x, axis=-1, keepdims=True)
    xc = x - mu
    var = jnp.mean(xc * xc, axis=-1, keepdims=True)
    return xc * lax.rsqrt(var + eps) * g + b


# ------------------------------ fused kernel --------------------------------

def _fused_kernel(x_ref, tsin_ref, ctx_ref,
                  in_w, in_b, te_w0, te_b0, te_w1, te_b1,
                  emb_w, emb_b,
                  ln1_g, ln1_b, wq, wk, wv, wo, bo,
                  ln2_g, ln2_b, fc1_w, fc1_b, fc2_w, fc2_b,
                  out_w, out_b,
                  o_ref,
                  xt_sc, e_sc,
                  *, heads, dim_head, batch, seq_q, depth):
    f32 = jnp.float32
    bf16 = jnp.bfloat16
    d = pl.program_id(0)
    last = pl.num_programs(0) - 1
    rows = batch * seq_q
    hidden = xt_sc.shape[-1]
    seq_kv = ctx_ref.shape[0] // batch

    # ---- one-time prologue (d == 0): input proj, time-embed MLP, and ALL
    #      per-depth time-embedding additions (hoisted out of the hot loop).
    @pl.when(d == 0)
    def _prologue():
        xt_sc[...] = (jnp.dot(x_ref[...], in_w[...],
                              preferred_element_type=f32) + in_b[...])
        t0 = jnp.dot(tsin_ref[...], te_w0[...],
                     preferred_element_type=f32) + te_b0[...]
        t0 = _leaky(t0, 0.2)                           # LeakyReLU(0.2) per spec
        t_emb = jnp.dot(t0, te_w1[...],
                        preferred_element_type=f32) + te_b1[...]      # (B, E)
        t_emb_b = t_emb.astype(bf16)
        for dd in range(depth):                        # static unroll, tiny
            e = (jnp.dot(t_emb_b, emb_w[dd], preferred_element_type=f32)
                 + emb_b[dd])                                          # (B, H)
            e_sc[dd] = jnp.broadcast_to(
                e[:, None, :], (batch, seq_q, hidden)).reshape(rows, hidden)

    # ---- x_t += emb_modules[d](t_emb)   (precomputed, broadcast over rows)
    x_t = xt_sc[...] + e_sc[d]                                         # (R, H)

    # ---- CrossAttnBlock: x = shortcut + attn(norm1(x), context)
    h = _layernorm(x_t, ln1_g[...], ln1_b[...])
    h_b = h.astype(bf16)
    ctx_b = ctx_ref[...].astype(bf16)                                  # (B*M, C)

    attn = jnp.zeros((rows, hidden), f32)
    for hh in range(heads):                           # static, ref-level slices
        qh = jnp.dot(h_b, wq[hh], preferred_element_type=f32)      # (R, dh)
        kh = jnp.dot(ctx_b, wk[hh], preferred_element_type=f32)    # (B*M, dh)
        vh = jnp.dot(ctx_b, wv[hh], preferred_element_type=f32)
        q3 = qh.reshape(batch, seq_q, dim_head)
        k3 = kh.reshape(batch, seq_kv, dim_head)
        v3 = vh.reshape(batch, seq_kv, dim_head)
        s = jnp.einsum('bnd,bmd->bnm', q3, k3,
                       preferred_element_type=f32)                 # scale in wq
        s = s - jnp.max(s, axis=-1, keepdims=True)
        p = jnp.exp(s)
        p = p / jnp.sum(p, axis=-1, keepdims=True)     # exact (numerical parity)
        o3 = jnp.einsum('bnm,bmd->bnd', p, v3, preferred_element_type=f32)
        oh = o3.reshape(rows, dim_head).astype(bf16)
        attn = attn + jnp.dot(oh, wo[hh], preferred_element_type=f32)

    x_t = x_t + attn + bo[...]

    # ---- x = x + mlp(norm2(x));  Mlp act = LeakyReLU(0.01) (nn.LeakyReLU default)
    h2 = _layernorm(x_t, ln2_g[...], ln2_b[...]).astype(bf16)
    m1 = _leaky(jnp.dot(h2, fc1_w[...], preferred_element_type=f32)
                + fc1_b[...], 0.01)
    x_t = x_t + jnp.dot(m1.astype(bf16), fc2_w[...],
                        preferred_element_type=f32) + fc2_b[...]

    xt_sc[...] = x_t

    # ---- epilogue: out = Linear(LeakyReLU(0.2)(x_t))
    @pl.when(d == last)
    def _epilogue():
        o_ref[...] = (jnp.dot(_leaky(x_t, 0.2), out_w[...],
                              preferred_element_type=f32) + out_b[...])


# ------------------------------ plain-JAX glue -------------------------------

def timestep_embedding(timesteps, dim, max_period=10000):
    half = dim // 2
    freqs = jnp.exp(-math.log(max_period) *
                    jnp.arange(half, dtype=jnp.float32) / half)
    args = timesteps.astype(jnp.float32)[:, None] * freqs[None]
    emb = jnp.concatenate([jnp.cos(args), jnp.sin(args)], axis=-1)
    if dim % 2:
        emb = jnp.concatenate([emb, jnp.zeros_like(emb[:, :1])], axis=-1)
    return emb


def init_params(key, noise, hidden, ctx, embed, depth, heads, dim_head):
    mlp_hidden = int(hidden * 4.0)
    scale = dim_head ** -0.5
    bf16 = jnp.bfloat16

    def dense(k, *shape, dtype=jnp.float32):
        return (jax.random.normal(k, shape, jnp.float32) * 0.02).astype(dtype)

    keys = iter(jax.random.split(key, 32))
    return {
        # top-level (small, f32)
        'input_w': dense(next(keys), noise, hidden),
        'input_b': jnp.zeros((1, hidden), jnp.float32),
        'te_w0': dense(next(keys), embed, embed),
        'te_b0': jnp.zeros((1, embed), jnp.float32),
        'te_w1': dense(next(keys), embed, embed),
        'te_b1': jnp.zeros((1, embed), jnp.float32),
        'out_w': dense(next(keys), hidden, noise),
        'out_b': jnp.zeros((1, noise), jnp.float32),
        # per-block weights stacked along a leading depth axis; big mats in bf16
        'emb_w': dense(next(keys), depth, embed, hidden, dtype=bf16),
        'emb_b': jnp.zeros((depth, 1, hidden), jnp.float32),
        'ln1_g': jnp.ones((depth, 1, hidden), jnp.float32),
        'ln1_b': jnp.zeros((depth, 1, hidden), jnp.float32),
        # attention: head-stacked, scale folded into wq at init (no per-step mul)
        'wq': (dense(next(keys), depth, heads, hidden, dim_head) * scale
               ).astype(bf16),
        'wk': dense(next(keys), depth, heads, ctx, dim_head, dtype=bf16),
        'wv': dense(next(keys), depth, heads, ctx, dim_head, dtype=bf16),
        'wo': dense(next(keys), depth, heads, dim_head, hidden, dtype=bf16),
        'bo': jnp.zeros((depth, 1, hidden), jnp.float32),
        'ln2_g': jnp.ones((depth, 1, hidden), jnp.float32),
        'ln2_b': jnp.zeros((depth, 1, hidden), jnp.float32),
        'fc1_w': dense(next(keys), depth, hidden, mlp_hidden, dtype=bf16),
        'fc1_b': jnp.zeros((depth, 1, mlp_hidden), jnp.float32),
        'fc2_w': dense(next(keys), depth, mlp_hidden, hidden, dtype=bf16),
        'fc2_b': jnp.zeros((depth, 1, hidden), jnp.float32),
    }


def multi_attention_net(params, x, timesteps, context, *, heads, dim_head):
    B, N, noise = x.shape
    _, M, ctx = context.shape
    hidden = params['input_w'].shape[1]
    embed = params['te_w0'].shape[0]
    depth = params['ln1_g'].shape[0]
    mlp_hidden = params['fc1_w'].shape[-1]
    rows = B * N

    # Sinusoidal timestep embedding (tiny; plain-JAX glue), shaped (B, E).
    t_sin = timestep_embedding(timesteps, embed)
    # Fuse batch into rows so per-depth weights are streamed exactly once.
    x2d = x.reshape(rows, noise)
    ctx2d = context.reshape(B * M, ctx)

    # BlockSpec helpers --------------------------------------------------
    def full_spec(shape):                 # whole array, depth-invariant block
        nd = len(shape)
        return pl.BlockSpec(shape, lambda d, _nd=nd: (0,) * _nd)

    def depth_spec(shape):                # stacked per-block weights, index by d
        nd = len(shape)
        return pl.BlockSpec((None,) + shape,
                            lambda d, _nd=nd: (d,) + (0,) * _nd)

    kernel = functools.partial(_fused_kernel, heads=heads, dim_head=dim_head,
                               batch=B, seq_q=N, depth=depth)

    out2d = pl.pallas_call(
        kernel,
        out_shape=jax.ShapeDtypeStruct((rows, noise), jnp.float32),
        grid_spec=pltpu.PrefetchScalarGridSpec(
            num_scalar_prefetch=0,
            grid=(depth,),
            in_specs=[
                full_spec((rows, noise)),               # x (fused rows)
                full_spec((B, embed)),                  # sinusoidal t embedding
                full_spec((B * M, ctx)),                # context (fused rows)
                full_spec((noise, hidden)),             # input_w
                full_spec((1, hidden)),                 # input_b
                full_spec((embed, embed)),              # te_w0
                full_spec((1, embed)),                  # te_b0
                full_spec((embed, embed)),              # te_w1
                full_spec((1, embed)),                  # te_b1
                full_spec((depth, embed, hidden)),      # emb_w (all depths, prologue)
                full_spec((depth, 1, hidden)),          # emb_b (all depths, prologue)
                depth_spec((1, hidden)),                # ln1_g
                depth_spec((1, hidden)),                # ln1_b
                depth_spec((heads, hidden, dim_head)),  # wq (scale folded in)
                depth_spec((heads, ctx, dim_head)),     # wk
                depth_spec((heads, ctx, dim_head)),     # wv
                depth_spec((heads, dim_head, hidden)),  # wo
                depth_spec((1, hidden)),                # bo
                depth_spec((1, hidden)),                # ln2_g
                depth_spec((1, hidden)),                # ln2_b
                depth_spec((hidden, mlp_hidden)),       # fc1_w
                depth_spec((1, mlp_hidden)),            # fc1_b
                depth_spec((mlp_hidden, hidden)),       # fc2_w
                depth_spec((1, hidden)),                # fc2_b
                full_spec((hidden, noise)),             # out_w
                full_spec((1, noise)),                  # out_b
            ],
            out_specs=full_spec((rows, noise)),
            scratch_shapes=[
                pltpu.VMEM((rows, hidden), jnp.float32),         # resident x_t
                pltpu.VMEM((depth, rows, hidden), jnp.float32),  # hoisted e_d rows
            ],
        ),
        compiler_params=pltpu.CompilerParams(
            dimension_semantics=("arbitrary",)),
    )(x2d, t_sin, ctx2d,
      params['input_w'], params['input_b'],
      params['te_w0'], params['te_b0'],
      params['te_w1'], params['te_b1'],
      params['emb_w'], params['emb_b'],
      params['ln1_g'], params['ln1_b'],
      params['wq'], params['wk'], params['wv'],
      params['wo'], params['bo'],
      params['ln2_g'], params['ln2_b'],
      params['fc1_w'], params['fc1_b'],
      params['fc2_w'], params['fc2_b'],
      params['out_w'], params['out_b'])
    return out2d.reshape(B, N, noise)


# ---------------------------------- main ------------------------------------

if __name__ == "__main__":
    noise_size, hidden_size, context_size, embed_size, depth = 16, 128, 32, 32, 2
    num_head_channels = 64
    heads = hidden_size // num_head_channels      # = 2
    B, N, M = 2, 8, 8

    key = jax.random.PRNGKey(0)
    kp, kx, kc = jax.random.split(key, 3)
    params = init_params(kp, noise_size, hidden_size, context_size, embed_size,
                         depth, heads, num_head_channels)
    x = jax.random.normal(kx, (B, N, noise_size), jnp.float32)
    context = jax.random.normal(kc, (B, M, context_size), jnp.float32)
    timesteps = jnp.array([3.0, 17.0], jnp.float32)

    fwd = jax.jit(functools.partial(multi_attention_net, heads=heads,
                                    dim_head=num_head_channels))
    y = fwd(params, x, timesteps, context)
    jax.block_until_ready(y)
    assert y.shape == (B, N, noise_size) and y.dtype == jnp.float32
    print("KERNEL_OK")
</pallas_src>

<mosaic_0001>
module attributes {stable_mosaic.version = 11 : i64} {
  func.func @_fused_kernel(%arg0: i32, %arg1: memref<16x16xf32, #tpu.memory_space<vmem>>, %arg2: memref<2x32xf32, #tpu.memory_space<vmem>>, %arg3: memref<16x32xf32, #tpu.memory_space<vmem>>, %arg4: memref<16x128xf32, #tpu.memory_space<vmem>>, %arg5: memref<1x128xf32, #tpu.memory_space<vmem>>, %arg6: memref<32x32xf32, #tpu.memory_space<vmem>>, %arg7: memref<1x32xf32, #tpu.memory_space<vmem>>, %arg8: memref<32x32xf32, #tpu.memory_space<vmem>>, %arg9: memref<1x32xf32, #tpu.memory_space<vmem>>, %arg10: memref<2x32x128xbf16, #tpu.memory_space<vmem>>, %arg11: memref<2x1x128xf32, #tpu.memory_space<vmem>>, %arg12: memref<1x1x128xf32, #tpu.memory_space<vmem>>, %arg13: memref<1x1x128xf32, #tpu.memory_space<vmem>>, %arg14: memref<1x2x128x64xbf16, #tpu.memory_space<vmem>>, %arg15: memref<1x2x32x64xbf16, #tpu.memory_space<vmem>>, %arg16: memref<1x2x32x64xbf16, #tpu.memory_space<vmem>>, %arg17: memref<1x2x64x128xbf16, #tpu.memory_space<vmem>>, %arg18: memref<1x1x128xf32, #tpu.memory_space<vmem>>, %arg19: memref<1x1x128xf32, #tpu.memory_space<vmem>>, %arg20: memref<1x1x128xf32, #tpu.memory_space<vmem>>, %arg21: memref<1x128x512xbf16, #tpu.memory_space<vmem>>, %arg22: memref<1x1x512xf32, #tpu.memory_space<vmem>>, %arg23: memref<1x512x128xbf16, #tpu.memory_space<vmem>>, %arg24: memref<1x1x128xf32, #tpu.memory_space<vmem>>, %arg25: memref<128x16xf32, #tpu.memory_space<vmem>>, %arg26: memref<1x16xf32, #tpu.memory_space<vmem>>, %arg27: memref<16x16xf32, #tpu.memory_space<vmem>>, %arg28: memref<16x128xf32, #tpu.memory_space<vmem>>, %arg29: memref<2x16x128xf32, #tpu.memory_space<vmem>>) attributes {dimension_semantics = [#tpu.dimension_semantics<arbitrary>], iteration_bounds = array<i64: 2>, scalar_prefetch = 0 : i64, scratch_operands = 2 : i64, tpu.core_type = #tpu.core_type<tc>, window_params = [{pipeline_mode = #tpu.pipeline_mode<synchronous>, transform_indices = @transform_0, window_bounds = array<i64: 16, 16>}, {pipeline_mode = #tpu.pipeline_mode<synchronous>, transform_indices = @transform_1, window_bounds = array<i64: 2, 32>}, {pipeline_mode = #tpu.pipeline_mode<synchronous>, transform_indices = @transform_2, window_bounds = array<i64: 16, 32>}, {pipeline_mode = #tpu.pipeline_mode<synchronous>, transform_indices = @transform_3, window_bounds = array<i64: 16, 128>}, {pipeline_mode = #tpu.pipeline_mode<synchronous>, transform_indices = @transform_4, window_bounds = array<i64: 1, 128>}, {pipeline_mode = #tpu.pipeline_mode<synchronous>, transform_indices = @transform_5, window_bounds = array<i64: 32, 32>}, {pipeline_mode = #tpu.pipeline_mode<synchronous>, transform_indices = @transform_6, window_bounds = array<i64: 1, 32>}, {pipeline_mode = #tpu.pipeline_mode<synchronous>, transform_indices = @transform_7, window_bounds = array<i64: 32, 32>}, {pipeline_mode = #tpu.pipeline_mode<synchronous>, transform_indices = @transform_8, window_bounds = array<i64: 1, 32>}, {pipeline_mode = #tpu.pipeline_mode<synchronous>, transform_indices = @transform_9, window_bounds = array<i64: 2, 32, 128>}, {pipeline_mode = #tpu.pipeline_mode<synchronous>, transform_indices = @transform_10, window_bounds = array<i64: 2, 1, 128>}, {transform_indices = @transform_11, window_bounds = array<i64: 1, 1, 128>}, {transform_indices = @transform_12, window_bounds = array<i64: 1, 1, 128>}, {transform_indices = @transform_13, window_bounds = array<i64: 1, 2, 128, 64>}, {transform_indices = @transform_14, window_bounds = array<i64: 1, 2, 32, 64>}, {transform_indices = @transform_15, window_bounds = array<i64: 1, 2, 32, 64>}, {transform_indices = @transform_16, window_bounds = array<i64: 1, 2, 64, 128>}, {transform_indices = @transform_17, window_bounds = array<i64: 1, 1, 128>}, {transform_indices = @transform_18, window_bounds = array<i64: 1, 1, 128>}, {transform_indices = @transform_19, window_bounds = array<i64: 1, 1, 128>}, {transform_indices = @transform_20, window_bounds = array<i64: 1, 128, 512>}, {transform_indices = @transform_21, window_bounds = array<i64: 1, 1, 512>}, {transform_indices = @transform_22, window_bounds = array<i64: 1, 512, 128>}, {transform_indices = @transform_23, window_bounds = array<i64: 1, 1, 128>}, {pipeline_mode = #tpu.pipeline_mode<synchronous>, transform_indices = @transform_24, window_bounds = array<i64: 128, 16>}, {pipeline_mode = #tpu.pipeline_mode<synchronous>, transform_indices = @transform_25, window_bounds = array<i64: 1, 16>}, {pipeline_mode = #tpu.pipeline_mode<synchronous>, transform_indices = @transform_26, window_bounds = array<i64: 16, 16>}]} {
    %c0_i32 = arith.constant 0 : i32
    %0 = arith.cmpi eq, %arg0, %c0_i32 : i32
    %1 = arith.extui %0 : i1 to i32
    %c0_i32_0 = arith.constant 0 : i32
    %2 = arith.cmpi ne, %1, %c0_i32_0 : i32
    scf.if %2 {
      %c0_97 = arith.constant 0 : index
      %c0_98 = arith.constant 0 : index
      %149 = vector.load %arg1[%c0_97, %c0_98] : memref<16x16xf32, #tpu.memory_space<vmem>>, vector<16x16xf32>
      %c0_99 = arith.constant 0 : index
      %c0_100 = arith.constant 0 : index
      %150 = vector.load %arg4[%c0_99, %c0_100] : memref<16x128xf32, #tpu.memory_space<vmem>>, vector<16x128xf32>
      %cst_101 = arith.constant dense<0.000000e+00> : vector<16x128xf32>
      %151 = tpu.matmul %149, %150, %cst_101 {dimension_numbers = #tpu.dot_dimension_numbers<[1], [0], [0], [1], [0, 0, 1, 1], [], []>} : vector<16x16xf32>, vector<16x128xf32>, vector<16x128xf32> -> vector<16x128xf32>
      %c0_102 = arith.constant 0 : index
      %c0_103 = arith.constant 0 : index
      %152 = vector.load %arg5[%c0_102, %c0_103] : memref<1x128xf32, #tpu.memory_space<vmem>>, vector<1x128xf32>
      %153 = vector.broadcast %152 : vector<1x128xf32> to vector<16x128xf32>
      %154 = arith.addf %151, %153 : vector<16x128xf32>
      %c0_104 = arith.constant 0 : index
      %c0_105 = arith.constant 0 : index
      %155 = vector.load %arg28[%c0_104, %c0_105] : memref<16x128xf32, #tpu.memory_space<vmem>>, vector<16x128xf32>
      tpu.vector_store %arg28[%c0_104, %c0_105], %154 {strides = array<i32>} : memref<16x128xf32, #tpu.memory_space<vmem>>, vector<16x128xf32>,
      %c0_106 = arith.constant 0 : index
      %c0_107 = arith.constant 0 : index
      %156 = vector.load %arg2[%c0_106, %c0_107] : memref<2x32xf32, #tpu.memory_space<vmem>>, vector<2x32xf32>
      %c0_108 = arith.constant 0 : index
      %c0_109 = arith.constant 0 : index
      %157 = vector.load %arg6[%c0_108, %c0_109] : memref<32x32xf32, #tpu.memory_space<vmem>>, vector<32x32xf32>
      %cst_110 = arith.constant dense<0.000000e+00> : vector<2x32xf32>
      %158 = tpu.matmul %156, %157, %cst_110 {dimension_numbers = #tpu.dot_dimension_numbers<[1], [0], [0], [1], [0, 0, 1, 1], [], []>} : vector<2x32xf32>, vector<32x32xf32>, vector<2x32xf32> -> vector<2x32xf32>
      %c0_111 = arith.constant 0 : index
      %c0_112 = arith.constant 0 : index
      %159 = vector.load %arg7[%c0_111, %c0_112] : memref<1x32xf32, #tpu.memory_space<vmem>>, vector<1x32xf32>
      %160 = vector.broadcast %159 : vector<1x32xf32> to vector<2x32xf32>
      %161 = arith.addf %158, %160 : vector<2x32xf32>
      %cst_113 = arith.constant 0.000000e+00 : f32
      %162 = vector.broadcast %cst_113 : f32 to vector<2x32xf32>
      %163 = arith.cmpf oge, %161, %162 : vector<2x32xf32>
      %cst_114 = arith.constant 2.000000e-01 : f32
      %164 = vector.broadcast %cst_114 : f32 to vector<2x32xf32>
      %165 = arith.mulf %161, %164 : vector<2x32xf32>
      %166 = arith.select %163, %161, %165 : vector<2x32xi1>, vector<2x32xf32>
      %c0_115 = arith.constant 0 : index
      %c0_116 = arith.constant 0 : index
      %167 = vector.load %arg8[%c0_115, %c0_116] : memref<32x32xf32, #tpu.memory_space<vmem>>, vector<32x32xf32>
      %cst_117 = arith.constant dense<0.000000e+00> : vector<2x32xf32>
      %168 = tpu.matmul %166, %167, %cst_117 {dimension_numbers = #tpu.dot_dimension_numbers<[1], [0], [0], [1], [0, 0, 1, 1], [], []>} : vector<2x32xf32>, vector<32x32xf32>, vector<2x32xf32> -> vector<2x32xf32>
      %c0_118 = arith.constant 0 : index
      %c0_119 = arith.constant 0 : index
      %169 = vector.load %arg9[%c0_118, %c0_119] : memref<1x32xf32, #tpu.memory_space<vmem>>, vector<1x32xf32>
      %170 = vector.broadcast %169 : vector<1x32xf32> to vector<2x32xf32>
      %171 = arith.addf %168, %170 : vector<2x32xf32>
      %172 = arith.truncf %171 : vector<2x32xf32> to vector<2x32xbf16>
      %c0_120 = arith.constant 0 : index
      %c0_121 = arith.constant 0 : index
      %c0_122 = arith.constant 0 : index
      %173 = vector.load %arg10[%c0_120, %c0_121, %c0_122] : memref<2x32x128xbf16, #tpu.memory_space<vmem>>, vector<1x32x128xbf16>
      %174 = vector.shape_cast %173 : vector<1x32x128xbf16> to vector<32x128xbf16>
      %cst_123 = arith.constant dense<0.000000e+00> : vector<2x128xf32>
      %175 = tpu.matmul %172, %174, %cst_123 {dimension_numbers = #tpu.dot_dimension_numbers<[1], [0], [0], [1], [0, 0, 1, 1], [], []>} : vector<2x32xbf16>, vector<32x128xbf16>, vector<2x128xf32> -> vector<2x128xf32>
      %c0_124 = arith.constant 0 : index
      %c0_125 = arith.constant 0 : index
      %c0_126 = arith.constant 0 : index
      %176 = vector.load %arg11[%c0_124, %c0_125, %c0_126] : memref<2x1x128xf32, #tpu.memory_space<vmem>>, vector<1x1x128xf32>
      %177 = vector.shape_cast %176 : vector<1x1x128xf32> to vector<1x128xf32>
      %178 = vector.broadcast %177 : vector<1x128xf32> to vector<2x128xf32>
      %179 = arith.addf %175, %178 : vector<2x128xf32>
      %180 = vector.shape_cast %179 : vector<2x128xf32> to vector<2x1x128xf32>
      %181 = vector.shape_cast %180 : vector<2x1x128xf32> to vector<2x1x128xf32>
      %182 = vector.broadcast %181 : vector<2x1x128xf32> to vector<2x8x128xf32>
      %183 = vector.shape_cast %182 : vector<2x8x128xf32> to vector<16x128xf32>
      %c0_127 = arith.constant 0 : index
      %c0_128 = arith.constant 0 : index
      %c0_129 = arith.constant 0 : index
      %184 = vector.load %arg29[%c0_127, %c0_128, %c0_129] : memref<2x16x128xf32, #tpu.memory_space<vmem>>, vector<1x16x128xf32>
      %185 = vector.shape_cast %184 : vector<1x16x128xf32> to vector<16x128xf32>
      %186 = vector.shape_cast %183 : vector<16x128xf32> to vector<1x16x128xf32>
      tpu.vector_store %arg29[%c0_127, %c0_128, %c0_129], %186 {strides = array<i32>} : memref<2x16x128xf32, #tpu.memory_space<vmem>>, vector<1x16x128xf32>,
      %c1_130 = arith.constant 1 : index
      %c0_131 = arith.constant 0 : index
      %c0_132 = arith.constant 0 : index
      %187 = vector.load %arg10[%c1_130, %c0_131, %c0_132] : memref<2x32x128xbf16, #tpu.memory_space<vmem>>, vector<1x32x128xbf16>
      %188 = vector.shape_cast %187 : vector<1x32x128xbf16> to vector<32x128xbf16>
      %cst_133 = arith.constant dense<0.000000e+00> : vector<2x128xf32>
      %189 = tpu.matmul %172, %188, %cst_133 {dimension_numbers = #tpu.dot_dimension_numbers<[1], [0], [0], [1], [0, 0, 1, 1], [], []>} : vector<2x32xbf16>, vector<32x128xbf16>, vector<2x128xf32> -> vector<2x128xf32>
      %c1_134 = arith.constant 1 : index
      %c0_135 = arith.constant 0 : index
      %c0_136 = arith.constant 0 : index
      %190 = vector.load %arg11[%c1_134, %c0_135, %c0_136] : memref<2x1x128xf32, #tpu.memory_space<vmem>>, vector<1x1x128xf32>
      %191 = vector.shape_cast %190 : vector<1x1x128xf32> to vector<1x128xf32>
      %192 = vector.broadcast %191 : vector<1x128xf32> to vector<2x128xf32>
      %193 = arith.addf %189, %192 : vector<2x128xf32>
      %194 = vector.shape_cast %193 : vector<2x128xf32> to vector<2x1x128xf32>
      %195 = vector.shape_cast %194 : vector<2x1x128xf32> to vector<2x1x128xf32>
      %196 = vector.broadcast %195 : vector<2x1x128xf32> to vector<2x8x128xf32>
      %197 = vector.shape_cast %196 : vector<2x8x128xf32> to vector<16x128xf32>
      %c1_137 = arith.constant 1 : index
      %c0_138 = arith.constant 0 : index
      %c0_139 = arith.constant 0 : index
      %198 = vector.load %arg29[%c1_137, %c0_138, %c0_139] : memref<2x16x128xf32, #tpu.memory_space<vmem>>, vector<1x16x128xf32>
      %199 = vector.shape_cast %198 : vector<1x16x128xf32> to vector<16x128xf32>
      %200 = vector.shape_cast %197 : vector<16x128xf32> to vector<1x16x128xf32>
      tpu.vector_store %arg29[%c1_137, %c0_138, %c0_139], %200 {strides = array<i32>} : memref<2x16x128xf32, #tpu.memory_space<vmem>>, vector<1x16x128xf32>,
    } else {
    }
    %c0 = arith.constant 0 : index
    %c0_1 = arith.constant 0 : index
    %3 = vector.load %arg28[%c0, %c0_1] : memref<16x128xf32, #tpu.memory_space<vmem>>, vector<16x128xf32>
    %4 = arith.index_cast %arg0 : i32 to index
    %c0_2 = arith.constant 0 : index
    %c0_3 = arith.constant 0 : index
    %5 = vector.load %arg29[%4, %c0_2, %c0_3] : memref<2x16x128xf32, #tpu.memory_space<vmem>>, vector<1x16x128xf32>
    %6 = vector.shape_cast %5 : vector<1x16x128xf32> to vector<16x128xf32>
    %7 = arith.addf %3, %6 : vector<16x128xf32>
    %c0_4 = arith.constant 0 : index
    %c0_5 = arith.constant 0 : index
    %c0_6 = arith.constant 0 : index
    %8 = vector.load %arg12[%c0_4, %c0_5, %c0_6] : memref<1x1x128xf32, #tpu.memory_space<vmem>>, vector<1x1x128xf32>
    %9 = vector.shape_cast %8 : vector<1x1x128xf32> to vector<1x128xf32>
    %c0_7 = arith.constant 0 : index
    %c0_8 = arith.constant 0 : index
    %c0_9 = arith.constant 0 : index
    %10 = vector.load %arg13[%c0_7, %c0_8, %c0_9] : memref<1x1x128xf32, #tpu.memory_space<vmem>>, vector<1x1x128xf32>
    %11 = vector.shape_cast %10 : vector<1x1x128xf32> to vector<1x128xf32>
    %cst = arith.constant dense<0.000000e+00> : vector<16xf32>
    %12 = vector.multi_reduction <add>, %7, %cst [1] : vector<16x128xf32> to vector<16xf32>
    %13 = vector.shape_cast %12 : vector<16xf32> to vector<16x1xf32>
    %cst_10 = arith.constant 1.280000e+02 : f32
    %14 = vector.broadcast %cst_10 : f32 to vector<16x1xf32>
    %15 = arith.divf %13, %14 : vector<16x1xf32>
    %16 = vector.broadcast %15 : vector<16x1xf32> to vector<16x128xf32>
    %17 = arith.subf %7, %16 : vector<16x128xf32>
    %18 = arith.mulf %17, %17 : vector<16x128xf32>
    %cst_11 = arith.constant dense<0.000000e+00> : vector<16xf32>
    %19 = vector.multi_reduction <add>, %18, %cst_11 [1] : vector<16x128xf32> to vector<16xf32>
    %20 = vector.shape_cast %19 : vector<16xf32> to vector<16x1xf32>
    %cst_12 = arith.constant 1.280000e+02 : f32
    %21 = vector.broadcast %cst_12 : f32 to vector<16x1xf32>
    %22 = arith.divf %20, %21 : vector<16x1xf32>
    %cst_13 = arith.constant 9.99999974E-6 : f32
    %23 = vector.broadcast %cst_13 : f32 to vector<16x1xf32>
    %24 = arith.addf %22, %23 : vector<16x1xf32>
    %25 = math.rsqrt %24 : vector<16x1xf32>
    %26 = vector.broadcast %25 : vector<16x1xf32> to vector<16x128xf32>
    %27 = arith.mulf %17, %26 : vector<16x128xf32>
    %28 = vector.broadcast %9 : vector<1x128xf32> to vector<16x128xf32>
    %29 = arith.mulf %27, %28 : vector<16x128xf32>
    %30 = vector.broadcast %11 : vector<1x128xf32> to vector<16x128xf32>
    %31 = arith.addf %29, %30 : vector<16x128xf32>
    %32 = arith.truncf %31 : vector<16x128xf32> to vector<16x128xbf16>
    %c0_14 = arith.constant 0 : index
    %c0_15 = arith.constant 0 : index
    %33 = vector.load %arg3[%c0_14, %c0_15] : memref<16x32xf32, #tpu.memory_space<vmem>>, vector<16x32xf32>
    %34 = arith.truncf %33 : vector<16x32xf32> to vector<16x32xbf16>
    %cst_16 = arith.constant 0.000000e+00 : f32
    %35 = vector.broadcast %cst_16 : f32 to vector<16x128xf32>
    %c0_17 = arith.constant 0 : index
    %c0_18 = arith.constant 0 : index
    %c0_19 = arith.constant 0 : index
    %c0_20 = arith.constant 0 : index
    %36 = vector.load %arg14[%c0_17, %c0_18, %c0_19, %c0_20] : memref<1x2x128x64xbf16, #tpu.memory_space<vmem>>, vector<1x1x128x64xbf16>
    %37 = vector.shape_cast %36 : vector<1x1x128x64xbf16> to vector<128x64xbf16>
    %cst_21 = arith.constant dense<0.000000e+00> : vector<16x64xf32>
    %38 = tpu.matmul %32, %37, %cst_21 {dimension_numbers = #tpu.dot_dimension_numbers<[1], [0], [0], [1], [0, 0, 1, 1], [], []>} : vector<16x128xbf16>, vector<128x64xbf16>, vector<16x64xf32> -> vector<16x64xf32>
    %c0_22 = arith.constant 0 : index
    %c0_23 = arith.constant 0 : index
    %c0_24 = arith.constant 0 : index
    %c0_25 = arith.constant 0 : index
    %39 = vector.load %arg15[%c0_22, %c0_23, %c0_24, %c0_25] : memref<1x2x32x64xbf16, #tpu.memory_space<vmem>>, vector<1x1x32x64xbf16>
    %40 = vector.shape_cast %39 : vector<1x1x32x64xbf16> to vector<32x64xbf16>
    %cst_26 = arith.constant dense<0.000000e+00> : vector<16x64xf32>
    %41 = tpu.matmul %34, %40, %cst_26 {dimension_numbers = #tpu.dot_dimension_numbers<[1], [0], [0], [1], [0, 0, 1, 1], [], []>} : vector<16x32xbf16>, vector<32x64xbf16>, vector<16x64xf32> -> vector<16x64xf32>
    %c0_27 = arith.constant 0 : index
    %c0_28 = arith.constant 0 : index
    %c0_29 = arith.constant 0 : index
    %c0_30 = arith.constant 0 : index
    %42 = vector.load %arg16[%c0_27, %c0_28, %c0_29, %c0_30] : memref<1x2x32x64xbf16, #tpu.memory_space<vmem>>, vector<1x1x32x64xbf16>
    %43 = vector.shape_cast %42 : vector<1x1x32x64xbf16> to vector<32x64xbf16>
    %cst_31 = arith.constant dense<0.000000e+00> : vector<16x64xf32>
    %44 = tpu.matmul %34, %43, %cst_31 {dimension_numbers = #tpu.dot_dimension_numbers<[1], [0], [0], [1], [0, 0, 1, 1], [], []>} : vector<16x32xbf16>, vector<32x64xbf16>, vector<16x64xf32> -> vector<16x64xf32>
    %45 = vector.shape_cast %38 : vector<16x64xf32> to vector<2x8x64xf32>
    %46 = vector.shape_cast %41 : vector<16x64xf32> to vector<2x8x64xf32>
    %47 = vector.shape_cast %44 : vector<16x64xf32> to vector<2x8x64xf32>
    "tpu.trace_start"() <{level = 10 : i32, message = "bnd,bmd->bnm"}> : () -> ()
    %cst_32 = arith.constant dense<0.000000e+00> : vector<2x8x8xf32>
    %48 = tpu.matmul %45, %46, %cst_32 {dimension_numbers = #tpu.dot_dimension_numbers<[2], [2], [1], [1], [0, 0, 0, 1, 1, 1], [0], [0]>} : vector<2x8x64xf32>, vector<2x8x64xf32>, vector<2x8x8xf32> -> vector<2x8x8xf32>
    "tpu.trace_stop"() : () -> ()
    %cst_33 = arith.constant dense<0xFF800000> : vector<2x8xf32>
    %49 = vector.multi_reduction <maximumf>, %48, %cst_33 [2] : vector<2x8x8xf32> to vector<2x8xf32>
    %50 = vector.shape_cast %49 : vector<2x8xf32> to vector<2x8x1xf32>
    %51 = vector.broadcast %50 : vector<2x8x1xf32> to vector<2x8x8xf32>
    %52 = arith.subf %48, %51 : vector<2x8x8xf32>
    %53 = math.exp %52 : vector<2x8x8xf32>
    %cst_34 = arith.constant dense<0.000000e+00> : vector<2x8xf32>
    %54 = vector.multi_reduction <add>, %53, %cst_34 [2] : vector<2x8x8xf32> to vector<2x8xf32>
    %55 = vector.shape_cast %54 : vector<2x8xf32> to vector<2x8x1xf32>
    %56 = vector.broadcast %55 : vector<2x8x1xf32> to vector<2x8x8xf32>
    %57 = arith.divf %53, %56 : vector<2x8x8xf32>
    "tpu.trace_start"() <{level = 10 : i32, message = "bnm,bmd->bnd"}> : () -> ()
    %cst_35 = arith.constant dense<0.000000e+00> : vector<2x8x64xf32>
    %58 = tpu.matmul %57, %47, %cst_35 {dimension_numbers = #tpu.dot_dimension_numbers<[2], [1], [1], [2], [0, 0, 0, 1, 1, 2], [0], [0]>} : vector<2x8x8xf32>, vector<2x8x64xf32>, vector<2x8x64xf32> -> vector<2x8x64xf32>
    "tpu.trace_stop"() : () -> ()
    %59 = vector.shape_cast %58 : vector<2x8x64xf32> to vector<16x64xf32>
    %60 = arith.truncf %59 : vector<16x64xf32> to vector<16x64xbf16>
    %c0_36 = arith.constant 0 : index
    %c0_37 = arith.constant 0 : index
    %c0_38 = arith.constant 0 : index
    %c0_39 = arith.constant 0 : index
    %61 = vector.load %arg17[%c0_36, %c0_37, %c0_38, %c0_39] : memref<1x2x64x128xbf16, #tpu.memory_space<vmem>>, vector<1x1x64x128xbf16>
    %62 = vector.shape_cast %61 : vector<1x1x64x128xbf16> to vector<64x128xbf16>
    %cst_40 = arith.constant dense<0.000000e+00> : vector<16x128xf32>
    %63 = tpu.matmul %60, %62, %cst_40 {dimension_numbers = #tpu.dot_dimension_numbers<[1], [0], [0], [1], [0, 0, 1, 1], [], []>} : vector<16x64xbf16>, vector<64x128xbf16>, vector<16x128xf32> -> vector<16x128xf32>
    %64 = arith.addf %35, %63 : vector<16x128xf32>
    %c0_41 = arith.constant 0 : index
    %c1 = arith.constant 1 : index
    %c0_42 = arith.constant 0 : index
    %c0_43 = arith.constant 0 : index
    %65 = vector.load %arg14[%c0_41, %c1, %c0_42, %c0_43] : memref<1x2x128x64xbf16, #tpu.memory_space<vmem>>, vector<1x1x128x64xbf16>
    %66 = vector.shape_cast %65 : vector<1x1x128x64xbf16> to vector<128x64xbf16>
    %cst_44 = arith.constant dense<0.000000e+00> : vector<16x64xf32>
    %67 = tpu.matmul %32, %66, %cst_44 {dimension_numbers = #tpu.dot_dimension_numbers<[1], [0], [0], [1], [0, 0, 1, 1], [], []>} : vector<16x128xbf16>, vector<128x64xbf16>, vector<16x64xf32> -> vector<16x64xf32>
    %c0_45 = arith.constant 0 : index
    %c1_46 = arith.constant 1 : index
    %c0_47 = arith.constant 0 : index
    %c0_48 = arith.constant 0 : index
    %68 = vector.load %arg15[%c0_45, %c1_46, %c0_47, %c0_48] : memref<1x2x32x64xbf16, #tpu.memory_space<vmem>>, vector<1x1x32x64xbf16>
    %69 = vector.shape_cast %68 : vector<1x1x32x64xbf16> to vector<32x64xbf16>
    %cst_49 = arith.constant dense<0.000000e+00> : vector<16x64xf32>
    %70 = tpu.matmul %34, %69, %cst_49 {dimension_numbers = #tpu.dot_dimension_numbers<[1], [0], [0], [1], [0, 0, 1, 1], [], []>} : vector<16x32xbf16>, vector<32x64xbf16>, vector<16x64xf32> -> vector<16x64xf32>
    %c0_50 = arith.constant 0 : index
    %c1_51 = arith.constant 1 : index
    %c0_52 = arith.constant 0 : index
    %c0_53 = arith.constant 0 : index
    %71 = vector.load %arg16[%c0_50, %c1_51, %c0_52, %c0_53] : memref<1x2x32x64xbf16, #tpu.memory_space<vmem>>, vector<1x1x32x64xbf16>
    %72 = vector.shape_cast %71 : vector<1x1x32x64xbf16> to vector<32x64xbf16>
    %cst_54 = arith.constant dense<0.000000e+00> : vector<16x64xf32>
    %73 = tpu.matmul %34, %72, %cst_54 {dimension_numbers = #tpu.dot_dimension_numbers<[1], [0], [0], [1], [0, 0, 1, 1], [], []>} : vector<16x32xbf16>, vector<32x64xbf16>, vector<16x64xf32> -> vector<16x64xf32>
    %74 = vector.shape_cast %67 : vector<16x64xf32> to vector<2x8x64xf32>
    %75 = vector.shape_cast %70 : vector<16x64xf32> to vector<2x8x64xf32>
    %76 = vector.shape_cast %73 : vector<16x64xf32> to vector<2x8x64xf32>
    "tpu.trace_start"() <{level = 10 : i32, message = "bnd,bmd->bnm"}> : () -> ()
    %cst_55 = arith.constant dense<0.000000e+00> : vector<2x8x8xf32>
    %77 = tpu.matmul %74, %75, %cst_55 {dimension_numbers = #tpu.dot_dimension_numbers<[2], [2], [1], [1], [0, 0, 0, 1, 1, 1], [0], [0]>} : vector<2x8x64xf32>, vector<2x8x64xf32>, vector<2x8x8xf32> -> vector<2x8x8xf32>
    "tpu.trace_stop"() : () -> ()
    %cst_56 = arith.constant dense<0xFF800000> : vector<2x8xf32>
    %78 = vector.multi_reduction <maximumf>, %77, %cst_56 [2] : vector<2x8x8xf32> to vector<2x8xf32>
    %79 = vector.shape_cast %78 : vector<2x8xf32> to vector<2x8x1xf32>
    %80 = vector.broadcast %79 : vector<2x8x1xf32> to vector<2x8x8xf32>
    %81 = arith.subf %77, %80 : vector<2x8x8xf32>
    %82 = math.exp %81 : vector<2x8x8xf32>
    %cst_57 = arith.constant dense<0.000000e+00> : vector<2x8xf32>
    %83 = vector.multi_reduction <add>, %82, %cst_57 [2] : vector<2x8x8xf32> to vector<2x8xf32>
    %84 = vector.shape_cast %83 : vector<2x8xf32> to vector<2x8x1xf32>
    %85 = vector.broadcast %84 : vector<2x8x1xf32> to vector<2x8x8xf32>
    %86 = arith.divf %82, %85 : vector<2x8x8xf32>
    "tpu.trace_start"() <{level = 10 : i32, message = "bnm,bmd->bnd"}> : () -> ()
    %cst_58 = arith.constant dense<0.000000e+00> : vector<2x8x64xf32>
    %87 = tpu.matmul %86, %76, %cst_58 {dimension_numbers = #tpu.dot_dimension_numbers<[2], [1], [1], [2], [0, 0, 0, 1, 1, 2], [0], [0]>} : vector<2x8x8xf32>, vector<2x8x64xf32>, vector<2x8x64xf32> -> vector<2x8x64xf32>
    "tpu.trace_stop"() : () -> ()
    %88 = vector.shape_cast %87 : vector<2x8x64xf32> to vector<16x64xf32>
    %89 = arith.truncf %88 : vector<16x64xf32> to vector<16x64xbf16>
    %c0_59 = arith.constant 0 : index
    %c1_60 = arith.constant 1 : index
    %c0_61 = arith.constant 0 : index
    %c0_62 = arith.constant 0 : index
    %90 = vector.load %arg17[%c0_59, %c1_60, %c0_61, %c0_62] : memref<1x2x64x128xbf16, #tpu.memory_space<vmem>>, vector<1x1x64x128xbf16>
    %91 = vector.shape_cast %90 : vector<1x1x64x128xbf16> to vector<64x128xbf16>
    %cst_63 = arith.constant dense<0.000000e+00> : vector<16x128xf32>
    %92 = tpu.matmul %89, %91, %cst_63 {dimension_numbers = #tpu.dot_dimension_numbers<[1], [0], [0], [1], [0, 0, 1, 1], [], []>} : vector<16x64xbf16>, vector<64x128xbf16>, vector<16x128xf32> -> vector<16x128xf32>
    %93 = arith.addf %64, %92 : vector<16x128xf32>
    %94 = arith.addf %7, %93 : vector<16x128xf32>
    %c0_64 = arith.constant 0 : index
    %c0_65 = arith.constant 0 : index
    %c0_66 = arith.constant 0 : index
    %95 = vector.load %arg18[%c0_64, %c0_65, %c0_66] : memref<1x1x128xf32, #tpu.memory_space<vmem>>, vector<1x1x128xf32>
    %96 = vector.shape_cast %95 : vector<1x1x128xf32> to vector<1x128xf32>
    %97 = vector.broadcast %96 : vector<1x128xf32> to vector<16x128xf32>
    %98 = arith.addf %94, %97 : vector<16x128xf32>
    %c0_67 = arith.constant 0 : index
    %c0_68 = arith.constant 0 : index
    %c0_69 = arith.constant 0 : index
    %99 = vector.load %arg19[%c0_67, %c0_68, %c0_69] : memref<1x1x128xf32, #tpu.memory_space<vmem>>, vector<1x1x128xf32>
    %100 = vector.shape_cast %99 : vector<1x1x128xf32> to vector<1x128xf32>
    %c0_70 = arith.constant 0 : index
    %c0_71 = arith.constant 0 : index
    %c0_72 = arith.constant 0 : index
    %101 = vector.load %arg20[%c0_70, %c0_71, %c0_72] : memref<1x1x128xf32, #tpu.memory_space<vmem>>, vector<1x1x128xf32>
    %102 = vector.shape_cast %101 : vector<1x1x128xf32> to vector<1x128xf32>
    %cst_73 = arith.constant dense<0.000000e+00> : vector<16xf32>
    %103 = vector.multi_reduction <add>, %98, %cst_73 [1] : vector<16x128xf32> to vector<16xf32>
    %104 = vector.shape_cast %103 : vector<16xf32> to vector<16x1xf32>
    %cst_74 = arith.constant 1.280000e+02 : f32
    %105 = vector.broadcast %cst_74 : f32 to vector<16x1xf32>
    %106 = arith.divf %104, %105 : vector<16x1xf32>
    %107 = vector.broadcast %106 : vector<16x1xf32> to vector<16x128xf32>
    %108 = arith.subf %98, %107 : vector<16x128xf32>
    %109 = arith.mulf %108, %108 : vector<16x128xf32>
    %cst_75 = arith.constant dense<0.000000e+00> : vector<16xf32>
    %110 = vector.multi_reduction <add>, %109, %cst_75 [1] : vector<16x128xf32> to vector<16xf32>
    %111 = vector.shape_cast %110 : vector<16xf32> to vector<16x1xf32>
    %cst_76 = arith.constant 1.280000e+02 : f32
    %112 = vector.broadcast %cst_76 : f32 to vector<16x1xf32>
    %113 = arith.divf %111, %112 : vector<16x1xf32>
    %cst_77 = arith.constant 9.99999974E-6 : f32
    %114 = vector.broadcast %cst_77 : f32 to vector<16x1xf32>
    %115 = arith.addf %113, %114 : vector<16x1xf32>
    %116 = math.rsqrt %115 : vector<16x1xf32>
    %117 = vector.broadcast %116 : vector<16x1xf32> to vector<16x128xf32>
    %118 = arith.mulf %108, %117 : vector<16x128xf32>
    %119 = vector.broadcast %100 : vector<1x128xf32> to vector<16x128xf32>
    %120 = arith.mulf %118, %119 : vector<16x128xf32>
    %121 = vector.broadcast %102 : vector<1x128xf32> to vector<16x128xf32>
    %122 = arith.addf %120, %121 : vector<16x128xf32>
    %123 = arith.truncf %122 : vector<16x128xf32> to vector<16x128xbf16>
    %c0_78 = arith.constant 0 : index
    %c0_79 = arith.constant 0 : index
    %c0_80 = arith.constant 0 : index
    %124 = vector.load %arg21[%c0_78, %c0_79, %c0_80] : memref<1x128x512xbf16, #tpu.memory_space<vmem>>, vector<1x128x512xbf16>
    %125 = vector.shape_cast %124 : vector<1x128x512xbf16> to vector<128x512xbf16>
    %cst_81 = arith.constant dense<0.000000e+00> : vector<16x512xf32>
    %126 = tpu.matmul %123, %125, %cst_81 {dimension_numbers = #tpu.dot_dimension_numbers<[1], [0], [0], [1], [0, 0, 1, 1], [], []>} : vector<16x128xbf16>, vector<128x512xbf16>, vector<16x512xf32> -> vector<16x512xf32>
    %c0_82 = arith.constant 0 : index
    %c0_83 = arith.constant 0 : index
    %c0_84 = arith.constant 0 : index
    %127 = vector.load %arg22[%c0_82, %c0_83, %c0_84] : memref<1x1x512xf32, #tpu.memory_space<vmem>>, vector<1x1x512xf32>
    %128 = vector.shape_cast %127 : vector<1x1x512xf32> to vector<1x512xf32>
    %129 = vector.broadcast %128 : vector<1x512xf32> to vector<16x512xf32>
    %130 = arith.addf %126, %129 : vector<16x512xf32>
    %cst_85 = arith.constant 0.000000e+00 : f32
    %131 = vector.broadcast %cst_85 : f32 to vector<16x512xf32>
    %132 = arith.cmpf oge, %130, %131 : vector<16x512xf32>
    %cst_86 = arith.constant 0.00999999977 : f32
    %133 = vector.broadcast %cst_86 : f32 to vector<16x512xf32>
    %134 = arith.mulf %130, %133 : vector<16x512xf32>
    %135 = arith.select %132, %130, %134 : vector<16x512xi1>, vector<16x512xf32>
    %136 = arith.truncf %135 : vector<16x512xf32> to vector<16x512xbf16>
    %c0_87 = arith.constant 0 : index
    %c0_88 = arith.constant 0 : index
    %c0_89 = arith.constant 0 : index
    %137 = vector.load %arg23[%c0_87, %c0_88, %c0_89] : memref<1x512x128xbf16, #tpu.memory_space<vmem>>, vector<1x512x128xbf16>
    %138 = vector.shape_cast %137 : vector<1x512x128xbf16> to vector<512x128xbf16>
    %cst_90 = arith.constant dense<0.000000e+00> : vector<16x128xf32>
    %139 = tpu.matmul %136, %138, %cst_90 {dimension_numbers = #tpu.dot_dimension_numbers<[1], [0], [0], [1], [0, 0, 1, 1], [], []>} : vector<16x512xbf16>, vector<512x128xbf16>, vector<16x128xf32> -> vector<16x128xf32>
    %140 = arith.addf %98, %139 : vector<16x128xf32>
    %c0_91 = arith.constant 0 : index
    %c0_92 = arith.constant 0 : index
    %c0_93 = arith.constant 0 : index
    %141 = vector.load %arg24[%c0_91, %c0_92, %c0_93] : memref<1x1x128xf32, #tpu.memory_space<vmem>>, vector<1x1x128xf32>
    %142 = vector.shape_cast %141 : vector<1x1x128xf32> to vector<1x128xf32>
    %143 = vector.broadcast %142 : vector<1x128xf32> to vector<16x128xf32>
    %144 = arith.addf %140, %143 : vector<16x128xf32>
    %c0_94 = arith.constant 0 : index
    %c0_95 = arith.constant 0 : index
    %145 = vector.load %arg28[%c0_94, %c0_95] : memref<16x128xf32, #tpu.memory_space<vmem>>, vector<16x128xf32>
    tpu.vector_store %arg28[%c0_94, %c0_95], %144 {strides = array<i32>} : memref<16x128xf32, #tpu.memory_space<vmem>>, vector<16x128xf32>,
    %c1_i32 = arith.constant 1 : i32
    %146 = arith.cmpi eq, %arg0, %c1_i32 : i32
    %147 = arith.extui %146 : i1 to i32
    %c0_i32_96 = arith.constant 0 : i32
    %148 = arith.cmpi ne, %147, %c0_i32_96 : i32
    scf.if %148 {
      %cst_97 = arith.constant 0.000000e+00 : f32
      %149 = vector.broadcast %cst_97 : f32 to vector<16x128xf32>
      %150 = arith.cmpf oge, %144, %149 : vector<16x128xf32>
      %cst_98 = arith.constant 2.000000e-01 : f32
      %151 = vector.broadcast %cst_98 : f32 to vector<16x128xf32>
      %152 = arith.mulf %144, %151 : vector<16x128xf32>
      %153 = arith.select %150, %144, %152 : vector<16x128xi1>, vector<16x128xf32>
      %c0_99 = arith.constant 0 : index
      %c0_100 = arith.constant 0 : index
      %154 = vector.load %arg25[%c0_99, %c0_100] : memref<128x16xf32, #tpu.memory_space<vmem>>, vector<128x16xf32>
      %cst_101 = arith.constant dense<0.000000e+00> : vector<16x16xf32>
      %155 = tpu.matmul %153, %154, %cst_101 {dimension_numbers = #tpu.dot_dimension_numbers<[1], [0], [0], [1], [0, 0, 1, 1], [], []>} : vector<16x128xf32>, vector<128x16xf32>, vector<16x16xf32> -> vector<16x16xf32>
      %c0_102 = arith.constant 0 : index
      %c0_103 = arith.constant 0 : index
      %156 = vector.load %arg26[%c0_102, %c0_103] : memref<1x16xf32, #tpu.memory_space<vmem>>, vector<1x16xf32>
      %157 = vector.broadcast %156 : vector<1x16xf32> to vector<16x16xf32>
      %158 = arith.addf %155, %157 : vector<16x16xf32>
      %c0_104 = arith.constant 0 : index
      %c0_105 = arith.constant 0 : index
      %159 = vector.load %arg27[%c0_104, %c0_105] : memref<16x16xf32, #tpu.memory_space<vmem>>, vector<16x16xf32>
      tpu.vector_store %arg27[%c0_104, %c0_105], %158 {strides = array<i32>} : memref<16x16xf32, #tpu.memory_space<vmem>>, vector<16x16xf32>,
    } else {
    }
    return
  }
  func.func @transform_0(%arg0: i32) -> (i32, i32) {
    %c0_i32 = arith.constant 0 : i32
    %c0_i32_0 = arith.constant 0 : i32
    %c0_i32_1 = arith.constant 0 : i32
    return %c0_i32, %c0_i32_0 : i32, i32
  }
  func.func @transform_1(%arg0: i32) -> (i32, i32) {
    %c0_i32 = arith.constant 0 : i32
    %c0_i32_0 = arith.constant 0 : i32
    %c0_i32_1 = arith.constant 0 : i32
    return %c0_i32, %c0_i32_0 : i32, i32
  }
  func.func @transform_2(%arg0: i32) -> (i32, i32) {
    %c0_i32 = arith.constant 0 : i32
    %c0_i32_0 = arith.constant 0 : i32
    %c0_i32_1 = arith.constant 0 : i32
    return %c0_i32, %c0_i32_0 : i32, i32
  }
  func.func @transform_3(%arg0: i32) -> (i32, i32) {
    %c0_i32 = arith.constant 0 : i32
    %c0_i32_0 = arith.constant 0 : i32
    %c0_i32_1 = arith.constant 0 : i32
    return %c0_i32, %c0_i32_0 : i32, i32
  }
  func.func @transform_4(%arg0: i32) -> (i32, i32) {
    %c0_i32 = arith.constant 0 : i32
    %c0_i32_0 = arith.constant 0 : i32
    %c0_i32_1 = arith.constant 0 : i32
    return %c0_i32, %c0_i32_0 : i32, i32
  }
  func.func @transform_5(%arg0: i32) -> (i32, i32) {
    %c0_i32 = arith.constant 0 : i32
    %c0_i32_0 = arith.constant 0 : i32
    %c0_i32_1 = arith.constant 0 : i32
    return %c0_i32, %c0_i32_0 : i32, i32
  }
  func.func @transform_6(%arg0: i32) -> (i32, i32) {
    %c0_i32 = arith.constant 0 : i32
    %c0_i32_0 = arith.constant 0 : i32
    %c0_i32_1 = arith.constant 0 : i32
    return %c0_i32, %c0_i32_0 : i32, i32
  }
  func.func @transform_7(%arg0: i32) -> (i32, i32) {
    %c0_i32 = arith.constant 0 : i32
    %c0_i32_0 = arith.constant 0 : i32
    %c0_i32_1 = arith.constant 0 : i32
    return %c0_i32, %c0_i32_0 : i32, i32
  }
  func.func @transform_8(%arg0: i32) -> (i32, i32) {
    %c0_i32 = arith.constant 0 : i32
    %c0_i32_0 = arith.constant 0 : i32
    %c0_i32_1 = arith.constant 0 : i32
    return %c0_i32, %c0_i32_0 : i32, i32
  }
  func.func @transform_9(%arg0: i32) -> (i32, i32, i32) {
    %c0_i32 = arith.constant 0 : i32
    %c0_i32_0 = arith.constant 0 : i32
    %c0_i32_1 = arith.constant 0 : i32
    %c0_i32_2 = arith.constant 0 : i32
    return %c0_i32, %c0_i32_0, %c0_i32_1 : i32, i32, i32
  }
  func.func @transform_10(%arg0: i32) -> (i32, i32, i32) {
    %c0_i32 = arith.constant 0 : i32
    %c0_i32_0 = arith.constant 0 : i32
    %c0_i32_1 = arith.constant 0 : i32
    %c0_i32_2 = arith.constant 0 : i32
    return %c0_i32, %c0_i32_0, %c0_i32_1 : i32, i32, i32
  }
  func.func @transform_11(%arg0: i32) -> (i32, i32, i32) {
    %c0_i32 = arith.constant 0 : i32
    %c0_i32_0 = arith.constant 0 : i32
    %c0_i32_1 = arith.constant 0 : i32
    return %arg0, %c0_i32, %c0_i32_0 : i32, i32, i32
  }
  func.func @transform_12(%arg0: i32) -> (i32, i32, i32) {
    %c0_i32 = arith.constant 0 : i32
    %c0_i32_0 = arith.constant 0 : i32
    %c0_i32_1 = arith.constant 0 : i32
    return %arg0, %c0_i32, %c0_i32_0 : i32, i32, i32
  }
  func.func @transform_13(%arg0: i32) -> (i32, i32, i32, i32) {
    %c0_i32 = arith.constant 0 : i32
    %c0_i32_0 = arith.constant 0 : i32
    %c0_i32_1 = arith.constant 0 : i32
    %c0_i32_2 = arith.constant 0 : i32
    return %arg0, %c0_i32, %c0_i32_0, %c0_i32_1 : i32, i32, i32, i32
  }
  func.func @transform_14(%arg0: i32) -> (i32, i32, i32, i32) {
    %c0_i32 = arith.constant 0 : i32
    %c0_i32_0 = arith.constant 0 : i32
    %c0_i32_1 = arith.constant 0 : i32
    %c0_i32_2 = arith.constant 0 : i32
    return %arg0, %c0_i32, %c0_i32_0, %c0_i32_1 : i32, i32, i32, i32
  }
  func.func @transform_15(%arg0: i32) -> (i32, i32, i32, i32) {
    %c0_i32 = arith.constant 0 : i32
    %c0_i32_0 = arith.constant 0 : i32
    %c0_i32_1 = arith.constant 0 : i32
    %c0_i32_2 = arith.constant 0 : i32
    return %arg0, %c0_i32, %c0_i32_0, %c0_i32_1 : i32, i32, i32, i32
  }
  func.func @transform_16(%arg0: i32) -> (i32, i32, i32, i32) {
    %c0_i32 = arith.constant 0 : i32
    %c0_i32_0 = arith.constant 0 : i32
    %c0_i32_1 = arith.constant 0 : i32
    %c0_i32_2 = arith.constant 0 : i32
    return %arg0, %c0_i32, %c0_i32_0, %c0_i32_1 : i32, i32, i32, i32
  }
  func.func @transform_17(%arg0: i32) -> (i32, i32, i32) {
    %c0_i32 = arith.constant 0 : i32
    %c0_i32_0 = arith.constant 0 : i32
    %c0_i32_1 = arith.constant 0 : i32
    return %arg0, %c0_i32, %c0_i32_0 : i32, i32, i32
  }
  func.func @transform_18(%arg0: i32) -> (i32, i32, i32) {
    %c0_i32 = arith.constant 0 : i32
    %c0_i32_0 = arith.constant 0 : i32
    %c0_i32_1 = arith.constant 0 : i32
    return %arg0, %c0_i32, %c0_i32_0 : i32, i32, i32
  }
  func.func @transform_19(%arg0: i32) -> (i32, i32, i32) {
    %c0_i32 = arith.constant 0 : i32
    %c0_i32_0 = arith.constant 0 : i32
    %c0_i32_1 = arith.constant 0 : i32
    return %arg0, %c0_i32, %c0_i32_0 : i32, i32, i32
  }
  func.func @transform_20(%arg0: i32) -> (i32, i32, i32) {
    %c0_i32 = arith.constant 0 : i32
    %c0_i32_0 = arith.constant 0 : i32
    %c0_i32_1 = arith.constant 0 : i32
    return %arg0, %c0_i32, %c0_i32_0 : i32, i32, i32
  }
  func.func @transform_21(%arg0: i32) -> (i32, i32, i32) {
    %c0_i32 = arith.constant 0 : i32
    %c0_i32_0 = arith.constant 0 : i32
    %c0_i32_1 = arith.constant 0 : i32
    return %arg0, %c0_i32, %c0_i32_0 : i32, i32, i32
  }
  func.func @transform_22(%arg0: i32) -> (i32, i32, i32) {
    %c0_i32 = arith.constant 0 : i32
    %c0_i32_0 = arith.constant 0 : i32
    %c0_i32_1 = arith.constant 0 : i32
    return %arg0, %c0_i32, %c0_i32_0 : i32, i32, i32
  }
  func.func @transform_23(%arg0: i32) -> (i32, i32, i32) {
    %c0_i32 = arith.constant 0 : i32
    %c0_i32_0 = arith.constant 0 : i32
    %c0_i32_1 = arith.constant 0 : i32
    return %arg0, %c0_i32, %c0_i32_0 : i32, i32, i32
  }
  func.func @transform_24(%arg0: i32) -> (i32, i32) {
    %c0_i32 = arith.constant 0 : i32
    %c0_i32_0 = arith.constant 0 : i32
    %c0_i32_1 = arith.constant 0 : i32
    return %c0_i32, %c0_i32_0 : i32, i32
  }
  func.func @transform_25(%arg0: i32) -> (i32, i32) {
    %c0_i32 = arith.constant 0 : i32
    %c0_i32_0 = arith.constant 0 : i32
    %c0_i32_1 = arith.constant 0 : i32
    return %c0_i32, %c0_i32_0 : i32, i32
  }
  func.func @transform_26(%arg0: i32) -> (i32, i32) {
    %c0_i32 = arith.constant 0 : i32
    %c0_i32_0 = arith.constant 0 : i32
    %c0_i32_1 = arith.constant 0 : i32
    return %c0_i32, %c0_i32_0 : i32, i32
  }
}

</mosaic_0001>

<llo_original>
// kernel: multi_attention_net.1
$region0: #{multi_attention_net.1}
  #allocation0 [shape = 'u32[]', space=smem, size = 0x4, offset = 0x4, fixed_abs, tag = 'smem constant byte address 0x4 - core index']
  #allocation1 [shape = 'u32[144,128]{1,0:T(1,128)}', space=vmem, size = 0x12000, scoped, tag = 'internal scratch']
  #allocation2 [shape = 'f32[16,128]{1,0:T(8,128)}', space=vmem, size = 0x2000, scoped, tag = 'scratch operand']
  #allocation3 [shape = 'f32[2,16,128]{2,1,0:T(8,128)}', space=vmem, size = 0x4000, scoped, tag = 'scratch operand']
  %s0 = inlined_call_operand.vmem [shape: f32[16,16], index: 0, kind: input, shape index: {}]
  %s1 = inlined_call_operand.vmem [shape: f32[2,32], index: 1, kind: input, shape index: {}]
  %s2 = inlined_call_operand.vmem [shape: f32[16,32], index: 2, kind: input, shape index: {}]
  %s3 = inlined_call_operand.hbm [shape: f32[16,128], index: 3, kind: input, shape index: {}]
  %s4 = inlined_call_operand.hbm [shape: f32[1,128], index: 4, kind: input, shape index: {}]
  %s5 = inlined_call_operand.vmem [shape: f32[32,32], index: 5, kind: input, shape index: {}]
  %s6 = inlined_call_operand.vmem [shape: f32[1,32], index: 6, kind: input, shape index: {}]
  %s7 = inlined_call_operand.hbm [shape: f32[32,32], index: 7, kind: input, shape index: {}]
  %s8 = inlined_call_operand.vmem [shape: f32[1,32], index: 8, kind: input, shape index: {}]
  %s9 = inlined_call_operand.hbm [shape: bf16[2,32,128], index: 9, kind: input, shape index: {}]
  %s10 = inlined_call_operand.hbm [shape: f32[2,1,128], index: 10, kind: input, shape index: {}]
  %s11 = inlined_call_operand.hbm [shape: f32[2,1,128], index: 11, kind: input, shape index: {}]
  %s12 = inlined_call_operand.hbm [shape: f32[2,1,128], index: 12, kind: input, shape index: {}]
  %s13 = inlined_call_operand.vmem [shape: bf16[2,2,128,64], index: 13, kind: input, shape index: {}]
  %s14 = inlined_call_operand.vmem [shape: bf16[2,2,32,64], index: 14, kind: input, shape index: {}]
  %s15 = inlined_call_operand.hbm [shape: bf16[2,2,32,64], index: 15, kind: input, shape index: {}]
  %s16 = inlined_call_operand.hbm [shape: bf16[2,2,64,128], index: 16, kind: input, shape index: {}]
  %s17 = inlined_call_operand.hbm [shape: f32[2,1,128], index: 17, kind: input, shape index: {}]
  %s18 = inlined_call_operand.hbm [shape: f32[2,1,128], index: 18, kind: input, shape index: {}]
  %s19 = inlined_call_operand.hbm [shape: f32[2,1,128], index: 19, kind: input, shape index: {}]
  %s20 = inlined_call_operand.vmem [shape: bf16[2,128,512], index: 20, kind: input, shape index: {}]
  %s21 = inlined_call_operand.hbm [shape: f32[2,1,512], index: 21, kind: input, shape index: {}]
  %s22 = inlined_call_operand.hbm [shape: bf16[2,512,128], index: 22, kind: input, shape index: {}]
  %s23 = inlined_call_operand.hbm [shape: f32[2,1,128], index: 23, kind: input, shape index: {}]
  %s24 = inlined_call_operand.vmem [shape: f32[128,16], index: 24, kind: input, shape index: {}]
  %s25 = inlined_call_operand.hbm [shape: f32[1,16], index: 25, kind: input, shape index: {}]
  %s26 = inlined_call_operand.hbm [shape: f32[16,16], index: 26, kind: output, shape index: {}]
  %s27 = sld [smem:[#allocation0]]
  $region209: #{multi_attention_net.1} parent=0
    _
  %s29 = ssub.s32 1, %s27
  %s30 = scalar_select 0, %s29, %s27
  $region1: #{multi_attention_net.1} parent=0
    #allocation4 [shape = 'u8[8192]{0}', space=vmem, size = 0x2000, scoped, tag = 'input window, operand 3, single buffered']
    #allocation5 [shape = 's32[2]{0}', space=sflag, size = 0x8, scoped, tag = 'scoped memory for multi_attention_net.1']
    #allocation6 [shape = 's32[2]{0}', space=sflag, size = 0x8, scoped, tag = 'scoped memory for multi_attention_net.1']
    #allocation7 [shape = 'u8[512]{0}', space=vmem, size = 0x400, scoped, tag = 'input window, operand 4, single buffered']
    #allocation8 [shape = 's32[1]{0}', space=sflag, size = 0x4, scoped, tag = 'scoped memory for multi_attention_net.1']
    #allocation9 [shape = 'u8[16384]{0}', space=vmem, size = 0x4000, scoped, tag = 'input window, operand 7, single buffered']
    #allocation10 [shape = 'u8[16384]{0}', space=vmem, size = 0x4000, scoped, tag = 'input window, operand 9, single buffered']
    #allocation11 [shape = 's32[1]{0}', space=sflag, size = 0x4, scoped, tag = 'scoped memory for multi_attention_net.1']
    #allocation12 [shape = 'u8[1024]{0}', space=vmem, size = 0x400, scoped, tag = 'input window, operand 10, single buffered']
    #allocation13 [shape = 'u8[1024]{0}', space=vmem, size = 0x400, scoped, tag = 'input window, operand 11']
    #allocation14 [shape = 's32[2]{0}', space=sflag, size = 0x8, scoped, tag = 'scoped memory for multi_attention_net.1']
    #allocation15 [shape = 'u8[1024]{0}', space=vmem, size = 0x400, scoped, tag = 'input window, operand 12']
    #allocation16 [shape = 'u8[32768]{0}', space=vmem, size = 0x8000, scoped, tag = 'input window, operand 15']
    #allocation17 [shape = 's32[2]{0}', space=sflag, size = 0x8, scoped, tag = 'scoped memory for multi_attention_net.1']
    #allocation18 [shape = 'u8[65536]{0}', space=vmem, size = 0x10000, scoped, tag = 'input window, operand 16']
    #allocation19 [shape = 'u8[1024]{0}', space=vmem, size = 0x400, scoped, tag = 'input window, operand 17']
    #allocation20 [shape = 's32[2]{0}', space=sflag, size = 0x8, scoped, tag = 'scoped memory for multi_attention_net.1']
    #allocation21 [shape = 'u8[1024]{0}', space=vmem, size = 0x400, scoped, tag = 'input window, operand 18']
    #allocation22 [shape = 'u8[1024]{0}', space=vmem, size = 0x400, scoped, tag = 'input window, operand 19']
    #allocation23 [shape = 's32[2]{0}', space=sflag, size = 0x8, scoped, tag = 'scoped memory for multi_attention_net.1']
    #allocation24 [shape = 'u8[4096]{0}', space=vmem, size = 0x1000, scoped, tag = 'input window, operand 21']
    #allocation25 [shape = 'u8[262144]{0}', space=vmem, size = 0x40000, scoped, tag = 'input window, operand 22']
    #allocation26 [shape = 's32[2]{0}', space=sflag, size = 0x8, scoped, tag = 'scoped memory for multi_attention_net.1']
    #allocation27 [shape = 'u8[1024]{0}', space=vmem, size = 0x400, scoped, tag = 'input window, operand 23']
    #allocation28 [shape = 'u8[512]{0}', space=vmem, size = 0x400, scoped, tag = 'input window, operand 25, single buffered']
    #allocation29 [shape = 's32[1]{0}', space=sflag, size = 0x4, scoped, tag = 'scoped memory for multi_attention_net.1']
    #allocation30 [shape = 'u8[8192]{0}', space=vmem, size = 0x2000, scoped, tag = 'output window, operand 0, single buffered']
    %31 = vsyncpa [#allocation5], 0
    %32 = vsyncpa [#allocation8], 0
    %33 = vsyncpa [#allocation11], 0
    %34 = vsyncpa [#allocation14], 0
    %s35 = scalar_lea.sflag [#allocation14], 1
    %36 = vsyncpa %s35, 0
    %37 = vsyncpa [#allocation17], 0
    %s38 = scalar_lea.sflag [#allocation17], 1
    %39 = vsyncpa %s38, 0
    %40 = vsyncpa [#allocation20], 0
    %s41 = scalar_lea.sflag [#allocation20], 1
    %42 = vsyncpa %s41, 0
    %43 = vsyncpa [#allocation23], 0
    %s44 = scalar_lea.sflag [#allocation23], 1
    %45 = vsyncpa %s44, 0
    %46 = vsyncpa [#allocation26], 0
    %s47 = scalar_lea.sflag [#allocation26], 1
    %48 = vsyncpa %s47, 0
    %49 = vsyncpa [#allocation29], 0
    %50 = vsyncpa [#allocation6], 0
    loop: start=0, step=1, limit=4
    $region2: #{multi_attention_net.1} parent=1 // loop_pre_header
      _
    $region3: #{multi_attention_net.1} parent=1 // loop_header
      %s52 = sphi 0, %s56
      %p53 = scmp.ge.s32.totalorder %s52, 4
      %s60 = sphi 0, %s60
      %s62 = sphi 0, %s60
      %s63 = sphi 0, %s62
      %s77 = sphi 0, %s63
      %s81 = sphi 0, %s81
      %s83 = sphi 0, %s81
      %s84 = sphi 0, %s83
      %s98 = sphi 0, %s84
      %s102 = sphi 0, %s102
      %s104 = sphi 0, %s102
      %s105 = sphi 0, %s104
      %s119 = sphi 0, %s105
      %s123 = sphi 0, %s123
      %s125 = sphi 0, %s123
      %s126 = sphi 0, %s125
      %s140 = sphi 0, %s126
      %s144 = sphi 0, %s144
      %s146 = sphi 0, %s144
      %s147 = sphi 0, %s146
      %s161 = sphi 0, %s147
      %s165 = sphi 0, %s165
      %s167 = sphi 0, %s165
      %s168 = sphi 0, %s167
      %s182 = sphi 0, %s168
      %s186 = sphi 0, %s186
      %s188 = sphi 0, %s186
      %s189 = sphi 0, %s188
      %s203 = sphi 0, %s189
      %s207 = sphi 0, %s207
      %s209 = sphi 0, %s207
      %s210 = sphi 0, %s209
      %s224 = sphi 0, %s210
      %s228 = sphi 0, %s228
      %s230 = sphi 0, %s228
      %s231 = sphi 0, %s230
      %s245 = sphi 0, %s231
      %s249 = sphi 0, %s249
      %s251 = sphi 0, %s249
      %s252 = sphi 0, %s251
      %s266 = sphi 0, %s252
      %s270 = sphi 0, %s270
      %s272 = sphi 0, %s270
      %s273 = sphi 0, %s272
      %s287 = sphi 0, %s273
      %s293 = sphi 0, %s295
      %s296 = sphi 0, %s293
      %s297 = sphi 0, %s296
      %s313 = sphi 0, %s297
      %s319 = sphi 0, %s321
      %s322 = sphi 0, %s319
      %s323 = sphi 0, %s322
      %s339 = sphi 0, %s323
      %s345 = sphi 0, %s347
      %s348 = sphi 0, %s345
      %s349 = sphi 0, %s348
      %s365 = sphi 0, %s349
      %s371 = sphi 0, %s373
      %s374 = sphi 0, %s371
      %s375 = sphi 0, %s374
      %s391 = sphi 0, %s375
      %s397 = sphi 0, %s399
      %s400 = sphi 0, %s397
      %s401 = sphi 0, %s400
      %s417 = sphi 0, %s401
      %s423 = sphi 0, %s425
      %s426 = sphi 0, %s423
      %s427 = sphi 0, %s426
      %s443 = sphi 0, %s427
      %s449 = sphi 0, %s451
      %s452 = sphi 0, %s449
      %s453 = sphi 0, %s452
      %s469 = sphi 0, %s453
      %s475 = sphi 0, %s477
      %s478 = sphi 0, %s475
      %s479 = sphi 0, %s478
      %s495 = sphi 0, %s479
      %s501 = sphi 0, %s503
      %s504 = sphi 0, %s501
      %s505 = sphi 0, %s504
      %s521 = sphi 0, %s505
      %s527 = sphi 0, %s529
      %s530 = sphi 0, %s527
      %s531 = sphi 0, %s530
      %s547 = sphi 0, %s531
      %s553 = sphi 0, %s555
      %s556 = sphi 0, %s553
      %s557 = sphi 0, %s556
      %s573 = sphi 0, %s557
      %s579 = sphi 0, %s581
      %s582 = sphi 0, %s579
      %s583 = sphi 0, %s582
      %s599 = sphi 0, %s583
      %s605 = sphi 0, %s607
      %s608 = sphi 0, %s605
      %s609 = sphi 0, %s608
      %s625 = sphi 0, %s609
      %s629 = sphi 0, %s629
      %s631 = sphi 0, %s629
      %s632 = sphi 0, %s631
      %s646 = sphi 0, %s632
      %s650 = sphi 0, %s650
      %s652 = sphi 0, %s650
      %s653 = sphi 0, %s652
      %s667 = sphi 0, %s653
      %s671 = sphi 0, %s671
      %s673 = sphi 0, %s671
      %s674 = sphi 0, %s673
      %s688 = sphi 0, %s674
    $region4: #{multi_attention_net.1} parent=1 // loop_header_branch
      %55 = sbr.rel (%p53) target = $region8
    $region5: #{multi_attention_net.1} parent=1 // loop_body
      %s57 = ssub.s32 %s52, 1
      %s58 = ssub.s32 %s52, 2
      %s59 = sadd.s32 %s52, 1
      %s61 = sadd.s32 %s60, 1
      %p64 = scmp.eq.s32.totalorder %s52, 1
      %p65 = scmp.ne.s32.totalorder %s60, %s62
      %p66 = scmp.eq.s32.totalorder %s52, 0
      %p67 = por %p65, %p66
      %p68 = scmp.ne.s32.totalorder %s60, %s62
      %p69 = scmp.eq.s32.totalorder %s57, 1
      %p70 = por %p68, %p69
      %p71 = scmp.ne.s32.totalorder %s62, %s63
      %p72 = scmp.eq.s32.totalorder %s57, 0
      %p73 = por %p71, %p72
      %p74 = scmp.ne.s32.totalorder %s62, %s63
      %p75 = scmp.eq.s32.totalorder %s58, 1
      %p76 = por %p74, %p75
      %p78 = scmp.ne.s32.totalorder %s63, %s77
      %p79 = scmp.eq.s32.totalorder %s58, 0
      %p80 = por %p78, %p79
      %s82 = sadd.s32 %s81, 1
      %p85 = scmp.eq.s32.totalorder %s52, 1
      %p86 = scmp.ne.s32.totalorder %s81, %s83
      %p87 = scmp.eq.s32.totalorder %s52, 0
      %p88 = por %p86, %p87
      %p89 = scmp.ne.s32.totalorder %s81, %s83
      %p90 = scmp.eq.s32.totalorder %s57, 1
      %p91 = por %p89, %p90
      %p92 = scmp.ne.s32.totalorder %s83, %s84
      %p93 = scmp.eq.s32.totalorder %s57, 0
      %p94 = por %p92, %p93
      %p95 = scmp.ne.s32.totalorder %s83, %s84
      %p96 = scmp.eq.s32.totalorder %s58, 1
      %p97 = por %p95, %p96
      %p99 = scmp.ne.s32.totalorder %s84, %s98
      %p100 = scmp.eq.s32.totalorder %s58, 0
      %p101 = por %p99, %p100
      %s103 = sadd.s32 %s102, 1
      %p106 = scmp.eq.s32.totalorder %s52, 1
      %p107 = scmp.ne.s32.totalorder %s102, %s104
      %p108 = scmp.eq.s32.totalorder %s52, 0
      %p109 = por %p107, %p108
      %p110 = scmp.ne.s32.totalorder %s102, %s104
      %p111 = scmp.eq.s32.totalorder %s57, 1
      %p112 = por %p110, %p111
      %p113 = scmp.ne.s32.totalorder %s104, %s105
      %p114 = scmp.eq.s32.totalorder %s57, 0
      %p115 = por %p113, %p114
      %p116 = scmp.ne.s32.totalorder %s104, %s105
      %p117 = scmp.eq.s32.totalorder %s58, 1
      %p118 = por %p116, %p117
      %p120 = scmp.ne.s32.totalorder %s105, %s119
      %p121 = scmp.eq.s32.totalorder %s58, 0
      %p122 = por %p120, %p121
      %s124 = sadd.s32 %s123, 1
      %p127 = scmp.eq.s32.totalorder %s52, 1
      %p128 = scmp.ne.s32.totalorder %s123, %s125
      %p129 = scmp.eq.s32.totalorder %s52, 0
      %p130 = por %p128, %p129
      %p131 = scmp.ne.s32.totalorder %s123, %s125
      %p132 = scmp.eq.s32.totalorder %s57, 1
      %p133 = por %p131, %p132
      %p134 = scmp.ne.s32.totalorder %s125, %s126
      %p135 = scmp.eq.s32.totalorder %s57, 0
      %p136 = por %p134, %p135
      %p137 = scmp.ne.s32.totalorder %s125, %s126
      %p138 = scmp.eq.s32.totalorder %s58, 1
      %p139 = por %p137, %p138
      %p141 = scmp.ne.s32.totalorder %s126, %s140
      %p142 = scmp.eq.s32.totalorder %s58, 0
      %p143 = por %p141, %p142
      %s145 = sadd.s32 %s144, 1
      %p148 = scmp.eq.s32.totalorder %s52, 1
      %p149 = scmp.ne.s32.totalorder %s144, %s146
      %p150 = scmp.eq.s32.totalorder %s52, 0
      %p151 = por %p149, %p150
      %p152 = scmp.ne.s32.totalorder %s144, %s146
      %p153 = scmp.eq.s32.totalorder %s57, 1
      %p154 = por %p152, %p153
      %p155 = scmp.ne.s32.totalorder %s146, %s147
      %p156 = scmp.eq.s32.totalorder %s57, 0
      %p157 = por %p155, %p156
      %p158 = scmp.ne.s32.totalorder %s146, %s147
      %p159 = scmp.eq.s32.totalorder %s58, 1
      %p160 = por %p158, %p159
      %p162 = scmp.ne.s32.totalorder %s147, %s161
      %p163 = scmp.eq.s32.totalorder %s58, 0
      %p164 = por %p162, %p163
      %s166 = sadd.s32 %s165, 1
      %p169 = scmp.eq.s32.totalorder %s52, 1
      %p170 = scmp.ne.s32.totalorder %s165, %s167
      %p171 = scmp.eq.s32.totalorder %s52, 0
      %p172 = por %p170, %p171
      %p173 = scmp.ne.s32.totalorder %s165, %s167
      %p174 = scmp.eq.s32.totalorder %s57, 1
      %p175 = por %p173, %p174
      %p176 = scmp.ne.s32.totalorder %s167, %s168
      %p177 = scmp.eq.s32.totalorder %s57, 0
      %p178 = por %p176, %p177
      %p179 = scmp.ne.s32.totalorder %s167, %s168
      %p180 = scmp.eq.s32.totalorder %s58, 1
      %p181 = por %p179, %p180
      %p183 = scmp.ne.s32.totalorder %s168, %s182
      %p184 = scmp.eq.s32.totalorder %s58, 0
      %p185 = por %p183, %p184
      %s187 = sadd.s32 %s186, 1
      %p190 = scmp.eq.s32.totalorder %s52, 1
      %p191 = scmp.ne.s32.totalorder %s186, %s188
      %p192 = scmp.eq.s32.totalorder %s52, 0
      %p193 = por %p191, %p192
      %p194 = scmp.ne.s32.totalorder %s186, %s188
      %p195 = scmp.eq.s32.totalorder %s57, 1
      %p196 = por %p194, %p195
      %p197 = scmp.ne.s32.totalorder %s188, %s189
      %p198 = scmp.eq.s32.totalorder %s57, 0
      %p199 = por %p197, %p198
      %p200 = scmp.ne.s32.totalorder %s188, %s189
      %p201 = scmp.eq.s32.totalorder %s58, 1
      %p202 = por %p200, %p201
      %p204 = scmp.ne.s32.totalorder %s189, %s203
      %p205 = scmp.eq.s32.totalorder %s58, 0
      %p206 = por %p204, %p205
      %s208 = sadd.s32 %s207, 1
      %p211 = scmp.eq.s32.totalorder %s52, 1
      %p212 = scmp.ne.s32.totalorder %s207, %s209
      %p213 = scmp.eq.s32.totalorder %s52, 0
      %p214 = por %p212, %p213
      %p215 = scmp.ne.s32.totalorder %s207, %s209
      %p216 = scmp.eq.s32.totalorder %s57, 1
      %p217 = por %p215, %p216
      %p218 = scmp.ne.s32.totalorder %s209, %s210
      %p219 = scmp.eq.s32.totalorder %s57, 0
      %p220 = por %p218, %p219
      %p221 = scmp.ne.s32.totalorder %s209, %s210
      %p222 = scmp.eq.s32.totalorder %s58, 1
      %p223 = por %p221, %p222
      %p225 = scmp.ne.s32.totalorder %s210, %s224
      %p226 = scmp.eq.s32.totalorder %s58, 0
      %p227 = por %p225, %p226
      %s229 = sadd.s32 %s228, 1
      %p232 = scmp.eq.s32.totalorder %s52, 1
      %p233 = scmp.ne.s32.totalorder %s228, %s230
      %p234 = scmp.eq.s32.totalorder %s52, 0
      %p235 = por %p233, %p234
      %p236 = scmp.ne.s32.totalorder %s228, %s230
      %p237 = scmp.eq.s32.totalorder %s57, 1
      %p238 = por %p236, %p237
      %p239 = scmp.ne.s32.totalorder %s230, %s231
      %p240 = scmp.eq.s32.totalorder %s57, 0
      %p241 = por %p239, %p240
      %p242 = scmp.ne.s32.totalorder %s230, %s231
      %p243 = scmp.eq.s32.totalorder %s58, 1
      %p244 = por %p242, %p243
      %p246 = scmp.ne.s32.totalorder %s231, %s245
      %p247 = scmp.eq.s32.totalorder %s58, 0
      %p248 = por %p246, %p247
      %s250 = sadd.s32 %s249, 1
      %p253 = scmp.eq.s32.totalorder %s52, 1
      %p254 = scmp.ne.s32.totalorder %s249, %s251
      %p255 = scmp.eq.s32.totalorder %s52, 0
      %p256 = por %p254, %p255
      %p257 = scmp.ne.s32.totalorder %s249, %s251
      %p258 = scmp.eq.s32.totalorder %s57, 1
      %p259 = por %p257, %p258
      %p260 = scmp.ne.s32.totalorder %s251, %s252
      %p261 = scmp.eq.s32.totalorder %s57, 0
      %p262 = por %p260, %p261
      %p263 = scmp.ne.s32.totalorder %s251, %s252
      %p264 = scmp.eq.s32.totalorder %s58, 1
      %p265 = por %p263, %p264
      %p267 = scmp.ne.s32.totalorder %s252, %s266
      %p268 = scmp.eq.s32.totalorder %s58, 0
      %p269 = por %p267, %p268
      %s271 = sadd.s32 %s270, 1
      %p274 = scmp.eq.s32.totalorder %s52, 1
      %p275 = scmp.ne.s32.totalorder %s270, %s272
      %p276 = scmp.eq.s32.totalorder %s52, 0
      %p277 = por %p275, %p276
      %p278 = scmp.ne.s32.totalorder %s270, %s272
      %p279 = scmp.eq.s32.totalorder %s57, 1
      %p280 = por %p278, %p279
      %p281 = scmp.ne.s32.totalorder %s272, %s273
      %p282 = scmp.eq.s32.totalorder %s57, 0
      %p283 = por %p281, %p282
      %p284 = scmp.ne.s32.totalorder %s272, %s273
      %p285 = scmp.eq.s32.totalorder %s58, 1
      %p286 = por %p284, %p285
      %p288 = scmp.ne.s32.totalorder %s273, %s287
      %p289 = scmp.eq.s32.totalorder %s58, 0
      %p290 = por %p288, %p289
      %s291 = ssub.s32 %s52, %s59
      %p292 = scmp.eq.s32.totalorder %s291, 0
      %s294 = sadd.s32 %s293, 1
      %s295 = scalar_select %p292, %s293, %s294
      %p298 = pneg %p292
      %p299 = scmp.eq.s32.totalorder %s52, 1
      %p300 = por %p298, %p299
      %p301 = scmp.ne.s32.totalorder %s293, %s296
      %p302 = scmp.eq.s32.totalorder %s52, 0
      %p303 = por %p301, %p302
      %p304 = scmp.ne.s32.totalorder %s293, %s296
      %p305 = scmp.eq.s32.totalorder %s57, 1
      %p306 = por %p304, %p305
      %p307 = scmp.ne.s32.totalorder %s296, %s297
      %p308 = scmp.eq.s32.totalorder %s57, 0
      %p309 = por %p307, %p308
      %p310 = scmp.ne.s32.totalorder %s296, %s297
      %p311 = scmp.eq.s32.totalorder %s58, 1
      %p312 = por %p310, %p311
      %p314 = scmp.ne.s32.totalorder %s297, %s313
      %p315 = scmp.eq.s32.totalorder %s58, 0
      %p316 = por %p314, %p315
      %s317 = ssub.s32 %s52, %s59
      %p318 = scmp.eq.s32.totalorder %s317, 0
      %s320 = sadd.s32 %s319, 1
      %s321 = scalar_select %p318, %s319, %s320
      %p324 = pneg %p318
      %p325 = scmp.eq.s32.totalorder %s52, 1
      %p326 = por %p324, %p325
      %p327 = scmp.ne.s32.totalorder %s319, %s322
      %p328 = scmp.eq.s32.totalorder %s52, 0
      %p329 = por %p327, %p328
      %p330 = scmp.ne.s32.totalorder %s319, %s322
      %p331 = scmp.eq.s32.totalorder %s57, 1
      %p332 = por %p330, %p331
      %p333 = scmp.ne.s32.totalorder %s322, %s323
      %p334 = scmp.eq.s32.totalorder %s57, 0
      %p335 = por %p333, %p334
      %p336 = scmp.ne.s32.totalorder %s322, %s323
      %p337 = scmp.eq.s32.totalorder %s58, 1
      %p338 = por %p336, %p337
      %p340 = scmp.ne.s32.totalorder %s323, %s339
      %p341 = scmp.eq.s32.totalorder %s58, 0
      %p342 = por %p340, %p341
      %s343 = ssub.s32 %s52, %s59
      %p344 = scmp.eq.s32.totalorder %s343, 0
      %s346 = sadd.s32 %s345, 1
      %s347 = scalar_select %p344, %s345, %s346
      %p350 = pneg %p344
      %p351 = scmp.eq.s32.totalorder %s52, 1
      %p352 = por %p350, %p351
      %p353 = scmp.ne.s32.totalorder %s345, %s348
      %p354 = scmp.eq.s32.totalorder %s52, 0
      %p355 = por %p353, %p354
      %p356 = scmp.ne.s32.totalorder %s345, %s348
      %p357 = scmp.eq.s32.totalorder %s57, 1
      %p358 = por %p356, %p357
      %p359 = scmp.ne.s32.totalorder %s348, %s349
      %p360 = scmp.eq.s32.totalorder %s57, 0
      %p361 = por %p359, %p360
      %p362 = scmp.ne.s32.totalorder %s348, %s349
      %p363 = scmp.eq.s32.totalorder %s58, 1
      %p364 = por %p362, %p363
      %p366 = scmp.ne.s32.totalorder %s349, %s365
      %p367 = scmp.eq.s32.totalorder %s58, 0
      %p368 = por %p366, %p367
      %s369 = ssub.s32 %s52, %s59
      %p370 = scmp.eq.s32.totalorder %s369, 0
      %s372 = sadd.s32 %s371, 1
      %s373 = scalar_select %p370, %s371, %s372
      %p376 = pneg %p370
      %p377 = scmp.eq.s32.totalorder %s52, 1
      %p378 = por %p376, %p377
      %p379 = scmp.ne.s32.totalorder %s371, %s374
      %p380 = scmp.eq.s32.totalorder %s52, 0
      %p381 = por %p379, %p380
      %p382 = scmp.ne.s32.totalorder %s371, %s374
      %p383 = scmp.eq.s32.totalorder %s57, 1
      %p384 = por %p382, %p383
      %p385 = scmp.ne.s32.totalorder %s374, %s375
      %p386 = scmp.eq.s32.totalorder %s57, 0
      %p387 = por %p385, %p386
      %p388 = scmp.ne.s32.totalorder %s374, %s375
      %p389 = scmp.eq.s32.totalorder %s58, 1
      %p390 = por %p388, %p389
      %p392 = scmp.ne.s32.totalorder %s375, %s391
      %p393 = scmp.eq.s32.totalorder %s58, 0
      %p394 = por %p392, %p393
      %s395 = ssub.s32 %s52, %s59
      %p396 = scmp.eq.s32.totalorder %s395, 0
      %s398 = sadd.s32 %s397, 1
      %s399 = scalar_select %p396, %s397, %s398
      %p402 = pneg %p396
      %p403 = scmp.eq.s32.totalorder %s52, 1
      %p404 = por %p402, %p403
      %p405 = scmp.ne.s32.totalorder %s397, %s400
      %p406 = scmp.eq.s32.totalorder %s52, 0
      %p407 = por %p405, %p406
      %p408 = scmp.ne.s32.totalorder %s397, %s400
      %p409 = scmp.eq.s32.totalorder %s57, 1
      %p410 = por %p408, %p409
      %p411 = scmp.ne.s32.totalorder %s400, %s401
      %p412 = scmp.eq.s32.totalorder %s57, 0
      %p413 = por %p411, %p412
      %p414 = scmp.ne.s32.totalorder %s400, %s401
      %p415 = scmp.eq.s32.totalorder %s58, 1
      %p416 = por %p414, %p415
      %p418 = scmp.ne.s32.totalorder %s401, %s417
      %p419 = scmp.eq.s32.totalorder %s58, 0
      %p420 = por %p418, %p419
      %s421 = ssub.s32 %s52, %s59
      %p422 = scmp.eq.s32.totalorder %s421, 0
      %s424 = sadd.s32 %s423, 1
      %s425 = scalar_select %p422, %s423, %s424
      %p428 = pneg %p422
      %p429 = scmp.eq.s32.totalorder %s52, 1
      %p430 = por %p428, %p429
      %p431 = scmp.ne.s32.totalorder %s423, %s426
      %p432 = scmp.eq.s32.totalorder %s52, 0
      %p433 = por %p431, %p432
      %p434 = scmp.ne.s32.totalorder %s423, %s426
      %p435 = scmp.eq.s32.totalorder %s57, 1
      %p436 = por %p434, %p435
      %p437 = scmp.ne.s32.totalorder %s426, %s427
      %p438 = scmp.eq.s32.totalorder %s57, 0
      %p439 = por %p437, %p438
      %p440 = scmp.ne.s32.totalorder %s426, %s427
      %p441 = scmp.eq.s32.totalorder %s58, 1
      %p442 = por %p440, %p441
      %p444 = scmp.ne.s32.totalorder %s427, %s443
      %p445 = scmp.eq.s32.totalorder %s58, 0
      %p446 = por %p444, %p445
      %s447 = ssub.s32 %s52, %s59
      %p448 = scmp.eq.s32.totalorder %s447, 0
      %s450 = sadd.s32 %s449, 1
      %s451 = scalar_select %p448, %s449, %s450
      %p454 = pneg %p448
      %p455 = scmp.eq.s32.totalorder %s52, 1
      %p456 = por %p454, %p455
      %p457 = scmp.ne.s32.totalorder %s449, %s452
      %p458 = scmp.eq.s32.totalorder %s52, 0
      %p459 = por %p457, %p458
      %p460 = scmp.ne.s32.totalorder %s449, %s452
      %p461 = scmp.eq.s32.totalorder %s57, 1
      %p462 = por %p460, %p461
      %p463 = scmp.ne.s32.totalorder %s452, %s453
      %p464 = scmp.eq.s32.totalorder %s57, 0
      %p465 = por %p463, %p464
      %p466 = scmp.ne.s32.totalorder %s452, %s453
      %p467 = scmp.eq.s32.totalorder %s58, 1
      %p468 = por %p466, %p467
      %p470 = scmp.ne.s32.totalorder %s453, %s469
      %p471 = scmp.eq.s32.totalorder %s58, 0
      %p472 = por %p470, %p471
      %s473 = ssub.s32 %s52, %s59
      %p474 = scmp.eq.s32.totalorder %s473, 0
      %s476 = sadd.s32 %s475, 1
      %s477 = scalar_select %p474, %s475, %s476
      %p480 = pneg %p474
      %p481 = scmp.eq.s32.totalorder %s52, 1
      %p482 = por %p480, %p481
      %p483 = scmp.ne.s32.totalorder %s475, %s478
      %p484 = scmp.eq.s32.totalorder %s52, 0
      %p485 = por %p483, %p484
      %p486 = scmp.ne.s32.totalorder %s475, %s478
      %p487 = scmp.eq.s32.totalorder %s57, 1
      %p488 = por %p486, %p487
      %p489 = scmp.ne.s32.totalorder %s478, %s479
      %p490 = scmp.eq.s32.totalorder %s57, 0
      %p491 = por %p489, %p490
      %p492 = scmp.ne.s32.totalorder %s478, %s479
      %p493 = scmp.eq.s32.totalorder %s58, 1
      %p494 = por %p492, %p493
      %p496 = scmp.ne.s32.totalorder %s479, %s495
      %p497 = scmp.eq.s32.totalorder %s58, 0
      %p498 = por %p496, %p497
      %s499 = ssub.s32 %s52, %s59
      %p500 = scmp.eq.s32.totalorder %s499, 0
      %s502 = sadd.s32 %s501, 1
      %s503 = scalar_select %p500, %s501, %s502
      %p506 = pneg %p500
      %p507 = scmp.eq.s32.totalorder %s52, 1
      %p508 = por %p506, %p507
      %p509 = scmp.ne.s32.totalorder %s501, %s504
      %p510 = scmp.eq.s32.totalorder %s52, 0
      %p511 = por %p509, %p510
      %p512 = scmp.ne.s32.totalorder %s501, %s504
      %p513 = scmp.eq.s32.totalorder %s57, 1
      %p514 = por %p512, %p513
      %p515 = scmp.ne.s32.totalorder %s504, %s505
      %p516 = scmp.eq.s32.totalorder %s57, 0
      %p517 = por %p515, %p516
      %p518 = scmp.ne.s32.totalorder %s504, %s505
      %p519 = scmp.eq.s32.totalorder %s58, 1
      %p520 = por %p518, %p519
      %p522 = scmp.ne.s32.totalorder %s505, %s521
      %p523 = scmp.eq.s32.totalorder %s58, 0
      %p524 = por %p522, %p523
      %s525 = ssub.s32 %s52, %s59
      %p526 = scmp.eq.s32.totalorder %s525, 0
      %s528 = sadd.s32 %s527, 1
      %s529 = scalar_select %p526, %s527, %s528
      %p532 = pneg %p526
      %p533 = scmp.eq.s32.totalorder %s52, 1
      %p534 = por %p532, %p533
      %p535 = scmp.ne.s32.totalorder %s527, %s530
      %p536 = scmp.eq.s32.totalorder %s52, 0
      %p537 = por %p535, %p536
      %p538 = scmp.ne.s32.totalorder %s527, %s530
      %p539 = scmp.eq.s32.totalorder %s57, 1
      %p540 = por %p538, %p539
      %p541 = scmp.ne.s32.totalorder %s530, %s531
      %p542 = scmp.eq.s32.totalorder %s57, 0
      %p543 = por %p541, %p542
      %p544 = scmp.ne.s32.totalorder %s530, %s531
      %p545 = scmp.eq.s32.totalorder %s58, 1
      %p546 = por %p544, %p545
      %p548 = scmp.ne.s32.totalorder %s531, %s547
      %p549 = scmp.eq.s32.totalorder %s58, 0
      %p550 = por %p548, %p549
      %s551 = ssub.s32 %s52, %s59
      %p552 = scmp.eq.s32.totalorder %s551, 0
      %s554 = sadd.s32 %s553, 1
      %s555 = scalar_select %p552, %s553, %s554
      %p558 = pneg %p552
      %p559 = scmp.eq.s32.totalorder %s52, 1
      %p560 = por %p558, %p559
      %p561 = scmp.ne.s32.totalorder %s553, %s556
      %p562 = scmp.eq.s32.totalorder %s52, 0
      %p563 = por %p561, %p562
      %p564 = scmp.ne.s32.totalorder %s553, %s556
      %p565 = scmp.eq.s32.totalorder %s57, 1
      %p566 = por %p564, %p565
      %p567 = scmp.ne.s32.totalorder %s556, %s557
      %p568 = scmp.eq.s32.totalorder %s57, 0
      %p569 = por %p567, %p568
      %p570 = scmp.ne.s32.totalorder %s556, %s557
      %p571 = scmp.eq.s32.totalorder %s58, 1
      %p572 = por %p570, %p571
      %p574 = scmp.ne.s32.totalorder %s557, %s573
      %p575 = scmp.eq.s32.totalorder %s58, 0
      %p576 = por %p574, %p575
      %s577 = ssub.s32 %s52, %s59
      %p578 = scmp.eq.s32.totalorder %s577, 0
      %s580 = sadd.s32 %s579, 1
      %s581 = scalar_select %p578, %s579, %s580
      %p584 = pneg %p578
      %p585 = scmp.eq.s32.totalorder %s52, 1
      %p586 = por %p584, %p585
      %p587 = scmp.ne.s32.totalorder %s579, %s582
      %p588 = scmp.eq.s32.totalorder %s52, 0
      %p589 = por %p587, %p588
      %p590 = scmp.ne.s32.totalorder %s579, %s582
      %p591 = scmp.eq.s32.totalorder %s57, 1
      %p592 = por %p590, %p591
      %p593 = scmp.ne.s32.totalorder %s582, %s583
      %p594 = scmp.eq.s32.totalorder %s57, 0
      %p595 = por %p593, %p594
      %p596 = scmp.ne.s32.totalorder %s582, %s583
      %p597 = scmp.eq.s32.totalorder %s58, 1
      %p598 = por %p596, %p597
      %p600 = scmp.ne.s32.totalorder %s583, %s599
      %p601 = scmp.eq.s32.totalorder %s58, 0
      %p602 = por %p600, %p601
      %s603 = ssub.s32 %s52, %s59
      %p604 = scmp.eq.s32.totalorder %s603, 0
      %s606 = sadd.s32 %s605, 1
      %s607 = scalar_select %p604, %s605, %s606
      %p610 = pneg %p604
      %p611 = scmp.eq.s32.totalorder %s52, 1
      %p612 = por %p610, %p611
      %p613 = scmp.ne.s32.totalorder %s605, %s608
      %p614 = scmp.eq.s32.totalorder %s52, 0
      %p615 = por %p613, %p614
      %p616 = scmp.ne.s32.totalorder %s605, %s608
      %p617 = scmp.eq.s32.totalorder %s57, 1
      %p618 = por %p616, %p617
      %p619 = scmp.ne.s32.totalorder %s608, %s609
      %p620 = scmp.eq.s32.totalorder %s57, 0
      %p621 = por %p619, %p620
      %p622 = scmp.ne.s32.totalorder %s608, %s609
      %p623 = scmp.eq.s32.totalorder %s58, 1
      %p624 = por %p622, %p623
      %p626 = scmp.ne.s32.totalorder %s609, %s625
      %p627 = scmp.eq.s32.totalorder %s58, 0
      %p628 = por %p626, %p627
      %s630 = sadd.s32 %s629, 1
      %p633 = scmp.eq.s32.totalorder %s52, 1
      %p634 = scmp.ne.s32.totalorder %s629, %s631
      %p635 = scmp.eq.s32.totalorder %s52, 0
      %p636 = por %p634, %p635
      %p637 = scmp.ne.s32.totalorder %s629, %s631
      %p638 = scmp.eq.s32.totalorder %s57, 1
      %p639 = por %p637, %p638
      %p640 = scmp.ne.s32.totalorder %s631, %s632
      %p641 = scmp.eq.s32.totalorder %s57, 0
      %p642 = por %p640, %p641
      %p643 = scmp.ne.s32.totalorder %s631, %s632
      %p644 = scmp.eq.s32.totalorder %s58, 1
      %p645 = por %p643, %p644
      %p647 = scmp.ne.s32.totalorder %s632, %s646
      %p648 = scmp.eq.s32.totalorder %s58, 0
      %p649 = por %p647, %p648
      %s651 = sadd.s32 %s650, 1
      %p654 = scmp.eq.s32.totalorder %s52, 1
      %p655 = scmp.ne.s32.totalorder %s650, %s652
      %p656 = scmp.eq.s32.totalorder %s52, 0
      %p657 = por %p655, %p656
      %p658 = scmp.ne.s32.totalorder %s650, %s652
      %p659 = scmp.eq.s32.totalorder %s57, 1
      %p660 = por %p658, %p659
      %p661 = scmp.ne.s32.totalorder %s652, %s653
      %p662 = scmp.eq.s32.totalorder %s57, 0
      %p663 = por %p661, %p662
      %p664 = scmp.ne.s32.totalorder %s652, %s653
      %p665 = scmp.eq.s32.totalorder %s58, 1
      %p666 = por %p664, %p665
      %p668 = scmp.ne.s32.totalorder %s653, %s667
      %p669 = scmp.eq.s32.totalorder %s58, 0
      %p670 = por %p668, %p669
      %s672 = sadd.s32 %s671, 1
      %p675 = scmp.eq.s32.totalorder %s52, 1
      %p676 = scmp.ne.s32.totalorder %s671, %s673
      %p677 = scmp.eq.s32.totalorder %s52, 0
      %p678 = por %p676, %p677
      %p679 = scmp.ne.s32.totalorder %s671, %s673
      %p680 = scmp.eq.s32.totalorder %s57, 1
      %p681 = por %p679, %p680
      %p682 = scmp.ne.s32.totalorder %s673, %s674
      %p683 = scmp.eq.s32.totalorder %s57, 0
      %p684 = por %p682, %p683
      %p685 = scmp.ne.s32.totalorder %s673, %s674
      %p686 = scmp.eq.s32.totalorder %s58, 1
      %p687 = por %p685, %p686
      %p689 = scmp.ne.s32.totalorder %s674, %s688
      %p690 = scmp.eq.s32.totalorder %s58, 0
      %p691 = por %p689, %p690
      %p692 = scmp.le.s32.totalorder 1, %s52
      %p693 = scmp.lt.s32.totalorder %s52, 3
      %p694 = pnand %p692, %p693
      %p695 = pneg %p694
      // Predicated region
      $region9: #{multi_attention_net.1} parent=5 // pred_check
        _
      $region10: #{multi_attention_net.1} parent=5 // pred_check_branch
        %697 = sbr.rel (%p694) target = $region12
      $region11: #{multi_attention_net.1} parent=5 // pred_region
        %s698 = ssub.s32 %s52, 1
        // Predicated region
        $region13: #{multi_attention_net.1} parent=11 // pred_check
          %p699 = pneg %p73
        $region14: #{multi_attention_net.1} parent=11 // pred_check_branch
          %701 = sbr.rel (%p699) target = $region16
        $region15: #{multi_attention_net.1} parent=11 // pred_region
          _
        $region16: #{multi_attention_net.1} parent=11 // pred_fallthru
          _
        // Predicated region
        $region17: #{multi_attention_net.1} parent=11 // pred_check
          %p702 = pneg %p94
        $region18: #{multi_attention_net.1} parent=11 // pred_check_branch
          %704 = sbr.rel (%p702) target = $region20
        $region19: #{multi_attention_net.1} parent=11 // pred_region
          _
        $region20: #{multi_attention_net.1} parent=11 // pred_fallthru
          _
        // Predicated region
        $region21: #{multi_attention_net.1} parent=11 // pred_check
          %p705 = pneg %p115
        $region22: #{multi_attention_net.1} parent=11 // pred_check_branch
          %707 = sbr.rel (%p705) target = $region24
        $region23: #{multi_attention_net.1} parent=11 // pred_region
          _
        $region24: #{multi_attention_net.1} parent=11 // pred_fallthru
          _
        // Predicated region
        $region25: #{multi_attention_net.1} parent=11 // pred_check
          %p708 = pneg %p136
        $region26: #{multi_attention_net.1} parent=11 // pred_check_branch
          %710 = sbr.rel (%p708) target = $region28
        $region27: #{multi_attention_net.1} parent=11 // pred_region
          %s712 = ssub.s32 256, 256
          %713 = vsyncadd [#allocation5], %s712
          %s714 = sshll.u32 [#allocation4], 4
          %s715 = int_to_ptr.vmem [resolvable:$true] %s714
          %720 = dma.hbm_to_vmem [thread:$0]  %s3, 256, %s715, [#allocation5], 128, 128, 8
        $region28: #{multi_attention_net.1} parent=11 // pred_fallthru
          _
        // Predicated region
        $region29: #{multi_attention_net.1} parent=11 // pred_check
          %p721 = pneg %p157
        $region30: #{multi_attention_net.1} parent=11 // pred_check_branch
          %723 = sbr.rel (%p721) target = $region32
        $region31: #{multi_attention_net.1} parent=11 // pred_region
          %s725 = ssub.s32 16, 16
          %726 = vsyncadd [#allocation8], %s725
          %s728 = sshll.u32 [#allocation7], 4
          %s729 = int_to_ptr.vmem [resolvable:$true] %s728
          %731 = dma.hbm_to_vmem [thread:$0]  %s4, 16, %s729, [#allocation8]
        $region32: #{multi_attention_net.1} parent=11 // pred_fallthru
          _
        // Predicated region
        $region33: #{multi_attention_net.1} parent=11 // pred_check
          %p732 = pneg %p178
        $region34: #{multi_attention_net.1} parent=11 // pred_check_branch
          %734 = sbr.rel (%p732) target = $region36
        $region35: #{multi_attention_net.1} parent=11 // pred_region
          _
        $region36: #{multi_attention_net.1} parent=11 // pred_fallthru
          _
        // Predicated region
        $region37: #{multi_attention_net.1} parent=11 // pred_check
          %p735 = pneg %p199
        $region38: #{multi_attention_net.1} parent=11 // pred_check_branch
          %737 = sbr.rel (%p735) target = $region40
        $region39: #{multi_attention_net.1} parent=11 // pred_region
          _
        $region40: #{multi_attention_net.1} parent=11 // pred_fallthru
          _
        // Predicated region
        $region41: #{multi_attention_net.1} parent=11 // pred_check
          %p738 = pneg %p220
        $region42: #{multi_attention_net.1} parent=11 // pred_check_branch
          %740 = sbr.rel (%p738) target = $region44
        $region43: #{multi_attention_net.1} parent=11 // pred_region
          %s742 = ssub.s32 512, 512
          %743 = vsyncadd [#allocation8], %s742
          %s744 = sshll.u32 [#allocation9], 4
          %s745 = int_to_ptr.vmem [resolvable:$true] %s744
          %750 = dma.hbm_to_vmem [thread:$0]  %s7, 512, %s745, [#allocation8], 128, 128, 8
        $region44: #{multi_attention_net.1} parent=11 // pred_fallthru
          _
        // Predicated region
        $region45: #{multi_attention_net.1} parent=11 // pred_check
          %p751 = pneg %p241
        $region46: #{multi_attention_net.1} parent=11 // pred_check_branch
          %753 = sbr.rel (%p751) target = $region48
        $region47: #{multi_attention_net.1} parent=11 // pred_region
          _
        $region48: #{multi_attention_net.1} parent=11 // pred_fallthru
          _
        // Predicated region
        $region49: #{multi_attention_net.1} parent=11 // pred_check
          %p754 = pneg %p262
        $region50: #{multi_attention_net.1} parent=11 // pred_check_branch
          %756 = sbr.rel (%p754) target = $region52
        $region51: #{multi_attention_net.1} parent=11 // pred_region
          %s758 = ssub.s32 512, 512
          %759 = vsyncadd [#allocation11], %s758
          %s760 = sshll.u32 [#allocation10], 4
          %s761 = int_to_ptr.vmem [resolvable:$true] %s760
          %766 = dma.hbm_to_vmem [thread:$0]  %s9, 512, %s761, [#allocation11], 64, 64, 4
        $region52: #{multi_attention_net.1} parent=11 // pred_fallthru
          _
        // Predicated region
        $region53: #{multi_attention_net.1} parent=11 // pred_check
          %p767 = pneg %p283
        $region54: #{multi_attention_net.1} parent=11 // pred_check_branch
          %769 = sbr.rel (%p767) target = $region56
        $region55: #{multi_attention_net.1} parent=11 // pred_region
          %s771 = ssub.s32 32, 32
          %772 = vsyncadd [#allocation11], %s771
          %s773 = sshll.u32 [#allocation12], 4
          %s774 = int_to_ptr.vmem [resolvable:$true] %s773
          %779 = dma.hbm_to_vmem [thread:$0]  %s10, 32, %s774, [#allocation11], 16, 16, 1
        $region56: #{multi_attention_net.1} parent=11 // pred_fallthru
          _
        // Predicated region
        $region57: #{multi_attention_net.1} parent=11 // pred_check
          %p780 = pneg %p642
        $region58: #{multi_attention_net.1} parent=11 // pred_check_branch
          %782 = sbr.rel (%p780) target = $region60
        $region59: #{multi_attention_net.1} parent=11 // pred_region
          _
        $region60: #{multi_attention_net.1} parent=11 // pred_fallthru
          _
        // Predicated region
        $region61: #{multi_attention_net.1} parent=11 // pred_check
          %p783 = pneg %p663
        $region62: #{multi_attention_net.1} parent=11 // pred_check_branch
          %785 = sbr.rel (%p783) target = $region64
        $region63: #{multi_attention_net.1} parent=11 // pred_region
          %s787 = ssub.s32 16, 16
          %788 = vsyncadd [#allocation29], %s787
          %s790 = sshll.u32 [#allocation28], 4
          %s791 = int_to_ptr.vmem [resolvable:$true] %s790
          %793 = dma.hbm_to_vmem [thread:$0]  %s25, 16, %s791, [#allocation29]
        $region64: #{multi_attention_net.1} parent=11 // pred_fallthru
          _
      $region12: #{multi_attention_net.1} parent=5 // pred_fallthru
        _
      %p794 = scmp.lt.s32.totalorder %s52, 2
      // Predicated region
      $region65: #{multi_attention_net.1} parent=5 // pred_check
        %p795 = pneg %p794
      $region66: #{multi_attention_net.1} parent=5 // pred_check_branch
        %797 = sbr.rel (%p795) target = $region68
      $region67: #{multi_attention_net.1} parent=5 // pred_region
        // Predicated region
        $region69: #{multi_attention_net.1} parent=67 // pred_check
          %p798 = pneg %p303
        $region70: #{multi_attention_net.1} parent=67 // pred_check_branch
          %800 = sbr.rel (%p798) target = $region72
        $region71: #{multi_attention_net.1} parent=67 // pred_region
          %s801 = sand.u32 %s52, 1
          %s802 = scalar_lea.sflag [#allocation14], %s801
          %s803 = sand.u32 %s293, 1
          %s804 = scalar_lea.vmem [#allocation13], %s803
          %s806 = ssub.s32 16, 16
          %807 = vsyncadd %s802, %s806
          %s808 = smul.addr %s52, 16
          %s809 = scalar_lea.hbm %s11, %s808
          %s811 = sshll.u32 %s804, 4
          %s812 = int_to_ptr.vmem [resolvable:$true] %s811
          %814 = dma.hbm_to_vmem [thread:$0]  %s809, 16, %s812, %s802
        $region72: #{multi_attention_net.1} parent=67 // pred_fallthru
          _
        // Predicated region
        $region73: #{multi_attention_net.1} parent=67 // pred_check
          %p815 = pneg %p329
        $region74: #{multi_attention_net.1} parent=67 // pred_check_branch
          %817 = sbr.rel (%p815) target = $region76
        $region75: #{multi_attention_net.1} parent=67 // pred_region
          %s818 = sand.u32 %s52, 1
          %s819 = scalar_lea.sflag [#allocation14], %s818
          %s820 = sand.u32 %s319, 1
          %s821 = scalar_lea.vmem [#allocation15], %s820
          %s823 = ssub.s32 16, 16
          %824 = vsyncadd %s819, %s823
          %s825 = smul.addr %s52, 16
          %s826 = scalar_lea.hbm %s12, %s825
          %s828 = sshll.u32 %s821, 4
          %s829 = int_to_ptr.vmem [resolvable:$true] %s828
          %831 = dma.hbm_to_vmem [thread:$0]  %s826, 16, %s829, %s819
        $region76: #{multi_attention_net.1} parent=67 // pred_fallthru
          _
        // Predicated region
        $region77: #{multi_attention_net.1} parent=67 // pred_check
          %p832 = pneg %p355
        $region78: #{multi_attention_net.1} parent=67 // pred_check_branch
          %834 = sbr.rel (%p832) target = $region80
        $region79: #{multi_attention_net.1} parent=67 // pred_region
          %p835 = scmp.lt.s32.totalorder %s52, 1
          %s836 = scalar_select %p835, %s52, 1
          %s837 = smul.addr %s836, 32
          %s838 = smul.addr %s837, 4
          %s839 = scalar_lea.vmem %s13, %s838
        $region80: #{multi_attention_net.1} parent=67 // pred_fallthru
          _
        // Predicated region
        $region81: #{multi_attention_net.1} parent=67 // pred_check
          %p840 = pneg %p381
        $region82: #{multi_attention_net.1} parent=67 // pred_check_branch
          %842 = sbr.rel (%p840) target = $region84
        $region83: #{multi_attention_net.1} parent=67 // pred_region
          %p843 = scmp.lt.s32.totalorder %s52, 1
          %s844 = scalar_select %p843, %s52, 1
          %s845 = smul.addr %s844, 8
          %s846 = smul.addr %s845, 4
          %s847 = scalar_lea.vmem %s14, %s846
        $region84: #{multi_attention_net.1} parent=67 // pred_fallthru
          _
        // Predicated region
        $region85: #{multi_attention_net.1} parent=67 // pred_check
          %p848 = pneg %p407
        $region86: #{multi_attention_net.1} parent=67 // pred_check_branch
          %850 = sbr.rel (%p848) target = $region88
        $region87: #{multi_attention_net.1} parent=67 // pred_region
          %s851 = sand.u32 %s52, 1
          %s852 = scalar_lea.sflag [#allocation17], %s851
          %s853 = sand.u32 %s397, 1
          %s854 = smul.addr %s853, 32
          %s855 = scalar_lea.vmem [#allocation16], %s854
          %s857 = ssub.s32 512, 512
          %858 = vsyncadd %s852, %s857
          %s859 = smul.addr %s52, 8
          %s860 = smul.addr %s859, 64
          %s861 = scalar_lea.hbm %s15, %s860
          %s862 = sshll.u32 %s855, 4
          %s863 = int_to_ptr.vmem [resolvable:$true] %s862
          %868 = dma.hbm_to_vmem [thread:$0]  %s861, 512, %s863, %s852, 64, 64, 4
        $region88: #{multi_attention_net.1} parent=67 // pred_fallthru
          _
        // Predicated region
        $region89: #{multi_attention_net.1} parent=67 // pred_check
          %p869 = pneg %p433
        $region90: #{multi_attention_net.1} parent=67 // pred_check_branch
          %871 = sbr.rel (%p869) target = $region92
        $region91: #{multi_attention_net.1} parent=67 // pred_region
          %s872 = sand.u32 %s52, 1
          %s873 = scalar_lea.sflag [#allocation17], %s872
          %s874 = sand.u32 %s423, 1
          %s875 = smul.addr %s874, 64
          %s876 = scalar_lea.vmem [#allocation18], %s875
          %s878 = ssub.s32 1024, 1024
          %879 = vsyncadd %s873, %s878
          %s880 = smul.addr %s52, 16
          %s881 = smul.addr %s880, 64
          %s882 = scalar_lea.hbm %s16, %s881
          %s883 = sshll.u32 %s876, 4
          %s884 = int_to_ptr.vmem [resolvable:$true] %s883
          %889 = dma.hbm_to_vmem [thread:$0]  %s882, 1024, %s884, %s873, 64, 64, 4
        $region92: #{multi_attention_net.1} parent=67 // pred_fallthru
          _
        // Predicated region
        $region93: #{multi_attention_net.1} parent=67 // pred_check
          %p890 = pneg %p459
        $region94: #{multi_attention_net.1} parent=67 // pred_check_branch
          %892 = sbr.rel (%p890) target = $region96
        $region95: #{multi_attention_net.1} parent=67 // pred_region
          %s893 = sand.u32 %s52, 1
          %s894 = scalar_lea.sflag [#allocation20], %s893
          %s895 = sand.u32 %s449, 1
          %s896 = scalar_lea.vmem [#allocation19], %s895
          %s898 = ssub.s32 16, 16
          %899 = vsyncadd %s894, %s898
          %s900 = smul.addr %s52, 16
          %s901 = scalar_lea.hbm %s17, %s900
          %s903 = sshll.u32 %s896, 4
          %s904 = int_to_ptr.vmem [resolvable:$true] %s903
          %906 = dma.hbm_to_vmem [thread:$0]  %s901, 16, %s904, %s894
        $region96: #{multi_attention_net.1} parent=67 // pred_fallthru
          _
        // Predicated region
        $region97: #{multi_attention_net.1} parent=67 // pred_check
          %p907 = pneg %p485
        $region98: #{multi_attention_net.1} parent=67 // pred_check_branch
          %909 = sbr.rel (%p907) target = $region100
        $region99: #{multi_attention_net.1} parent=67 // pred_region
          %s910 = sand.u32 %s52, 1
          %s911 = scalar_lea.sflag [#allocation20], %s910
          %s912 = sand.u32 %s475, 1
          %s913 = scalar_lea.vmem [#allocation21], %s912
          %s915 = ssub.s32 16, 16
          %916 = vsyncadd %s911, %s915
          %s917 = smul.addr %s52, 16
          %s918 = scalar_lea.hbm %s18, %s917
          %s920 = sshll.u32 %s913, 4
          %s921 = int_to_ptr.vmem [resolvable:$true] %s920
          %923 = dma.hbm_to_vmem [thread:$0]  %s918, 16, %s921, %s911
        $region100: #{multi_attention_net.1} parent=67 // pred_fallthru
          _
        // Predicated region
        $region101: #{multi_attention_net.1} parent=67 // pred_check
          %p924 = pneg %p511
        $region102: #{multi_attention_net.1} parent=67 // pred_check_branch
          %926 = sbr.rel (%p924) target = $region104
        $region103: #{multi_attention_net.1} parent=67 // pred_region
          %s927 = sand.u32 %s52, 1
          %s928 = scalar_lea.sflag [#allocation23], %s927
          %s929 = sand.u32 %s501, 1
          %s930 = scalar_lea.vmem [#allocation22], %s929
          %s932 = ssub.s32 16, 16
          %933 = vsyncadd %s928, %s932
          %s934 = smul.addr %s52, 16
          %s935 = scalar_lea.hbm %s19, %s934
          %s937 = sshll.u32 %s930, 4
          %s938 = int_to_ptr.vmem [resolvable:$true] %s937
          %940 = dma.hbm_to_vmem [thread:$0]  %s935, 16, %s938, %s928
        $region104: #{multi_attention_net.1} parent=67 // pred_fallthru
          _
        // Predicated region
        $region105: #{multi_attention_net.1} parent=67 // pred_check
          %p941 = pneg %p537
        $region106: #{multi_attention_net.1} parent=67 // pred_check_branch
          %943 = sbr.rel (%p941) target = $region108
        $region107: #{multi_attention_net.1} parent=67 // pred_region
          %p944 = scmp.lt.s32.totalorder %s52, 1
          %s945 = scalar_select %p944, %s52, 1
          %s946 = smul.addr %s945, 64
          %s947 = smul.addr %s946, 4
          %s948 = scalar_lea.vmem %s20, %s947
        $region108: #{multi_attention_net.1} parent=67 // pred_fallthru
          _
        // Predicated region
        $region109: #{multi_attention_net.1} parent=67 // pred_check
          %p949 = pneg %p563
        $region110: #{multi_attention_net.1} parent=67 // pred_check_branch
          %951 = sbr.rel (%p949) target = $region112
        $region111: #{multi_attention_net.1} parent=67 // pred_region
          %s952 = sand.u32 %s52, 1
          %s953 = scalar_lea.sflag [#allocation23], %s952
          %s954 = sand.u32 %s553, 1
          %s955 = smul.addr %s954, 4
          %s956 = scalar_lea.vmem [#allocation24], %s955
          %s958 = ssub.s32 64, 64
          %959 = vsyncadd %s953, %s958
          %s960 = smul.addr %s52, 4
          %s961 = smul.addr %s960, 16
          %s962 = scalar_lea.hbm %s21, %s961
          %s964 = sshll.u32 %s956, 4
          %s965 = int_to_ptr.vmem [resolvable:$true] %s964
          %967 = dma.hbm_to_vmem [thread:$0]  %s962, 64, %s965, %s953
        $region112: #{multi_attention_net.1} parent=67 // pred_fallthru
          _
        // Predicated region
        $region113: #{multi_attention_net.1} parent=67 // pred_check
          %p968 = pneg %p589
        $region114: #{multi_attention_net.1} parent=67 // pred_check_branch
          %970 = sbr.rel (%p968) target = $region116
        $region115: #{multi_attention_net.1} parent=67 // pred_region
          %s971 = sand.u32 %s52, 1
          %s972 = scalar_lea.sflag [#allocation26], %s971
          %s973 = sand.u32 %s579, 1
          %s974 = smul.addr %s973, 256
          %s975 = scalar_lea.vmem [#allocation25], %s974
          %s977 = ssub.s32 4096, 4096
          %978 = vsyncadd %s972, %s977
          %s979 = smul.addr %s52, 64
          %s980 = smul.addr %s979, 64
          %s981 = scalar_lea.hbm %s22, %s980
          %s982 = sshll.u32 %s975, 4
          %s983 = int_to_ptr.vmem [resolvable:$true] %s982
          %988 = dma.hbm_to_vmem [thread:$0]  %s981, 4096, %s983, %s972, 64, 64, 4
        $region116: #{multi_attention_net.1} parent=67 // pred_fallthru
          _
        // Predicated region
        $region117: #{multi_attention_net.1} parent=67 // pred_check
          %p989 = pneg %p615
        $region118: #{multi_attention_net.1} parent=67 // pred_check_branch
          %991 = sbr.rel (%p989) target = $region120
        $region119: #{multi_attention_net.1} parent=67 // pred_region
          %s992 = sand.u32 %s52, 1
          %s993 = scalar_lea.sflag [#allocation26], %s992
          %s994 = sand.u32 %s605, 1
          %s995 = scalar_lea.vmem [#allocation27], %s994
          %s997 = ssub.s32 16, 16
          %998 = vsyncadd %s993, %s997
          %s999 = smul.addr %s52, 16
          %s1000 = scalar_lea.hbm %s23, %s999
          %s1002 = sshll.u32 %s995, 4
          %s1003 = int_to_ptr.vmem [resolvable:$true] %s1002
          %1005 = dma.hbm_to_vmem [thread:$0]  %s1000, 16, %s1003, %s993
        $region120: #{multi_attention_net.1} parent=67 // pred_fallthru
          _
      $region68: #{multi_attention_net.1} parent=5 // pred_fallthru
        _
      %p1006 = scmp.le.s32.totalorder 1, %s52
      %p1007 = scmp.lt.s32.totalorder %s52, 3
      %p1008 = pnand %p1006, %p1007
      %p1009 = pneg %p1008
      // Predicated region
      $region121: #{multi_attention_net.1} parent=5 // pred_check
        _
      $region122: #{multi_attention_net.1} parent=5 // pred_check_branch
        %1011 = sbr.rel (%p1008) target = $region124
      $region123: #{multi_attention_net.1} parent=5 // pred_region
        %s1012 = ssub.s32 %s52, 1
        // Predicated region
        $region125: #{multi_attention_net.1} parent=123 // pred_check
          %p1013 = pneg %p136
        $region126: #{multi_attention_net.1} parent=123 // pred_check_branch
          %1015 = sbr.rel (%p1013) target = $region128
        $region127: #{multi_attention_net.1} parent=123 // pred_region
          %1016 = dma.done [#allocation5], 256
        $region128: #{multi_attention_net.1} parent=123 // pred_fallthru
          _
        // Predicated region
        $region129: #{multi_attention_net.1} parent=123 // pred_check
          %p1017 = pneg %p157
        $region130: #{multi_attention_net.1} parent=123 // pred_check_branch
          %1019 = sbr.rel (%p1017) target = $region132
        $region131: #{multi_attention_net.1} parent=123 // pred_region
          %1020 = dma.done [#allocation8], 16
        $region132: #{multi_attention_net.1} parent=123 // pred_fallthru
          _
        // Predicated region
        $region133: #{multi_attention_net.1} parent=123 // pred_check
          %p1021 = pneg %p220
        $region134: #{multi_attention_net.1} parent=123 // pred_check_branch
          %1023 = sbr.rel (%p1021) target = $region136
        $region135: #{multi_attention_net.1} parent=123 // pred_region
          %1024 = dma.done [#allocation8], 512
        $region136: #{multi_attention_net.1} parent=123 // pred_fallthru
          _
        // Predicated region
        $region137: #{multi_attention_net.1} parent=123 // pred_check
          %p1025 = pneg %p262
        $region138: #{multi_attention_net.1} parent=123 // pred_check_branch
          %1027 = sbr.rel (%p1025) target = $region140
        $region139: #{multi_attention_net.1} parent=123 // pred_region
          %1028 = dma.done [#allocation11], 512
        $region140: #{multi_attention_net.1} parent=123 // pred_fallthru
          _
        // Predicated region
        $region141: #{multi_attention_net.1} parent=123 // pred_check
          %p1029 = pneg %p283
        $region142: #{multi_attention_net.1} parent=123 // pred_check_branch
          %1031 = sbr.rel (%p1029) target = $region144
        $region143: #{multi_attention_net.1} parent=123 // pred_region
          %1032 = dma.done [#allocation11], 32
        $region144: #{multi_attention_net.1} parent=123 // pred_fallthru
          _
        %s1033 = sand.u32 %s57, 1
        %s1034 = scalar_lea.sflag [#allocation14], %s1033
        %s1035 = sand.u32 %s296, 1
        %s1036 = scalar_lea.vmem [#allocation13], %s1035
        // Predicated region
        $region145: #{multi_attention_net.1} parent=123 // pred_check
          %p1037 = pneg %p309
        $region146: #{multi_attention_net.1} parent=123 // pred_check_branch
          %1039 = sbr.rel (%p1037) target = $region148
        $region147: #{multi_attention_net.1} parent=123 // pred_region
          %1040 = dma.done %s1034, 16
        $region148: #{multi_attention_net.1} parent=123 // pred_fallthru
          _
        %s1041 = sand.u32 %s57, 1
        %s1042 = scalar_lea.sflag [#allocation14], %s1041
        %s1043 = sand.u32 %s322, 1
        %s1044 = scalar_lea.vmem [#allocation15], %s1043
        // Predicated region
        $region149: #{multi_attention_net.1} parent=123 // pred_check
          %p1045 = pneg %p335
        $region150: #{multi_attention_net.1} parent=123 // pred_check_branch
          %1047 = sbr.rel (%p1045) target = $region152
        $region151: #{multi_attention_net.1} parent=123 // pred_region
          %1048 = dma.done %s1042, 16
        $region152: #{multi_attention_net.1} parent=123 // pred_fallthru
          _
        %s1049 = sand.u32 %s57, 1
        %s1050 = scalar_lea.sflag [#allocation17], %s1049
        %s1051 = sand.u32 %s400, 1
        %s1052 = smul.addr %s1051, 32
        %s1053 = scalar_lea.vmem [#allocation16], %s1052
        // Predicated region
        $region153: #{multi_attention_net.1} parent=123 // pred_check
          %p1054 = pneg %p413
        $region154: #{multi_attention_net.1} parent=123 // pred_check_branch
          %1056 = sbr.rel (%p1054) target = $region156
        $region155: #{multi_attention_net.1} parent=123 // pred_region
          %1057 = dma.done %s1050, 512
        $region156: #{multi_attention_net.1} parent=123 // pred_fallthru
          _
        %s1058 = sand.u32 %s57, 1
        %s1059 = scalar_lea.sflag [#allocation17], %s1058
        %s1060 = sand.u32 %s426, 1
        %s1061 = smul.addr %s1060, 64
        %s1062 = scalar_lea.vmem [#allocation18], %s1061
        // Predicated region
        $region157: #{multi_attention_net.1} parent=123 // pred_check
          %p1063 = pneg %p439
        $region158: #{multi_attention_net.1} parent=123 // pred_check_branch
          %1065 = sbr.rel (%p1063) target = $region160
        $region159: #{multi_attention_net.1} parent=123 // pred_region
          %1066 = dma.done %s1059, 1024
        $region160: #{multi_attention_net.1} parent=123 // pred_fallthru
          _
        %s1067 = sand.u32 %s57, 1
        %s1068 = scalar_lea.sflag [#allocation20], %s1067
        %s1069 = sand.u32 %s452, 1
        %s1070 = scalar_lea.vmem [#allocation19], %s1069
        // Predicated region
        $region161: #{multi_attention_net.1} parent=123 // pred_check
          %p1071 = pneg %p465
        $region162: #{multi_attention_net.1} parent=123 // pred_check_branch
          %1073 = sbr.rel (%p1071) target = $region164
        $region163: #{multi_attention_net.1} parent=123 // pred_region
          %1074 = dma.done %s1068, 16
        $region164: #{multi_attention_net.1} parent=123 // pred_fallthru
          _
        %s1075 = sand.u32 %s57, 1
        %s1076 = scalar_lea.sflag [#allocation20], %s1075
        %s1077 = sand.u32 %s478, 1
        %s1078 = scalar_lea.vmem [#allocation21], %s1077
        // Predicated region
        $region165: #{multi_attention_net.1} parent=123 // pred_check
          %p1079 = pneg %p491
        $region166: #{multi_attention_net.1} parent=123 // pred_check_branch
          %1081 = sbr.rel (%p1079) target = $region168
        $region167: #{multi_attention_net.1} parent=123 // pred_region
          %1082 = dma.done %s1076, 16
        $region168: #{multi_attention_net.1} parent=123 // pred_fallthru
          _
        %s1083 = sand.u32 %s57, 1
        %s1084 = scalar_lea.sflag [#allocation23], %s1083
        %s1085 = sand.u32 %s504, 1
        %s1086 = scalar_lea.vmem [#allocation22], %s1085
        // Predicated region
        $region169: #{multi_attention_net.1} parent=123 // pred_check
          %p1087 = pneg %p517
        $region170: #{multi_attention_net.1} parent=123 // pred_check_branch
          %1089 = sbr.rel (%p1087) target = $region172
        $region171: #{multi_attention_net.1} parent=123 // pred_region
          %1090 = dma.done %s1084, 16
        $region172: #{multi_attention_net.1} parent=123 // pred_fallthru
          _
        %s1091 = sand.u32 %s57, 1
        %s1092 = scalar_lea.sflag [#allocation23], %s1091
        %s1093 = sand.u32 %s556, 1
        %s1094 = smul.addr %s1093, 4
        %s1095 = scalar_lea.vmem [#allocation24], %s1094
        // Predicated region
        $region173: #{multi_attention_net.1} parent=123 // pred_check
          %p1096 = pneg %p569
        $region174: #{multi_attention_net.1} parent=123 // pred_check_branch
          %1098 = sbr.rel (%p1096) target = $region176
        $region175: #{multi_attention_net.1} parent=123 // pred_region
          %1099 = dma.done %s1092, 64
        $region176: #{multi_attention_net.1} parent=123 // pred_fallthru
          _
        %s1100 = sand.u32 %s57, 1
        %s1101 = scalar_lea.sflag [#allocation26], %s1100
        %s1102 = sand.u32 %s582, 1
        %s1103 = smul.addr %s1102, 256
        %s1104 = scalar_lea.vmem [#allocation25], %s1103
        // Predicated region
        $region177: #{multi_attention_net.1} parent=123 // pred_check
          %p1105 = pneg %p595
        $region178: #{multi_attention_net.1} parent=123 // pred_check_branch
          %1107 = sbr.rel (%p1105) target = $region180
        $region179: #{multi_attention_net.1} parent=123 // pred_region
          %1108 = dma.done %s1101, 4096
        $region180: #{multi_attention_net.1} parent=123 // pred_fallthru
          _
        %s1109 = sand.u32 %s57, 1
        %s1110 = scalar_lea.sflag [#allocation26], %s1109
        %s1111 = sand.u32 %s608, 1
        %s1112 = scalar_lea.vmem [#allocation27], %s1111
        // Predicated region
        $region181: #{multi_attention_net.1} parent=123 // pred_check
          %p1113 = pneg %p621
        $region182: #{multi_attention_net.1} parent=123 // pred_check_branch
          %1115 = sbr.rel (%p1113) target = $region184
        $region183: #{multi_attention_net.1} parent=123 // pred_region
          %1116 = dma.done %s1110, 16
        $region184: #{multi_attention_net.1} parent=123 // pred_fallthru
          _
        // Predicated region
        $region185: #{multi_attention_net.1} parent=123 // pred_check
          %p1117 = pneg %p663
        $region186: #{multi_attention_net.1} parent=123 // pred_check_branch
          %1119 = sbr.rel (%p1117) target = $region188
        $region187: #{multi_attention_net.1} parent=123 // pred_region
          %1120 = dma.done [#allocation29], 16
        $region188: #{multi_attention_net.1} parent=123 // pred_fallthru
          _
        %p1121 = pneg %p73
        %p1122 = pneg %p70
        %p1123 = pneg %p94
        %p1124 = pneg %p91
        %p1125 = pneg %p115
        %p1126 = pneg %p112
        %p1127 = pneg %p136
        %p1128 = pneg %p133
        %p1129 = pneg %p157
        %p1130 = pneg %p154
        %p1131 = pneg %p178
        %p1132 = pneg %p175
        %p1133 = pneg %p199
        %p1134 = pneg %p196
        %p1135 = pneg %p220
        %p1136 = pneg %p217
        %p1137 = pneg %p241
        %p1138 = pneg %p238
        %p1139 = pneg %p262
        %p1140 = pneg %p259
        %p1141 = pneg %p283
        %p1142 = pneg %p280
        %s1143 = sand.u32 %s57, 1
        %s1144 = scalar_lea.sflag [#allocation14], %s1143
        %s1145 = sand.u32 %s296, 1
        %s1146 = scalar_lea.vmem [#allocation13], %s1145
        %p1147 = pneg %p309
        %p1148 = pneg %p306
        %s1149 = sand.u32 %s57, 1
        %s1150 = scalar_lea.sflag [#allocation14], %s1149
        %s1151 = sand.u32 %s322, 1
        %s1152 = scalar_lea.vmem [#allocation15], %s1151
        %p1153 = pneg %p335
        %p1154 = pneg %p332
        %p1155 = scmp.lt.s32.totalorder %s57, 1
        %s1156 = scalar_select %p1155, %s57, 1
        %s1157 = smul.addr %s1156, 32
        %s1158 = smul.addr %s1157, 4
        %s1159 = scalar_lea.vmem %s13, %s1158
        %p1160 = pneg %p361
        %p1161 = pneg %p358
        %p1162 = scmp.lt.s32.totalorder %s57, 1
        %s1163 = scalar_select %p1162, %s57, 1
        %s1164 = smul.addr %s1163, 8
        %s1165 = smul.addr %s1164, 4
        %s1166 = scalar_lea.vmem %s14, %s1165
        %p1167 = pneg %p387
        %p1168 = pneg %p384
        %s1169 = sand.u32 %s57, 1
        %s1170 = scalar_lea.sflag [#allocation17], %s1169
        %s1171 = sand.u32 %s400, 1
        %s1172 = smul.addr %s1171, 32
        %s1173 = scalar_lea.vmem [#allocation16], %s1172
        %p1174 = pneg %p413
        %p1175 = pneg %p410
        %s1176 = sand.u32 %s57, 1
        %s1177 = scalar_lea.sflag [#allocation17], %s1176
        %s1178 = sand.u32 %s426, 1
        %s1179 = smul.addr %s1178, 64
        %s1180 = scalar_lea.vmem [#allocation18], %s1179
        %p1181 = pneg %p439
        %p1182 = pneg %p436
        %s1183 = sand.u32 %s57, 1
        %s1184 = scalar_lea.sflag [#allocation20], %s1183
        %s1185 = sand.u32 %s452, 1
        %s1186 = scalar_lea.vmem [#allocation19], %s1185
        %p1187 = pneg %p465
        %p1188 = pneg %p462
        %s1189 = sand.u32 %s57, 1
        %s1190 = scalar_lea.sflag [#allocation20], %s1189
        %s1191 = sand.u32 %s478, 1
        %s1192 = scalar_lea.vmem [#allocation21], %s1191
        %p1193 = pneg %p491
        %p1194 = pneg %p488
        %s1195 = sand.u32 %s57, 1
        %s1196 = scalar_lea.sflag [#allocation23], %s1195
        %s1197 = sand.u32 %s504, 1
        %s1198 = scalar_lea.vmem [#allocation22], %s1197
        %p1199 = pneg %p517
        %p1200 = pneg %p514
        %p1201 = scmp.lt.s32.totalorder %s57, 1
        %s1202 = scalar_select %p1201, %s57, 1
        %s1203 = smul.addr %s1202, 64
        %s1204 = smul.addr %s1203, 4
        %s1205 = scalar_lea.vmem %s20, %s1204
        %p1206 = pneg %p543
        %p1207 = pneg %p540
        %s1208 = sand.u32 %s57, 1
        %s1209 = scalar_lea.sflag [#allocation23], %s1208
        %s1210 = sand.u32 %s556, 1
        %s1211 = smul.addr %s1210, 4
        %s1212 = scalar_lea.vmem [#allocation24], %s1211
        %p1213 = pneg %p569
        %p1214 = pneg %p566
        %s1215 = sand.u32 %s57, 1
        %s1216 = scalar_lea.sflag [#allocation26], %s1215
        %s1217 = sand.u32 %s582, 1
        %s1218 = smul.addr %s1217, 256
        %s1219 = scalar_lea.vmem [#allocation25], %s1218
        %p1220 = pneg %p595
        %p1221 = pneg %p592
        %s1222 = sand.u32 %s57, 1
        %s1223 = scalar_lea.sflag [#allocation26], %s1222
        %s1224 = sand.u32 %s608, 1
        %s1225 = scalar_lea.vmem [#allocation27], %s1224
        %p1226 = pneg %p621
        %p1227 = pneg %p618
        %p1228 = pneg %p642
        %p1229 = pneg %p639
        %p1230 = pneg %p663
        %p1231 = pneg %p660
        %p1232 = pneg %p684
        %p1233 = pneg %p681
        %p1234 = scmp.lt.s32.totalorder %s57, 1
        %s1235 = scalar_select %p1234, %s57, 1
        %s1236 = smul.addr %s1235, 32
        %s1237 = smul.addr %s1236, 4
        %s1238 = scalar_lea.vmem %s13, %s1237
        %p1239 = scmp.lt.s32.totalorder %s57, 1
        %s1240 = scalar_select %p1239, %s57, 1
        %s1241 = smul.addr %s1240, 8
        %s1242 = smul.addr %s1241, 4
        %s1243 = scalar_lea.vmem %s14, %s1242
        %p1244 = scmp.lt.s32.totalorder %s57, 1
        %s1245 = scalar_select %p1244, %s57, 1
        %s1246 = smul.addr %s1245, 64
        %s1247 = smul.addr %s1246, 4
        %s1248 = scalar_lea.vmem %s20, %s1247
        %p1250 = scmp.eq.s32.totalorder %s57, 0
        // Predicated region
        $region189: #{multi_attention_net.1} parent=123 // pred_check
          %p1251 = pneg %p1250
        $region190: #{multi_attention_net.1} parent=123 // pred_check_branch
          %1253 = sbr.rel (%p1251) target = $region192
        $region191: #{multi_attention_net.1} parent=123 // pred_region
          %v1254 = vld [vmem:[%s0] sm:$0xff]
          %v1255 = vld [vmem:[%s0 + $0x8] sm:$0xff]
          %v1256 = vld [vmem:[#allocation4] sm:$0xff]
          %v1257 = vld [vmem:[#allocation4 + $0x8] sm:$0xff]
          %v1258 = vld [vmem:[#allocation7] sm:$0x1]
          %v1260 = vlaneseq
          %v1261 = vshrl.u32 %v1260, 7
          %v1262 = vsub.s32 0, %v1261
          %v1263 = vrot.slane %v1258, %v1262
          %vm1265 = vcmask 130048
          %v1267 = vsel %vm1265, %v1254, 0
          %v1270 = vsel %vm1265, %v1255, 0
          %1272 = vmatprep.subr.mxu0 0.0
          %1273 = vmatpush1.msra.mxu0 %v1256
          %1274 = vmatprep.subr.mxu0 0.0
          %1275 = vmatpush1.msra.mxu0 %v1257
          %1276 = vmatprep.subr.mxu0 0.0
          %1277 = vmatpush1.msra.mxu0 0.0
          %1278 = vmatprep.subr.mxu0 0.0
          %1279 = vmatpush1.msra.mxu0 0.0
          %1280 = vmatprep.subr.mxu0 0.0
          %1281 = vmatpush1.msra.mxu0 0.0
          %1282 = vmatprep.subr.mxu0 0.0
          %1283 = vmatpush1.msra.mxu0 0.0
          %1284 = vmatprep.subr.mxu0 0.0
          %1285 = vmatpush1.msra.mxu0 0.0
          %1286 = vmatprep.subr.mxu0 0.0
          %1287 = vmatpush1.msra.mxu0 0.0
          %1288 = vmatprep.subr.mxu0 0.0
          %1289 = vmatpush1.msra.mxu0 0.0
          %1290 = vmatprep.subr.mxu0 0.0
          %1291 = vmatpush1.msra.mxu0 0.0
          %1292 = vmatprep.subr.mxu0 0.0
          %1293 = vmatpush1.msra.mxu0 0.0
          %1294 = vmatprep.subr.mxu0 0.0
          %1295 = vmatpush1.msra.mxu0 0.0
          %1296 = vmatprep.subr.mxu0 0.0
          %1297 = vmatpush1.msra.mxu0 0.0
          %1298 = vmatprep.subr.mxu0 0.0
          %1299 = vmatpush1.msra.mxu0 0.0
          %1300 = vmatprep.subr.mxu0 0.0
          %1301 = vmatpush1.msra.mxu0 0.0
          %1302 = vmatprep.subr.mxu0 0.0
          %1303 = vmatpush1.msra.mxu0 0.0
          %1304 = vmatprep.subr.mxu0 0.0
          %1305 = vmatpush1.msra.mxu0 0.0
          %1306 = vmatprep.subr.mxu0 0.0
          %1307 = vmatpush1.msra.mxu0 0.0
          %1308 = vmatprep.subr.mxu0 0.0
          %1309 = vmatpush1.msra.mxu0 0.0
          %1310 = vmatprep.subr.mxu0 0.0
          %1311 = vmatpush1.msra.mxu0 0.0
          %1312 = vmatprep.subr.mxu0 0.0
          %1313 = vmatpush1.msra.mxu0 0.0
          %1314 = vmatprep.subr.mxu0 0.0
          %1315 = vmatpush1.msra.mxu0 0.0
          %1316 = vmatprep.subr.mxu0 0.0
          %1317 = vmatpush1.msra.mxu0 0.0
          %1318 = vmatprep.subr.mxu0 0.0
          %1319 = vmatpush1.msra.mxu0 0.0
          %1320 = vmatprep.subr.mxu0 0.0
          %1321 = vmatpush1.msra.mxu0 0.0
          %1322 = vmatprep.subr.mxu0 0.0
          %1323 = vmatpush1.msra.mxu0 0.0
          %1324 = vmatprep.subr.mxu0 0.0
          %1325 = vmatpush1.msra.mxu0 0.0
          %1326 = vmatprep.subr.mxu0 0.0
          %1327 = vmatpush1.msra.mxu0 0.0
          %1328 = vmatprep.subr.mxu0 0.0
          %1329 = vmatpush1.msra.mxu0 0.0
          %1330 = vmatprep.subr.mxu0 0.0
          %1331 = vmatpush1.msra.mxu0 0.0
          %1332 = vmatprep.subr.mxu0 0.0
          %1333 = vmatpush1.msra.mxu0 0.0
          %1334 = vmatprep.subr.mxu0 0.0
          %1335 = vmatpush1.msra.mxu0 0.0
          %1336 = vmatprep.mubr.f32.mxu0 0.0
          %1337 = vmatmul.mubr.f32.gmra.mrb[0].mxu0 %v1267
          %v1338 = vpop.f32.mrb[0].mxu0
          %v1339 = vadd.f32 %v1263, %v1338
          %v1340 = vpop.f32.mrb[0].mxu0
          %1341 = vmatprep.mubr.f32.mxu0 0.0
          %1342 = vmatmul.mubr.f32.gmra.mrb[0].mxu0 %v1270
          %v1343 = vpop.f32.mrb[0].mxu0
          %v1344 = vadd.f32 %v1263, %v1343
          %v1345 = vpop.f32.mrb[0].mxu0
          %1346 = vdwg.mxu0
          %1347 = vst [vmem:[#allocation2] sm:$0xff] %v1339
          %1348 = vst [vmem:[#allocation2 + $0x8] sm:$0xff] %v1344
          %v1349 = vld [vmem:[%s1] sm:$0x3]
          %v1350 = vld [vmem:[%s5] sm:$0xff]
          %v1351 = vld [vmem:[%s5 + $0x8] sm:$0xff]
          %v1352 = vld [vmem:[%s5 + $0x10] sm:$0xff]
          %v1353 = vld [vmem:[%s5 + $0x18] sm:$0xff]
          %v1354 = vld [vmem:[%s6] sm:$0x1]
          %v1356 = vlaneseq
          %v1357 = vshrl.u32 %v1356, 7
          %v1358 = vsub.s32 0, %v1357
          %v1359 = vrot.slane %v1354, %v1358
          %vm1361 = vcmask 261120
          %v1363 = vsel %vm1361, %v1349, 0
          %1365 = vmatprep.subr.mxu0 0.0
          %1366 = vmatpush1.msra.mxu0 %v1350
          %1367 = vmatprep.subr.mxu0 0.0
          %1368 = vmatpush1.msra.mxu0 %v1351
          %1369 = vmatprep.subr.mxu0 0.0
          %1370 = vmatpush1.msra.mxu0 %v1352
          %1371 = vmatprep.subr.mxu0 0.0
          %1372 = vmatpush1.msra.mxu0 %v1353
          %1373 = vmatprep.subr.mxu0 0.0
          %1374 = vmatpush1.msra.mxu0 0.0
          %1375 = vmatprep.subr.mxu0 0.0
          %1376 = vmatpush1.msra.mxu0 0.0
          %1377 = vmatprep.subr.mxu0 0.0
          %1378 = vmatpush1.msra.mxu0 0.0
          %1379 = vmatprep.subr.mxu0 0.0
          %1380 = vmatpush1.msra.mxu0 0.0
          %1381 = vmatprep.subr.mxu0 0.0
          %1382 = vmatpush1.msra.mxu0 0.0
          %1383 = vmatprep.subr.mxu0 0.0
          %1384 = vmatpush1.msra.mxu0 0.0
          %1385 = vmatprep.subr.mxu0 0.0
          %1386 = vmatpush1.msra.mxu0 0.0
          %1387 = vmatprep.subr.mxu0 0.0
          %1388 = vmatpush1.msra.mxu0 0.0
          %1389 = vmatprep.subr.mxu0 0.0
          %1390 = vmatpush1.msra.mxu0 0.0
          %1391 = vmatprep.subr.mxu0 0.0
          %1392 = vmatpush1.msra.mxu0 0.0
          %1393 = vmatprep.subr.mxu0 0.0
          %1394 = vmatpush1.msra.mxu0 0.0
          %1395 = vmatprep.subr.mxu0 0.0
          %1396 = vmatpush1.msra.mxu0 0.0
          %1397 = vmatprep.subr.mxu0 0.0
          %1398 = vmatpush1.msra.mxu0 0.0
          %1399 = vmatprep.subr.mxu0 0.0
          %1400 = vmatpush1.msra.mxu0 0.0
          %1401 = vmatprep.subr.mxu0 0.0
          %1402 = vmatpush1.msra.mxu0 0.0
          %1403 = vmatprep.subr.mxu0 0.0
          %1404 = vmatpush1.msra.mxu0 0.0
          %1405 = vmatprep.subr.mxu0 0.0
          %1406 = vmatpush1.msra.mxu0 0.0
          %1407 = vmatprep.subr.mxu0 0.0
          %1408 = vmatpush1.msra.mxu0 0.0
          %1409 = vmatprep.subr.mxu0 0.0
          %1410 = vmatpush1.msra.mxu0 0.0
          %1411 = vmatprep.subr.mxu0 0.0
          %1412 = vmatpush1.msra.mxu0 0.0
          %1413 = vmatprep.subr.mxu0 0.0
          %1414 = vmatpush1.msra.mxu0 0.0
          %1415 = vmatprep.subr.mxu0 0.0
          %1416 = vmatpush1.msra.mxu0 0.0
          %1417 = vmatprep.subr.mxu0 0.0
          %1418 = vmatpush1.msra.mxu0 0.0
          %1419 = vmatprep.subr.mxu0 0.0
          %1420 = vmatpush1.msra.mxu0 0.0
          %1421 = vmatprep.subr.mxu0 0.0
          %1422 = vmatpush1.msra.mxu0 0.0
          %1423 = vmatprep.subr.mxu0 0.0
          %1424 = vmatpush1.msra.mxu0 0.0
          %1425 = vmatprep.subr.mxu0 0.0
          %1426 = vmatpush1.msra.mxu0 0.0
          %1427 = vmatprep.subr.mxu0 0.0
          %1428 = vmatpush1.msra.mxu0 0.0
          %1429 = vmatprep.mubr.f32.mxu0 0.0
          %1430 = vmatmul.mubr.f32.gmra.mrb[0].mxu0 %v1363
          %v1431 = vpop.f32.mrb[0].mxu0
          %v1432 = vadd.f32 %v1359, %v1431
          %v1433 = vpop.f32.mrb[0].mxu0
          %1434 = vdwg.mxu0
          %vm1435 = vcmp.ge.f32.partialorder %v1432, 0.0
          %v1436 = vmul.f32 %v1432, 0.2
          %v1437 = vsel %vm1435, %v1432, %v1436
          %v1438 = vld [vmem:[#allocation9] sm:$0xff]
          %v1439 = vld [vmem:[#allocation9 + $0x8] sm:$0xff]
          %v1440 = vld [vmem:[#allocation9 + $0x10] sm:$0xff]
          %v1441 = vld [vmem:[#allocation9 + $0x18] sm:$0xff]
          %v1442 = vld [vmem:[%s8] sm:$0x1]
          %v1444 = vlaneseq
          %v1445 = vshrl.u32 %v1444, 7
          %v1446 = vsub.s32 0, %v1445
          %v1447 = vrot.slane %v1442, %v1446
          %v1450 = vsel %vm1361, %v1437, 0
          %1452 = vmatprep.subr.mxu0 0.0
          %1453 = vmatpush1.msra.mxu0 %v1438
          %1454 = vmatprep.subr.mxu0 0.0
          %1455 = vmatpush1.msra.mxu0 %v1439
          %1456 = vmatprep.subr.mxu0 0.0
          %1457 = vmatpush1.msra.mxu0 %v1440
          %1458 = vmatprep.subr.mxu0 0.0
          %1459 = vmatpush1.msra.mxu0 %v1441
          %1460 = vmatprep.subr.mxu0 0.0
          %1461 = vmatpush1.msra.mxu0 0.0
          %1462 = vmatprep.subr.mxu0 0.0
          %1463 = vmatpush1.msra.mxu0 0.0
          %1464 = vmatprep.subr.mxu0 0.0
          %1465 = vmatpush1.msra.mxu0 0.0
          %1466 = vmatprep.subr.mxu0 0.0
          %1467 = vmatpush1.msra.mxu0 0.0
          %1468 = vmatprep.subr.mxu0 0.0
          %1469 = vmatpush1.msra.mxu0 0.0
          %1470 = vmatprep.subr.mxu0 0.0
          %1471 = vmatpush1.msra.mxu0 0.0
          %1472 = vmatprep.subr.mxu0 0.0
          %1473 = vmatpush1.msra.mxu0 0.0
          %1474 = vmatprep.subr.mxu0 0.0
          %1475 = vmatpush1.msra.mxu0 0.0
          %1476 = vmatprep.subr.mxu0 0.0
          %1477 = vmatpush1.msra.mxu0 0.0
          %1478 = vmatprep.subr.mxu0 0.0
          %1479 = vmatpush1.msra.mxu0 0.0
          %1480 = vmatprep.subr.mxu0 0.0
          %1481 = vmatpush1.msra.mxu0 0.0
          %1482 = vmatprep.subr.mxu0 0.0
          %1483 = vmatpush1.msra.mxu0 0.0
          %1484 = vmatprep.subr.mxu0 0.0
          %1485 = vmatpush1.msra.mxu0 0.0
          %1486 = vmatprep.subr.mxu0 0.0
          %1487 = vmatpush1.msra.mxu0 0.0
          %1488 = vmatprep.subr.mxu0 0.0
          %1489 = vmatpush1.msra.mxu0 0.0
          %1490 = vmatprep.subr.mxu0 0.0
          %1491 = vmatpush1.msra.mxu0 0.0
          %1492 = vmatprep.subr.mxu0 0.0
          %1493 = vmatpush1.msra.mxu0 0.0
          %1494 = vmatprep.subr.mxu0 0.0
          %1495 = vmatpush1.msra.mxu0 0.0
          %1496 = vmatprep.subr.mxu0 0.0
          %1497 = vmatpush1.msra.mxu0 0.0
          %1498 = vmatprep.subr.mxu0 0.0
          %1499 = vmatpush1.msra.mxu0 0.0
          %1500 = vmatprep.subr.mxu0 0.0
          %1501 = vmatpush1.msra.mxu0 0.0
          %1502 = vmatprep.subr.mxu0 0.0
          %1503 = vmatpush1.msra.mxu0 0.0
          %1504 = vmatprep.subr.mxu0 0.0
          %1505 = vmatpush1.msra.mxu0 0.0
          %1506 = vmatprep.subr.mxu0 0.0
          %1507 = vmatpush1.msra.mxu0 0.0
          %1508 = vmatprep.subr.mxu0 0.0
          %1509 = vmatpush1.msra.mxu0 0.0
          %1510 = vmatprep.subr.mxu0 0.0
          %1511 = vmatpush1.msra.mxu0 0.0
          %1512 = vmatprep.subr.mxu0 0.0
          %1513 = vmatpush1.msra.mxu0 0.0
          %1514 = vmatprep.subr.mxu0 0.0
          %1515 = vmatpush1.msra.mxu0 0.0
          %1516 = vmatprep.mubr.f32.mxu0 0.0
          %1517 = vmatmul.mubr.f32.gmra.mrb[0].mxu0 %v1450
          %v1518 = vpop.f32.mrb[0].mxu0
          %v1519 = vadd.f32 %v1447, %v1518
          %v1520 = vpop.f32.mrb[0].mxu0
          %1521 = vdwg.mxu0
          %v1522 = vpack.c.bf16 %v1519, %v1519
          %v1523 = vld [vmem:[#allocation10] sm:$0xf]
          %v1524 = vld [vmem:[#allocation10 + $0x4] sm:$0xf]
          %v1525 = vld [vmem:[#allocation10 + $0x8] sm:$0xf]
          %v1526 = vld [vmem:[#allocation10 + $0xc] sm:$0xf]
          %v1527 = vld [vmem:[#allocation12] sm:$0x1]
          %v1529 = vlaneseq
          %v1530 = vshrl.u32 %v1529, 7
          %v1531 = vsub.s32 0, %v1530
          %v1532 = vrot.slane %v1527, %v1531
          %v1538 = vunpack.c.l.b16 %v1523
          %v1539 = vunpack.c.l.b16 %v1524
          %v1540 = vunpack.c.l.b16 %v1525
          %v1541 = vunpack.c.l.b16 %v1526
          %v1542 = vpack.c.b16 %v1539, %v1538
          %v1543 = vpack.c.b16 %v1541, %v1540
          %v1547 = vsel %vm1361, %v1522, 0
          %1549 = vmatprep.subr.bf16.mxu0 0
          %1550 = vmatpush1.bf16.msra.mxu0 %v1542
          %1551 = vmatprep.subr.bf16.mxu0 0
          %1552 = vmatpush1.bf16.msra.mxu0 %v1543
          %1553 = vmatprep.subr.bf16.mxu0 0
          %1554 = vmatpush1.bf16.msra.mxu0 0
          %1555 = vmatprep.subr.bf16.mxu0 0
          %1556 = vmatpush1.bf16.msra.mxu0 0
          %1557 = vmatprep.subr.bf16.mxu0 0
          %1558 = vmatpush1.bf16.msra.mxu0 0
          %1559 = vmatprep.subr.bf16.mxu0 0
          %1560 = vmatpush1.bf16.msra.mxu0 0
          %1561 = vmatprep.subr.bf16.mxu0 0
          %1562 = vmatpush1.bf16.msra.mxu0 0
          %1563 = vmatprep.subr.bf16.mxu0 0
          %1564 = vmatpush1.bf16.msra.mxu0 0
          %1565 = vmatprep.subr.bf16.mxu0 0
          %1566 = vmatpush1.bf16.msra.mxu0 0
          %1567 = vmatprep.subr.bf16.mxu0 0
          %1568 = vmatpush1.bf16.msra.mxu0 0
          %1569 = vmatprep.subr.bf16.mxu0 0
          %1570 = vmatpush1.bf16.msra.mxu0 0
          %1571 = vmatprep.subr.bf16.mxu0 0
          %1572 = vmatpush1.bf16.msra.mxu0 0
          %1573 = vmatprep.subr.bf16.mxu0 0
          %1574 = vmatpush1.bf16.msra.mxu0 0
          %1575 = vmatprep.subr.bf16.mxu0 0
          %1576 = vmatpush1.bf16.msra.mxu0 0
          %1577 = vmatprep.subr.bf16.mxu0 0
          %1578 = vmatpush1.bf16.msra.mxu0 0
          %1579 = vmatprep.subr.bf16.mxu0 0
          %1580 = vmatpush1.bf16.msra.mxu0 0
          %1581 = vmatprep.mubr.bf16.mxu0 0
          %1582 = vmatmul.mubr.bf16.gmra.mrb[0].mxu0 %v1547
          %v1583 = vpop.f32.mrb[0].mxu0
          %v1584 = vadd.f32 %v1532, %v1583
          %v1585 = vpop.f32.mrb[0].mxu0
          %v1586 = vpop.f32.mrb[0].mxu0
          %v1587 = vpop.f32.mrb[0].mxu0
          %1588 = vdwg.mxu0
          %v1591 = vunpack.c.l.s4 1966171168
          %v1592 = vunpack.c.0.s8 %v1591
          %v1593 = vlaneseq
          %v1594 = vshrl.u32 %v1593, 7
          %v1595 = vsub.s32 %v1592, %v1594
          %v1596 = vrot.slane %v1584, %v1595
          %v1597 = vcombine.high %v1596, %v1596
          %v1599 = vunpack.c.l.s4 1966171168
          %v1600 = vunpack.c.0.s8 %v1599
          %v1601 = vlaneseq
          %v1602 = vshrl.u32 %v1601, 7
          %v1603 = vsub.s32 %v1600, %v1602
          %v1604 = vrot.slane %v1596, %v1603
          %v1606 = vunpack.c.l.s4 1966171168
          %v1607 = vunpack.c.0.s8 %v1606
          %v1608 = vlaneseq
          %v1609 = vshrl.u32 %v1608, 7
          %v1610 = vsub.s32 %v1607, %v1609
          %v1611 = vrot.slane %v1597, %v1610
          %v1612 = vlaneseq
          %v1613 = vshrl.u32 %v1612, 7
          %v1614 = vsub.s32 0, %v1613
          %v1615 = vrot.slane %v1604, %v1614
          %v1616 = vlaneseq
          %v1617 = vshrl.u32 %v1616, 7
          %v1618 = vsub.s32 0, %v1617
          %v1619 = vrot.slane %v1611, %v1618
          %1622 = vst [vmem:[#allocation3] sm:$0xff] %v1615
          %1623 = vst [vmem:[#allocation3 + $0x8] sm:$0xff] %v1619
          %s1624 = scalar_lea.vmem [#allocation10], 16
          %v1625 = vld [vmem:[%s1624] sm:$0xf]
          %v1626 = vld [vmem:[%s1624 + $0x4] sm:$0xf]
          %v1627 = vld [vmem:[%s1624 + $0x8] sm:$0xf]
          %v1628 = vld [vmem:[%s1624 + $0xc] sm:$0xf]
          %s1629 = scalar_lea.vmem [#allocation12], 1
          %v1630 = vld [vmem:[%s1629] sm:$0x1]
          %v1632 = vlaneseq
          %v1633 = vshrl.u32 %v1632, 7
          %v1634 = vsub.s32 0, %v1633
          %v1635 = vrot.slane %v1630, %v1634
          %v1641 = vunpack.c.l.b16 %v1625
          %v1642 = vunpack.c.l.b16 %v1626
          %v1643 = vunpack.c.l.b16 %v1627
          %v1644 = vunpack.c.l.b16 %v1628
          %v1645 = vpack.c.b16 %v1642, %v1641
          %v1646 = vpack.c.b16 %v1644, %v1643
          %1649 = vmatprep.subr.bf16.mxu0 0
          %1650 = vmatpush1.bf16.msra.mxu0 %v1645
          %1651 = vmatprep.subr.bf16.mxu0 0
          %1652 = vmatpush1.bf16.msra.mxu0 %v1646
          %1653 = vmatprep.subr.bf16.mxu0 0
          %1654 = vmatpush1.bf16.msra.mxu0 0
          %1655 = vmatprep.subr.bf16.mxu0 0
          %1656 = vmatpush1.bf16.msra.mxu0 0
          %1657 = vmatprep.subr.bf16.mxu0 0
          %1658 = vmatpush1.bf16.msra.mxu0 0
          %1659 = vmatprep.subr.bf16.mxu0 0
          %1660 = vmatpush1.bf16.msra.mxu0 0
          %1661 = vmatprep.subr.bf16.mxu0 0
          %1662 = vmatpush1.bf16.msra.mxu0 0
          %1663 = vmatprep.subr.bf16.mxu0 0
          %1664 = vmatpush1.bf16.msra.mxu0 0
          %1665 = vmatprep.subr.bf16.mxu0 0
          %1666 = vmatpush1.bf16.msra.mxu0 0
          %1667 = vmatprep.subr.bf16.mxu0 0
          %1668 = vmatpush1.bf16.msra.mxu0 0
          %1669 = vmatprep.subr.bf16.mxu0 0
          %1670 = vmatpush1.bf16.msra.mxu0 0
          %1671 = vmatprep.subr.bf16.mxu0 0
          %1672 = vmatpush1.bf16.msra.mxu0 0
          %1673 = vmatprep.subr.bf16.mxu0 0
          %1674 = vmatpush1.bf16.msra.mxu0 0
          %1675 = vmatprep.subr.bf16.mxu0 0
          %1676 = vmatpush1.bf16.msra.mxu0 0
          %1677 = vmatprep.subr.bf16.mxu0 0
          %1678 = vmatpush1.bf16.msra.mxu0 0
          %1679 = vmatprep.subr.bf16.mxu0 0
          %1680 = vmatpush1.bf16.msra.mxu0 0
          %1681 = vmatprep.mubr.bf16.mxu0 0
          %1682 = vmatmul.mubr.bf16.gmra.mrb[0].mxu0 %v1547
          %v1683 = vpop.f32.mrb[0].mxu0
          %v1684 = vadd.f32 %v1635, %v1683
          %v1685 = vpop.f32.mrb[0].mxu0
          %v1686 = vpop.f32.mrb[0].mxu0
          %v1687 = vpop.f32.mrb[0].mxu0
          %1688 = vdwg.mxu0
          %v1691 = vunpack.c.l.s4 1966171168
          %v1692 = vunpack.c.0.s8 %v1691
          %v1693 = vlaneseq
          %v1694 = vshrl.u32 %v1693, 7
          %v1695 = vsub.s32 %v1692, %v1694
          %v1696 = vrot.slane %v1684, %v1695
          %v1697 = vcombine.high %v1696, %v1696
          %v1699 = vunpack.c.l.s4 1966171168
          %v1700 = vunpack.c.0.s8 %v1699
          %v1701 = vlaneseq
          %v1702 = vshrl.u32 %v1701, 7
          %v1703 = vsub.s32 %v1700, %v1702
          %v1704 = vrot.slane %v1696, %v1703
          %v1706 = vunpack.c.l.s4 1966171168
          %v1707 = vunpack.c.0.s8 %v1706
          %v1708 = vlaneseq
          %v1709 = vshrl.u32 %v1708, 7
          %v1710 = vsub.s32 %v1707, %v1709
          %v1711 = vrot.slane %v1697, %v1710
          %v1712 = vlaneseq
          %v1713 = vshrl.u32 %v1712, 7
          %v1714 = vsub.s32 0, %v1713
          %v1715 = vrot.slane %v1704, %v1714
          %v1716 = vlaneseq
          %v1717 = vshrl.u32 %v1716, 7
          %v1718 = vsub.s32 0, %v1717
          %v1719 = vrot.slane %v1711, %v1718
          %s1722 = scalar_lea.vmem [#allocation3], 16
          %1723 = vst [vmem:[%s1722] sm:$0xff] %v1715
          %1724 = vst [vmem:[%s1722 + $0x8] sm:$0xff] %v1719
        $region192: #{multi_attention_net.1} parent=123 // pred_fallthru
          _
        %v1725 = vld [vmem:[#allocation2] sm:$0xff]
        %v1726 = vld [vmem:[#allocation2 + $0x8] sm:$0xff]
        %s1727 = smul.u32 %s57, 16
        %s1728 = scalar_lea.vmem [#allocation3], %s1727
        %v1729 = vld [vmem:[%s1728] sm:$0xff]
        %v1730 = vld [vmem:[%s1728 + $0x8] sm:$0xff]
        %v1731 = vadd.f32 %v1725, %v1729
        %v1732 = vadd.f32 %v1726, %v1730
        %v1733 = vld [vmem:[%s1036] sm:$0x1]
        %v1734 = vld [vmem:[%s1044] sm:$0x1]
        %1735 = vadd.xlane.f32.xlu0 %v1731
        %v1736 = vpop.xlane.xlu0 %1735
        %1737 = vadd.xlane.f32.xlu0 %v1732
        %v1738 = vpop.xlane.xlu0 %1737
        %v1739 = vrcp.pop 128.0
        %v1740 = vmul.f32 %v1736, %v1739
        %v1741 = vmul.f32 %v1738, %v1739
        %v1742 = vsub.f32 %v1731, %v1740
        %v1743 = vsub.f32 %v1732, %v1741
        %v1744 = vmul.f32 %v1742, %v1742
        %v1745 = vmul.f32 %v1743, %v1743
        %1746 = vadd.xlane.f32.xlu0 %v1744
        %v1747 = vpop.xlane.xlu0 %1746
        %1748 = vadd.xlane.f32.xlu0 %v1745
        %v1749 = vpop.xlane.xlu0 %1748
        %v1750 = vmul.f32 %v1747, %v1739
        %v1751 = vmul.f32 %v1749, %v1739
        %v1752 = vadd.f32 %v1750, 1e-05
        %v1753 = vadd.f32 %v1751, 1e-05
        %v1754 = vrsqrt.pop %v1752
        %v1755 = vrsqrt.pop %v1753
        %v1756 = vmul.f32 %v1742, %v1754
        %v1757 = vmul.f32 %v1743, %v1755
        %v1759 = vlaneseq
        %v1760 = vshrl.u32 %v1759, 7
        %v1761 = vsub.s32 0, %v1760
        %v1762 = vrot.slane %v1733, %v1761
        %v1764 = vmul.f32 %v1756, %v1762
        %v1765 = vmul.f32 %v1757, %v1762
        %v1767 = vlaneseq
        %v1768 = vshrl.u32 %v1767, 7
        %v1769 = vsub.s32 0, %v1768
        %v1770 = vrot.slane %v1734, %v1769
        %v1772 = vadd.f32 %v1764, %v1770
        %v1773 = vadd.f32 %v1765, %v1770
        %v1774 = vpack.c.bf16 %v1773, %v1772
        %v1775 = vld [vmem:[%s2] sm:$0xff]
        %v1776 = vld [vmem:[%s2 + $0x8] sm:$0xff]
        %v1777 = vpack.c.bf16 %v1776, %v1775
        %v1778 = vld [vmem:[%s1238] sm:$0xf]
        %v1779 = vld [vmem:[%s1238 + $0x4] sm:$0xf]
        %v1780 = vld [vmem:[%s1238 + $0x8] sm:$0xf]
        %v1781 = vld [vmem:[%s1238 + $0xc] sm:$0xf]
        %v1782 = vld [vmem:[%s1238 + $0x10] sm:$0xf]
        %v1783 = vld [vmem:[%s1238 + $0x14] sm:$0xf]
        %v1784 = vld [vmem:[%s1238 + $0x18] sm:$0xf]
        %v1785 = vld [vmem:[%s1238 + $0x1c] sm:$0xf]
        %v1786 = vld [vmem:[%s1238 + $0x20] sm:$0xf]
        %v1787 = vld [vmem:[%s1238 + $0x24] sm:$0xf]
        %v1788 = vld [vmem:[%s1238 + $0x28] sm:$0xf]
        %v1789 = vld [vmem:[%s1238 + $0x2c] sm:$0xf]
        %v1790 = vld [vmem:[%s1238 + $0x30] sm:$0xf]
        %v1791 = vld [vmem:[%s1238 + $0x34] sm:$0xf]
        %v1792 = vld [vmem:[%s1238 + $0x38] sm:$0xf]
        %v1793 = vld [vmem:[%s1238 + $0x3c] sm:$0xf]
        %v1810 = vunpack.c.l.b16 %v1778
        %v1811 = vunpack.c.l.b16 %v1779
        %v1812 = vunpack.c.l.b16 %v1780
        %v1813 = vunpack.c.l.b16 %v1781
        %v1814 = vunpack.c.l.b16 %v1782
        %v1815 = vunpack.c.l.b16 %v1783
        %v1816 = vunpack.c.l.b16 %v1784
        %v1817 = vunpack.c.l.b16 %v1785
        %v1818 = vunpack.c.l.b16 %v1786
        %v1819 = vunpack.c.l.b16 %v1787
        %v1820 = vunpack.c.l.b16 %v1788
        %v1821 = vunpack.c.l.b16 %v1789
        %v1822 = vunpack.c.l.b16 %v1790
        %v1823 = vunpack.c.l.b16 %v1791
        %v1824 = vunpack.c.l.b16 %v1792
        %v1825 = vunpack.c.l.b16 %v1793
        %v1826 = vpack.c.b16 %v1811, %v1810
        %v1827 = vpack.c.b16 %v1813, %v1812
        %v1828 = vpack.c.b16 %v1815, %v1814
        %v1829 = vpack.c.b16 %v1817, %v1816
        %v1830 = vpack.c.b16 %v1819, %v1818
        %v1831 = vpack.c.b16 %v1821, %v1820
        %v1832 = vpack.c.b16 %v1823, %v1822
        %v1833 = vpack.c.b16 %v1825, %v1824
        %1842 = vmatprep.subr.bf16.mxu0 0
        %1843 = vmatpush1.bf16.msra.mxu0 %v1826
        %1844 = vmatprep.subr.bf16.mxu0 0
        %1845 = vmatpush1.bf16.msra.mxu0 %v1827
        %1846 = vmatprep.subr.bf16.mxu0 0
        %1847 = vmatpush1.bf16.msra.mxu0 %v1828
        %1848 = vmatprep.subr.bf16.mxu0 0
        %1849 = vmatpush1.bf16.msra.mxu0 %v1829
        %1850 = vmatprep.subr.bf16.mxu0 0
        %1851 = vmatpush1.bf16.msra.mxu0 %v1830
        %1852 = vmatprep.subr.bf16.mxu0 0
        %1853 = vmatpush1.bf16.msra.mxu0 %v1831
        %1854 = vmatprep.subr.bf16.mxu0 0
        %1855 = vmatpush1.bf16.msra.mxu0 %v1832
        %1856 = vmatprep.subr.bf16.mxu0 0
        %1857 = vmatpush1.bf16.msra.mxu0 %v1833
        %1858 = vmatprep.subr.bf16.mxu0 0
        %1859 = vmatpush1.bf16.msra.mxu0 0
        %1860 = vmatprep.subr.bf16.mxu0 0
        %1861 = vmatpush1.bf16.msra.mxu0 0
        %1862 = vmatprep.subr.bf16.mxu0 0
        %1863 = vmatpush1.bf16.msra.mxu0 0
        %1864 = vmatprep.subr.bf16.mxu0 0
        %1865 = vmatpush1.bf16.msra.mxu0 0
        %1866 = vmatprep.subr.bf16.mxu0 0
        %1867 = vmatpush1.bf16.msra.mxu0 0
        %1868 = vmatprep.subr.bf16.mxu0 0
        %1869 = vmatpush1.bf16.msra.mxu0 0
        %1870 = vmatprep.subr.bf16.mxu0 0
        %1871 = vmatpush1.bf16.msra.mxu0 0
        %1872 = vmatprep.subr.bf16.mxu0 0
        %1873 = vmatpush1.bf16.msra.mxu0 0
        %1874 = vmatprep.mubr.bf16.mxu0 0
        %1875 = vmatmul.mubr.bf16.gmra.mrb[0].mxu0 %v1774
        %v1876 = vpop.f32.mrb[0].mxu0
        %v1877 = vadd.f32 0.0, %v1876
        %v1878 = vpop.f32.mrb[0].mxu0
        %v1879 = vpop.f32.mrb[0].mxu0
        %v1880 = vadd.f32 0.0, %v1879
        %v1881 = vpop.f32.mrb[0].mxu0
        %1882 = vdwg.mxu0
        %v1883 = vld [vmem:[%s1243] sm:$0xf]
        %v1884 = vld [vmem:[%s1243 + $0x4] sm:$0xf]
        %v1885 = vld [vmem:[%s1243 + $0x8] sm:$0xf]
        %v1886 = vld [vmem:[%s1243 + $0xc] sm:$0xf]
        %v1891 = vunpack.c.l.b16 %v1883
        %v1892 = vunpack.c.l.b16 %v1884
        %v1893 = vunpack.c.l.b16 %v1885
        %v1894 = vunpack.c.l.b16 %v1886
        %v1895 = vpack.c.b16 %v1892, %v1891
        %v1896 = vpack.c.b16 %v1894, %v1893
        %vm1899 = vcmask 261120
        %v1901 = vsel %vm1899, %v1777, 0
        %1903 = vmatprep.subr.bf16.mxu0 0
        %1904 = vmatpush1.bf16.msra.mxu0 %v1895
        %1905 = vmatprep.subr.bf16.mxu0 0
        %1906 = vmatpush1.bf16.msra.mxu0 %v1896
        %1907 = vmatprep.subr.bf16.mxu0 0
        %1908 = vmatpush1.bf16.msra.mxu0 0
        %1909 = vmatprep.subr.bf16.mxu0 0
        %1910 = vmatpush1.bf16.msra.mxu0 0
        %1911 = vmatprep.subr.bf16.mxu0 0
        %1912 = vmatpush1.bf16.msra.mxu0 0
        %1913 = vmatprep.subr.bf16.mxu0 0
        %1914 = vmatpush1.bf16.msra.mxu0 0
        %1915 = vmatprep.subr.bf16.mxu0 0
        %1916 = vmatpush1.bf16.msra.mxu0 0
        %1917 = vmatprep.subr.bf16.mxu0 0
        %1918 = vmatpush1.bf16.msra.mxu0 0
        %1919 = vmatprep.subr.bf16.mxu0 0
        %1920 = vmatpush1.bf16.msra.mxu0 0
        %1921 = vmatprep.subr.bf16.mxu0 0
        %1922 = vmatpush1.bf16.msra.mxu0 0
        %1923 = vmatprep.subr.bf16.mxu0 0
        %1924 = vmatpush1.bf16.msra.mxu0 0
        %1925 = vmatprep.subr.bf16.mxu0 0
        %1926 = vmatpush1.bf16.msra.mxu0 0
        %1927 = vmatprep.subr.bf16.mxu0 0
        %1928 = vmatpush1.bf16.msra.mxu0 0
        %1929 = vmatprep.subr.bf16.mxu0 0
        %1930 = vmatpush1.bf16.msra.mxu0 0
        %1931 = vmatprep.subr.bf16.mxu0 0
        %1932 = vmatpush1.bf16.msra.mxu0 0
        %1933 = vmatprep.subr.bf16.mxu0 0
        %1934 = vmatpush1.bf16.msra.mxu0 0
        %1935 = vmatprep.mubr.bf16.mxu0 0
        %1936 = vmatmul.mubr.bf16.gmra.mrb[0].mxu0 %v1901
        %v1937 = vpop.f32.mrb[0].mxu0
        %v1938 = vadd.f32 0.0, %v1937
        %v1939 = vpop.f32.mrb[0].mxu0
        %v1940 = vpop.f32.mrb[0].mxu0
        %v1941 = vadd.f32 0.0, %v1940
        %v1942 = vpop.f32.mrb[0].mxu0
        %1943 = vdwg.mxu0
        %v1944 = vld [vmem:[%s1053] sm:$0xf]
        %v1945 = vld [vmem:[%s1053 + $0x4] sm:$0xf]
        %v1946 = vld [vmem:[%s1053 + $0x8] sm:$0xf]
        %v1947 = vld [vmem:[%s1053 + $0xc] sm:$0xf]
        %v1952 = vunpack.c.l.b16 %v1944
        %v1953 = vunpack.c.l.b16 %v1945
        %v1954 = vunpack.c.l.b16 %v1946
        %v1955 = vunpack.c.l.b16 %v1947
        %v1956 = vpack.c.b16 %v1953, %v1952
        %v1957 = vpack.c.b16 %v1955, %v1954
        %1960 = vmatprep.subr.bf16.mxu0 0
        %1961 = vmatpush1.bf16.msra.mxu0 %v1956
        %1962 = vmatprep.subr.bf16.mxu0 0
        %1963 = vmatpush1.bf16.msra.mxu0 %v1957
        %1964 = vmatprep.subr.bf16.mxu0 0
        %1965 = vmatpush1.bf16.msra.mxu0 0
        %1966 = vmatprep.subr.bf16.mxu0 0
        %1967 = vmatpush1.bf16.msra.mxu0 0
        %1968 = vmatprep.subr.bf16.mxu0 0
        %1969 = vmatpush1.bf16.msra.mxu0 0
        %1970 = vmatprep.subr.bf16.mxu0 0
        %1971 = vmatpush1.bf16.msra.mxu0 0
        %1972 = vmatprep.subr.bf16.mxu0 0
        %1973 = vmatpush1.bf16.msra.mxu0 0
        %1974 = vmatprep.subr.bf16.mxu0 0
        %1975 = vmatpush1.bf16.msra.mxu0 0
        %1976 = vmatprep.subr.bf16.mxu0 0
        %1977 = vmatpush1.bf16.msra.mxu0 0
        %1978 = vmatprep.subr.bf16.mxu0 0
        %1979 = vmatpush1.bf16.msra.mxu0 0
        %1980 = vmatprep.subr.bf16.mxu0 0
        %1981 = vmatpush1.bf16.msra.mxu0 0
        %1982 = vmatprep.subr.bf16.mxu0 0
        %1983 = vmatpush1.bf16.msra.mxu0 0
        %1984 = vmatprep.subr.bf16.mxu0 0
        %1985 = vmatpush1.bf16.msra.mxu0 0
        %1986 = vmatprep.subr.bf16.mxu0 0
        %1987 = vmatpush1.bf16.msra.mxu0 0
        %1988 = vmatprep.subr.bf16.mxu0 0
        %1989 = vmatpush1.bf16.msra.mxu0 0
        %1990 = vmatprep.subr.bf16.mxu0 0
        %1991 = vmatpush1.bf16.msra.mxu0 0
        %1992 = vmatprep.mubr.bf16.mxu0 0
        %1993 = vmatmul.mubr.bf16.gmra.mrb[0].mxu0 %v1901
        %v1994 = vpop.f32.mrb[0].mxu0
        %v1995 = vadd.f32 0.0, %v1994
        %v1996 = vpop.f32.mrb[0].mxu0
        %v1997 = vpop.f32.mrb[0].mxu0
        %v1998 = vadd.f32 0.0, %v1997
        %v1999 = vpop.f32.mrb[0].mxu0
        %2000 = vdwg.mxu0
        %vm2001 = vcmask 523264
        %v2003 = vsel %vm2001, %v1877, 0
        %v2006 = vsel %vm2001, %v1938, 0
        %2008 = vmatprep.subr.mxu0 0.0
        %2009 = vmatpush1.xpose.msra.mxu0 %v2006
        %2010 = vmatprep.subr.mxu0 0.0
        %2011 = vmatpush1.xpose.msra.mxu0 0.0
        %2012 = vmatprep.subr.mxu0 0.0
        %2013 = vmatpush1.xpose.msra.mxu0 0.0
        %2014 = vmatprep.subr.mxu0 0.0
        %2015 = vmatpush1.xpose.msra.mxu0 0.0
        %2016 = vmatprep.subr.mxu0 0.0
        %2017 = vmatpush1.xpose.msra.mxu0 0.0
        %2018 = vmatprep.subr.mxu0 0.0
        %2019 = vmatpush1.xpose.msra.mxu0 0.0
        %2020 = vmatprep.subr.mxu0 0.0
        %2021 = vmatpush1.xpose.msra.mxu0 0.0
        %2022 = vmatprep.subr.mxu0 0.0
        %2023 = vmatpush1.xpose.msra.mxu0 0.0
        %2024 = vmatprep.subr.mxu0 0.0
        %2025 = vmatpush1.xpose.msra.mxu0 0.0
        %2026 = vmatprep.subr.mxu0 0.0
        %2027 = vmatpush1.xpose.msra.mxu0 0.0
        %2028 = vmatprep.subr.mxu0 0.0
        %2029 = vmatpush1.xpose.msra.mxu0 0.0
        %2030 = vmatprep.subr.mxu0 0.0
        %2031 = vmatpush1.xpose.msra.mxu0 0.0
        %2032 = vmatprep.subr.mxu0 0.0
        %2033 = vmatpush1.xpose.msra.mxu0 0.0
        %2034 = vmatprep.subr.mxu0 0.0
        %2035 = vmatpush1.xpose.msra.mxu0 0.0
        %2036 = vmatprep.subr.mxu0 0.0
        %2037 = vmatpush1.xpose.msra.mxu0 0.0
        %2038 = vmatprep.subr.mxu0 0.0
        %2039 = vmatpush1.xpose.msra.mxu0 0.0
        %2040 = vmatprep.subr.mxu0 0.0
        %2041 = vmatpush1.xpose.msra.mxu0 0.0
        %2042 = vmatprep.subr.mxu0 0.0
        %2043 = vmatpush1.xpose.msra.mxu0 0.0
        %2044 = vmatprep.subr.mxu0 0.0
        %2045 = vmatpush1.xpose.msra.mxu0 0.0
        %2046 = vmatprep.subr.mxu0 0.0
        %2047 = vmatpush1.xpose.msra.mxu0 0.0
        %2048 = vmatprep.subr.mxu0 0.0
        %2049 = vmatpush1.xpose.msra.mxu0 0.0
        %2050 = vmatprep.subr.mxu0 0.0
        %2051 = vmatpush1.xpose.msra.mxu0 0.0
        %2052 = vmatprep.subr.mxu0 0.0
        %2053 = vmatpush1.xpose.msra.mxu0 0.0
        %2054 = vmatprep.subr.mxu0 0.0
        %2055 = vmatpush1.xpose.msra.mxu0 0.0
        %2056 = vmatprep.subr.mxu0 0.0
        %2057 = vmatpush1.xpose.msra.mxu0 0.0
        %2058 = vmatprep.subr.mxu0 0.0
        %2059 = vmatpush1.xpose.msra.mxu0 0.0
        %2060 = vmatprep.subr.mxu0 0.0
        %2061 = vmatpush1.xpose.msra.mxu0 0.0
        %2062 = vmatprep.subr.mxu0 0.0
        %2063 = vmatpush1.xpose.msra.mxu0 0.0
        %2064 = vmatprep.subr.mxu0 0.0
        %2065 = vmatpush1.xpose.msra.mxu0 0.0
        %2066 = vmatprep.subr.mxu0 0.0
        %2067 = vmatpush1.xpose.msra.mxu0 0.0
        %2068 = vmatprep.subr.mxu0 0.0
        %2069 = vmatpush1.xpose.msra.mxu0 0.0
        %2070 = vmatprep.subr.mxu0 0.0
        %2071 = vmatpush1.xpose.msra.mxu0 0.0
        %2072 = vmatprep.mubr.f32.mxu0 0.0
        %2073 = vmatmul.mubr.f32.gmra.mrb[0].mxu0 %v2003
        %v2074 = vpop.f32.mrb[0].mxu0
        %v2075 = vadd.f32 0.0, %v2074
        %v2076 = vpop.f32.mrb[0].mxu0
        %2077 = vdwg.mxu0
        %v2079 = vsel %vm2001, %v1880, 0
        %v2082 = vsel %vm2001, %v1941, 0
        %2084 = vmatprep.subr.mxu0 0.0
        %2085 = vmatpush1.xpose.msra.mxu0 %v2082
        %2086 = vmatprep.subr.mxu0 0.0
        %2087 = vmatpush1.xpose.msra.mxu0 0.0
        %2088 = vmatprep.subr.mxu0 0.0
        %2089 = vmatpush1.xpose.msra.mxu0 0.0
        %2090 = vmatprep.subr.mxu0 0.0
        %2091 = vmatpush1.xpose.msra.mxu0 0.0
        %2092 = vmatprep.subr.mxu0 0.0
        %2093 = vmatpush1.xpose.msra.mxu0 0.0
        %2094 = vmatprep.subr.mxu0 0.0
        %2095 = vmatpush1.xpose.msra.mxu0 0.0
        %2096 = vmatprep.subr.mxu0 0.0
        %2097 = vmatpush1.xpose.msra.mxu0 0.0
        %2098 = vmatprep.subr.mxu0 0.0
        %2099 = vmatpush1.xpose.msra.mxu0 0.0
        %2100 = vmatprep.subr.mxu0 0.0
        %2101 = vmatpush1.xpose.msra.mxu0 0.0
        %2102 = vmatprep.subr.mxu0 0.0
        %2103 = vmatpush1.xpose.msra.mxu0 0.0
        %2104 = vmatprep.subr.mxu0 0.0
        %2105 = vmatpush1.xpose.msra.mxu0 0.0
        %2106 = vmatprep.subr.mxu0 0.0
        %2107 = vmatpush1.xpose.msra.mxu0 0.0
        %2108 = vmatprep.subr.mxu0 0.0
        %2109 = vmatpush1.xpose.msra.mxu0 0.0
        %2110 = vmatprep.subr.mxu0 0.0
        %2111 = vmatpush1.xpose.msra.mxu0 0.0
        %2112 = vmatprep.subr.mxu0 0.0
        %2113 = vmatpush1.xpose.msra.mxu0 0.0
        %2114 = vmatprep.subr.mxu0 0.0
        %2115 = vmatpush1.xpose.msra.mxu0 0.0
        %2116 = vmatprep.subr.mxu0 0.0
        %2117 = vmatpush1.xpose.msra.mxu0 0.0
        %2118 = vmatprep.subr.mxu0 0.0
        %2119 = vmatpush1.xpose.msra.mxu0 0.0
        %2120 = vmatprep.subr.mxu0 0.0
        %2121 = vmatpush1.xpose.msra.mxu0 0.0
        %2122 = vmatprep.subr.mxu0 0.0
        %2123 = vmatpush1.xpose.msra.mxu0 0.0
        %2124 = vmatprep.subr.mxu0 0.0
        %2125 = vmatpush1.xpose.msra.mxu0 0.0
        %2126 = vmatprep.subr.mxu0 0.0
        %2127 = vmatpush1.xpose.msra.mxu0 0.0
        %2128 = vmatprep.subr.mxu0 0.0
        %2129 = vmatpush1.xpose.msra.mxu0 0.0
        %2130 = vmatprep.subr.mxu0 0.0
        %2131 = vmatpush1.xpose.msra.mxu0 0.0
        %2132 = vmatprep.subr.mxu0 0.0
        %2133 = vmatpush1.xpose.msra.mxu0 0.0
        %2134 = vmatprep.subr.mxu0 0.0
        %2135 = vmatpush1.xpose.msra.mxu0 0.0
        %2136 = vmatprep.subr.mxu0 0.0
        %2137 = vmatpush1.xpose.msra.mxu0 0.0
        %2138 = vmatprep.subr.mxu0 0.0
        %2139 = vmatpush1.xpose.msra.mxu0 0.0
        %2140 = vmatprep.subr.mxu0 0.0
        %2141 = vmatpush1.xpose.msra.mxu0 0.0
        %2142 = vmatprep.subr.mxu0 0.0
        %2143 = vmatpush1.xpose.msra.mxu0 0.0
        %2144 = vmatprep.subr.mxu0 0.0
        %2145 = vmatpush1.xpose.msra.mxu0 0.0
        %2146 = vmatprep.subr.mxu0 0.0
        %2147 = vmatpush1.xpose.msra.mxu0 0.0
        %2148 = vmatprep.mubr.f32.mxu0 0.0
        %2149 = vmatmul.mubr.f32.gmra.mrb[0].mxu0 %v2079
        %v2150 = vpop.f32.mrb[0].mxu0
        %v2151 = vadd.f32 0.0, %v2150
        %v2152 = vpop.f32.mrb[0].mxu0
        %2153 = vdwg.mxu0
        %vm2154 = vcmask 64512
        %v2155 = vsel %vm2154, %v2075, -inf
        %2156 = vmax.xlane.f32.xlu0 %v2155
        %v2157 = vpop.xlane.xlu0 %2156
        %v2158 = vsel %vm2154, %v2151, -inf
        %2159 = vmax.xlane.f32.xlu0 %v2158
        %v2160 = vpop.xlane.xlu0 %2159
        %v2161 = vsub.f32 %v2075, %v2157
        %v2162 = vsub.f32 %v2151, %v2160
        %v2163 = vmul.f32 %v2161, 1.442695
        %v2164 = vpow.pop %v2163
        %v2165 = vmul.f32 %v2162, 1.442695
        %v2166 = vpow.pop %v2165
        %v2167 = vsel %vm2154, %v2164, 0.0
        %2168 = vadd.xlane.f32.xlu0 %v2167
        %v2169 = vpop.xlane.xlu0 %2168
        %v2170 = vsel %vm2154, %v2166, 0.0
        %2171 = vadd.xlane.f32.xlu0 %v2170
        %v2172 = vpop.xlane.xlu0 %2171
        %v2173 = vrcp.pop %v2169
        %v2174 = vmul.f32 %v2164, %v2173
        %v2175 = vrcp.pop %v2172
        %v2176 = vmul.f32 %v2166, %v2175
        %v2178 = vsel %vm2154, %v2174, 0
        %2180 = vmatprep.subr.mxu0 0.0
        %2181 = vmatpush1.msra.mxu0 %v1995
        %2182 = vmatprep.subr.mxu0 0.0
        %2183 = vmatpush1.msra.mxu0 0.0
        %2184 = vmatprep.subr.mxu0 0.0
        %2185 = vmatpush1.msra.mxu0 0.0
        %2186 = vmatprep.subr.mxu0 0.0
        %2187 = vmatpush1.msra.mxu0 0.0
        %2188 = vmatprep.subr.mxu0 0.0
        %2189 = vmatpush1.msra.mxu0 0.0
        %2190 = vmatprep.subr.mxu0 0.0
        %2191 = vmatpush1.msra.mxu0 0.0
        %2192 = vmatprep.subr.mxu0 0.0
        %2193 = vmatpush1.msra.mxu0 0.0
        %2194 = vmatprep.subr.mxu0 0.0
        %2195 = vmatpush1.msra.mxu0 0.0
        %2196 = vmatprep.subr.mxu0 0.0
        %2197 = vmatpush1.msra.mxu0 0.0
        %2198 = vmatprep.subr.mxu0 0.0
        %2199 = vmatpush1.msra.mxu0 0.0
        %2200 = vmatprep.subr.mxu0 0.0
        %2201 = vmatpush1.msra.mxu0 0.0
        %2202 = vmatprep.subr.mxu0 0.0
        %2203 = vmatpush1.msra.mxu0 0.0
        %2204 = vmatprep.subr.mxu0 0.0
        %2205 = vmatpush1.msra.mxu0 0.0
        %2206 = vmatprep.subr.mxu0 0.0
        %2207 = vmatpush1.msra.mxu0 0.0
        %2208 = vmatprep.subr.mxu0 0.0
        %2209 = vmatpush1.msra.mxu0 0.0
        %2210 = vmatprep.subr.mxu0 0.0
        %2211 = vmatpush1.msra.mxu0 0.0
        %2212 = vmatprep.subr.mxu0 0.0
        %2213 = vmatpush1.msra.mxu0 0.0
        %2214 = vmatprep.subr.mxu0 0.0
        %2215 = vmatpush1.msra.mxu0 0.0
        %2216 = vmatprep.subr.mxu0 0.0
        %2217 = vmatpush1.msra.mxu0 0.0
        %2218 = vmatprep.subr.mxu0 0.0
        %2219 = vmatpush1.msra.mxu0 0.0
        %2220 = vmatprep.subr.mxu0 0.0
        %2221 = vmatpush1.msra.mxu0 0.0
        %2222 = vmatprep.subr.mxu0 0.0
        %2223 = vmatpush1.msra.mxu0 0.0
        %2224 = vmatprep.subr.mxu0 0.0
        %2225 = vmatpush1.msra.mxu0 0.0
        %2226 = vmatprep.subr.mxu0 0.0
        %2227 = vmatpush1.msra.mxu0 0.0
        %2228 = vmatprep.subr.mxu0 0.0
        %2229 = vmatpush1.msra.mxu0 0.0
        %2230 = vmatprep.subr.mxu0 0.0
        %2231 = vmatpush1.msra.mxu0 0.0
        %2232 = vmatprep.subr.mxu0 0.0
        %2233 = vmatpush1.msra.mxu0 0.0
        %2234 = vmatprep.subr.mxu0 0.0
        %2235 = vmatpush1.msra.mxu0 0.0
        %2236 = vmatprep.subr.mxu0 0.0
        %2237 = vmatpush1.msra.mxu0 0.0
        %2238 = vmatprep.subr.mxu0 0.0
        %2239 = vmatpush1.msra.mxu0 0.0
        %2240 = vmatprep.subr.mxu0 0.0
        %2241 = vmatpush1.msra.mxu0 0.0
        %2242 = vmatprep.subr.mxu0 0.0
        %2243 = vmatpush1.msra.mxu0 0.0
        %2244 = vmatprep.mubr.f32.mxu0 0.0
        %2245 = vmatmul.mubr.f32.gmra.mrb[0].mxu0 %v2178
        %v2246 = vpop.f32.mrb[0].mxu0
        %v2247 = vadd.f32 0.0, %v2246
        %v2248 = vpop.f32.mrb[0].mxu0
        %2249 = vdwg.mxu0
        %v2251 = vsel %vm2154, %v2176, 0
        %2253 = vmatprep.subr.mxu0 0.0
        %2254 = vmatpush1.msra.mxu0 %v1998
        %2255 = vmatprep.subr.mxu0 0.0
        %2256 = vmatpush1.msra.mxu0 0.0
        %2257 = vmatprep.subr.mxu0 0.0
        %2258 = vmatpush1.msra.mxu0 0.0
        %2259 = vmatprep.subr.mxu0 0.0
        %2260 = vmatpush1.msra.mxu0 0.0
        %2261 = vmatprep.subr.mxu0 0.0
        %2262 = vmatpush1.msra.mxu0 0.0
        %2263 = vmatprep.subr.mxu0 0.0
        %2264 = vmatpush1.msra.mxu0 0.0
        %2265 = vmatprep.subr.mxu0 0.0
        %2266 = vmatpush1.msra.mxu0 0.0
        %2267 = vmatprep.subr.mxu0 0.0
        %2268 = vmatpush1.msra.mxu0 0.0
        %2269 = vmatprep.subr.mxu0 0.0
        %2270 = vmatpush1.msra.mxu0 0.0
        %2271 = vmatprep.subr.mxu0 0.0
        %2272 = vmatpush1.msra.mxu0 0.0
        %2273 = vmatprep.subr.mxu0 0.0
        %2274 = vmatpush1.msra.mxu0 0.0
        %2275 = vmatprep.subr.mxu0 0.0
        %2276 = vmatpush1.msra.mxu0 0.0
        %2277 = vmatprep.subr.mxu0 0.0
        %2278 = vmatpush1.msra.mxu0 0.0
        %2279 = vmatprep.subr.mxu0 0.0
        %2280 = vmatpush1.msra.mxu0 0.0
        %2281 = vmatprep.subr.mxu0 0.0
        %2282 = vmatpush1.msra.mxu0 0.0
        %2283 = vmatprep.subr.mxu0 0.0
        %2284 = vmatpush1.msra.mxu0 0.0
        %2285 = vmatprep.subr.mxu0 0.0
        %2286 = vmatpush1.msra.mxu0 0.0
        %2287 = vmatprep.subr.mxu0 0.0
        %2288 = vmatpush1.msra.mxu0 0.0
        %2289 = vmatprep.subr.mxu0 0.0
        %2290 = vmatpush1.msra.mxu0 0.0
        %2291 = vmatprep.subr.mxu0 0.0
        %2292 = vmatpush1.msra.mxu0 0.0
        %2293 = vmatprep.subr.mxu0 0.0
        %2294 = vmatpush1.msra.mxu0 0.0
        %2295 = vmatprep.subr.mxu0 0.0
        %2296 = vmatpush1.msra.mxu0 0.0
        %2297 = vmatprep.subr.mxu0 0.0
        %2298 = vmatpush1.msra.mxu0 0.0
        %2299 = vmatprep.subr.mxu0 0.0
        %2300 = vmatpush1.msra.mxu0 0.0
        %2301 = vmatprep.subr.mxu0 0.0
        %2302 = vmatpush1.msra.mxu0 0.0
        %2303 = vmatprep.subr.mxu0 0.0
        %2304 = vmatpush1.msra.mxu0 0.0
        %2305 = vmatprep.subr.mxu0 0.0
        %2306 = vmatpush1.msra.mxu0 0.0
        %2307 = vmatprep.subr.mxu0 0.0
        %2308 = vmatpush1.msra.mxu0 0.0
        %2309 = vmatprep.subr.mxu0 0.0
        %2310 = vmatpush1.msra.mxu0 0.0
        %2311 = vmatprep.subr.mxu0 0.0
        %2312 = vmatpush1.msra.mxu0 0.0
        %2313 = vmatprep.subr.mxu0 0.0
        %2314 = vmatpush1.msra.mxu0 0.0
        %2315 = vmatprep.subr.mxu0 0.0
        %2316 = vmatpush1.msra.mxu0 0.0
        %2317 = vmatprep.mubr.f32.mxu0 0.0
        %2318 = vmatmul.mubr.f32.gmra.mrb[0].mxu0 %v2251
        %v2319 = vpop.f32.mrb[0].mxu0
        %v2320 = vadd.f32 0.0, %v2319
        %v2321 = vpop.f32.mrb[0].mxu0
        %2322 = vdwg.mxu0
        %v2323 = vpack.c.bf16 %v2320, %v2247
        %v2324 = vld [vmem:[%s1062] sm:$0xf]
        %v2325 = vld [vmem:[%s1062 + $0x4] sm:$0xf]
        %v2326 = vld [vmem:[%s1062 + $0x8] sm:$0xf]
        %v2327 = vld [vmem:[%s1062 + $0xc] sm:$0xf]
        %v2328 = vld [vmem:[%s1062 + $0x10] sm:$0xf]
        %v2329 = vld [vmem:[%s1062 + $0x14] sm:$0xf]
        %v2330 = vld [vmem:[%s1062 + $0x18] sm:$0xf]
        %v2331 = vld [vmem:[%s1062 + $0x1c] sm:$0xf]
        %s2332 = scalar_lea.vmem %s1238, 64
        %v2333 = vld [vmem:[%s2332] sm:$0xf]
        %v2334 = vld [vmem:[%s2332 + $0x4] sm:$0xf]
        %v2335 = vld [vmem:[%s2332 + $0x8] sm:$0xf]
        %v2336 = vld [vmem:[%s2332 + $0xc] sm:$0xf]
        %v2337 = vld [vmem:[%s2332 + $0x10] sm:$0xf]
        %v2338 = vld [vmem:[%s2332 + $0x14] sm:$0xf]
        %v2339 = vld [vmem:[%s2332 + $0x18] sm:$0xf]
        %v2340 = vld [vmem:[%s2332 + $0x1c] sm:$0xf]
        %v2341 = vld [vmem:[%s2332 + $0x20] sm:$0xf]
        %v2342 = vld [vmem:[%s2332 + $0x24] sm:$0xf]
        %v2343 = vld [vmem:[%s2332 + $0x28] sm:$0xf]
        %v2344 = vld [vmem:[%s2332 + $0x2c] sm:$0xf]
        %v2345 = vld [vmem:[%s2332 + $0x30] sm:$0xf]
        %v2346 = vld [vmem:[%s2332 + $0x34] sm:$0xf]
        %v2347 = vld [vmem:[%s2332 + $0x38] sm:$0xf]
        %v2348 = vld [vmem:[%s2332 + $0x3c] sm:$0xf]
        %v2365 = vunpack.c.l.b16 %v2333
        %v2366 = vunpack.c.l.b16 %v2334
        %v2367 = vunpack.c.l.b16 %v2335
        %v2368 = vunpack.c.l.b16 %v2336
        %v2369 = vunpack.c.l.b16 %v2337
        %v2370 = vunpack.c.l.b16 %v2338
        %v2371 = vunpack.c.l.b16 %v2339
        %v2372 = vunpack.c.l.b16 %v2340
        %v2373 = vunpack.c.l.b16 %v2341
        %v2374 = vunpack.c.l.b16 %v2342
        %v2375 = vunpack.c.l.b16 %v2343
        %v2376 = vunpack.c.l.b16 %v2344
        %v2377 = vunpack.c.l.b16 %v2345
        %v2378 = vunpack.c.l.b16 %v2346
        %v2379 = vunpack.c.l.b16 %v2347
        %v2380 = vunpack.c.l.b16 %v2348
        %v2381 = vpack.c.b16 %v2366, %v2365
        %v2382 = vpack.c.b16 %v2368, %v2367
        %v2383 = vpack.c.b16 %v2370, %v2369
        %v2384 = vpack.c.b16 %v2372, %v2371
        %v2385 = vpack.c.b16 %v2374, %v2373
        %v2386 = vpack.c.b16 %v2376, %v2375
        %v2387 = vpack.c.b16 %v2378, %v2377
        %v2388 = vpack.c.b16 %v2380, %v2379
        %2397 = vmatprep.subr.bf16.mxu0 0
        %2398 = vmatpush1.bf16.msra.mxu0 %v2381
        %2399 = vmatprep.subr.bf16.mxu0 0
        %2400 = vmatpush1.bf16.msra.mxu0 %v2382
        %2401 = vmatprep.subr.bf16.mxu0 0
        %2402 = vmatpush1.bf16.msra.mxu0 %v2383
        %2403 = vmatprep.subr.bf16.mxu0 0
        %2404 = vmatpush1.bf16.msra.mxu0 %v2384
        %2405 = vmatprep.subr.bf16.mxu0 0
        %2406 = vmatpush1.bf16.msra.mxu0 %v2385
        %2407 = vmatprep.subr.bf16.mxu0 0
        %2408 = vmatpush1.bf16.msra.mxu0 %v2386
        %2409 = vmatprep.subr.bf16.mxu0 0
        %2410 = vmatpush1.bf16.msra.mxu0 %v2387
        %2411 = vmatprep.subr.bf16.mxu0 0
        %2412 = vmatpush1.bf16.msra.mxu0 %v2388
        %2413 = vmatprep.subr.bf16.mxu0 0
        %2414 = vmatpush1.bf16.msra.mxu0 0
        %2415 = vmatprep.subr.bf16.mxu0 0
        %2416 = vmatpush1.bf16.msra.mxu0 0
        %2417 = vmatprep.subr.bf16.mxu0 0
        %2418 = vmatpush1.bf16.msra.mxu0 0
        %2419 = vmatprep.subr.bf16.mxu0 0
        %2420 = vmatpush1.bf16.msra.mxu0 0
        %2421 = vmatprep.subr.bf16.mxu0 0
        %2422 = vmatpush1.bf16.msra.mxu0 0
        %2423 = vmatprep.subr.bf16.mxu0 0
        %2424 = vmatpush1.bf16.msra.mxu0 0
        %2425 = vmatprep.subr.bf16.mxu0 0
        %2426 = vmatpush1.bf16.msra.mxu0 0
        %2427 = vmatprep.subr.bf16.mxu0 0
        %2428 = vmatpush1.bf16.msra.mxu0 0
        %2429 = vmatprep.mubr.bf16.mxu0 0
        %2430 = vmatmul.mubr.bf16.gmra.mrb[0].mxu0 %v1774
        %v2431 = vpop.f32.mrb[0].mxu0
        %v2432 = vadd.f32 0.0, %v2431
        %v2433 = vpop.f32.mrb[0].mxu0
        %v2434 = vpop.f32.mrb[0].mxu0
        %v2435 = vadd.f32 0.0, %v2434
        %v2436 = vpop.f32.mrb[0].mxu0
        %2437 = vdwg.mxu0
        %s2438 = scalar_lea.vmem %s1243, 16
        %v2439 = vld [vmem:[%s2438] sm:$0xf]
        %v2440 = vld [vmem:[%s2438 + $0x4] sm:$0xf]
        %v2441 = vld [vmem:[%s2438 + $0x8] sm:$0xf]
        %v2442 = vld [vmem:[%s2438 + $0xc] sm:$0xf]
        %v2447 = vunpack.c.l.b16 %v2439
        %v2448 = vunpack.c.l.b16 %v2440
        %v2449 = vunpack.c.l.b16 %v2441
        %v2450 = vunpack.c.l.b16 %v2442
        %v2451 = vpack.c.b16 %v2448, %v2447
        %v2452 = vpack.c.b16 %v2450, %v2449
        %2455 = vmatprep.subr.bf16.mxu0 0
        %2456 = vmatpush1.bf16.msra.mxu0 %v2451
        %2457 = vmatprep.subr.bf16.mxu0 0
        %2458 = vmatpush1.bf16.msra.mxu0 %v2452
        %2459 = vmatprep.subr.bf16.mxu0 0
        %2460 = vmatpush1.bf16.msra.mxu0 0
        %2461 = vmatprep.subr.bf16.mxu0 0
        %2462 = vmatpush1.bf16.msra.mxu0 0
        %2463 = vmatprep.subr.bf16.mxu0 0
        %2464 = vmatpush1.bf16.msra.mxu0 0
        %2465 = vmatprep.subr.bf16.mxu0 0
        %2466 = vmatpush1.bf16.msra.mxu0 0
        %2467 = vmatprep.subr.bf16.mxu0 0
        %2468 = vmatpush1.bf16.msra.mxu0 0
        %2469 = vmatprep.subr.bf16.mxu0 0
        %2470 = vmatpush1.bf16.msra.mxu0 0
        %2471 = vmatprep.subr.bf16.mxu0 0
        %2472 = vmatpush1.bf16.msra.mxu0 0
        %2473 = vmatprep.subr.bf16.mxu0 0
        %2474 = vmatpush1.bf16.msra.mxu0 0
        %2475 = vmatprep.subr.bf16.mxu0 0
        %2476 = vmatpush1.bf16.msra.mxu0 0
        %2477 = vmatprep.subr.bf16.mxu0 0
        %2478 = vmatpush1.bf16.msra.mxu0 0
        %2479 = vmatprep.subr.bf16.mxu0 0
        %2480 = vmatpush1.bf16.msra.mxu0 0
        %2481 = vmatprep.subr.bf16.mxu0 0
        %2482 = vmatpush1.bf16.msra.mxu0 0
        %2483 = vmatprep.subr.bf16.mxu0 0
        %2484 = vmatpush1.bf16.msra.mxu0 0
        %2485 = vmatprep.subr.bf16.mxu0 0
        %2486 = vmatpush1.bf16.msra.mxu0 0
        %2487 = vmatprep.mubr.bf16.mxu0 0
        %2488 = vmatmul.mubr.bf16.gmra.mrb[0].mxu0 %v1901
        %v2489 = vpop.f32.mrb[0].mxu0
        %v2490 = vadd.f32 0.0, %v2489
        %v2491 = vpop.f32.mrb[0].mxu0
        %v2492 = vpop.f32.mrb[0].mxu0
        %v2493 = vadd.f32 0.0, %v2492
        %v2494 = vpop.f32.mrb[0].mxu0
        %2495 = vdwg.mxu0
        %s2496 = scalar_lea.vmem %s1053, 16 [#allocation16]
        %v2497 = vld [vmem:[%s2496] sm:$0xf]
        %v2498 = vld [vmem:[%s2496 + $0x4] sm:$0xf]
        %v2499 = vld [vmem:[%s2496 + $0x8] sm:$0xf]
        %v2500 = vld [vmem:[%s2496 + $0xc] sm:$0xf]
        %v2505 = vunpack.c.l.b16 %v2497
        %v2506 = vunpack.c.l.b16 %v2498
        %v2507 = vunpack.c.l.b16 %v2499
        %v2508 = vunpack.c.l.b16 %v2500
        %v2509 = vpack.c.b16 %v2506, %v2505
        %v2510 = vpack.c.b16 %v2508, %v2507
        %2513 = vmatprep.subr.bf16.mxu0 0
        %2514 = vmatpush1.bf16.msra.mxu0 %v2509
        %2515 = vmatprep.subr.bf16.mxu0 0
        %2516 = vmatpush1.bf16.msra.mxu0 %v2510
        %2517 = vmatprep.subr.bf16.mxu0 0
        %2518 = vmatpush1.bf16.msra.mxu0 0
        %2519 = vmatprep.subr.bf16.mxu0 0
        %2520 = vmatpush1.bf16.msra.mxu0 0
        %2521 = vmatprep.subr.bf16.mxu0 0
        %2522 = vmatpush1.bf16.msra.mxu0 0
        %2523 = vmatprep.subr.bf16.mxu0 0
        %2524 = vmatpush1.bf16.msra.mxu0 0
        %2525 = vmatprep.subr.bf16.mxu0 0
        %2526 = vmatpush1.bf16.msra.mxu0 0
        %2527 = vmatprep.subr.bf16.mxu0 0
        %2528 = vmatpush1.bf16.msra.mxu0 0
        %2529 = vmatprep.subr.bf16.mxu0 0
        %2530 = vmatpush1.bf16.msra.mxu0 0
        %2531 = vmatprep.subr.bf16.mxu0 0
        %2532 = vmatpush1.bf16.msra.mxu0 0
        %2533 = vmatprep.subr.bf16.mxu0 0
        %2534 = vmatpush1.bf16.msra.mxu0 0
        %2535 = vmatprep.subr.bf16.mxu0 0
        %2536 = vmatpush1.bf16.msra.mxu0 0
        %2537 = vmatprep.subr.bf16.mxu0 0
        %2538 = vmatpush1.bf16.msra.mxu0 0
        %2539 = vmatprep.subr.bf16.mxu0 0
        %2540 = vmatpush1.bf16.msra.mxu0 0
        %2541 = vmatprep.subr.bf16.mxu0 0
        %2542 = vmatpush1.bf16.msra.mxu0 0
        %2543 = vmatprep.subr.bf16.mxu0 0
        %2544 = vmatpush1.bf16.msra.mxu0 0
        %2545 = vmatprep.mubr.bf16.mxu0 0
        %2546 = vmatmul.mubr.bf16.gmra.mrb[0].mxu0 %v1901
        %v2547 = vpop.f32.mrb[0].mxu0
        %v2548 = vadd.f32 0.0, %v2547
        %v2549 = vpop.f32.mrb[0].mxu0
        %v2550 = vpop.f32.mrb[0].mxu0
        %v2551 = vadd.f32 0.0, %v2550
        %v2552 = vpop.f32.mrb[0].mxu0
        %2553 = vdwg.mxu0
        %v2555 = vsel %vm2001, %v2432, 0
        %v2558 = vsel %vm2001, %v2490, 0
        %2560 = vmatprep.subr.mxu0 0.0
        %2561 = vmatpush1.xpose.msra.mxu0 %v2558
        %2562 = vmatprep.subr.mxu0 0.0
        %2563 = vmatpush1.xpose.msra.mxu0 0.0
        %2564 = vmatprep.subr.mxu0 0.0
        %2565 = vmatpush1.xpose.msra.mxu0 0.0
        %2566 = vmatprep.subr.mxu0 0.0
        %2567 = vmatpush1.xpose.msra.mxu0 0.0
        %2568 = vmatprep.subr.mxu0 0.0
        %2569 = vmatpush1.xpose.msra.mxu0 0.0
        %2570 = vmatprep.subr.mxu0 0.0
        %2571 = vmatpush1.xpose.msra.mxu0 0.0
        %2572 = vmatprep.subr.mxu0 0.0
        %2573 = vmatpush1.xpose.msra.mxu0 0.0
        %2574 = vmatprep.subr.mxu0 0.0
        %2575 = vmatpush1.xpose.msra.mxu0 0.0
        %2576 = vmatprep.subr.mxu0 0.0
        %2577 = vmatpush1.xpose.msra.mxu0 0.0
        %2578 = vmatprep.subr.mxu0 0.0
        %2579 = vmatpush1.xpose.msra.mxu0 0.0
        %2580 = vmatprep.subr.mxu0 0.0
        %2581 = vmatpush1.xpose.msra.mxu0 0.0
        %2582 = vmatprep.subr.mxu0 0.0
        %2583 = vmatpush1.xpose.msra.mxu0 0.0
        %2584 = vmatprep.subr.mxu0 0.0
        %2585 = vmatpush1.xpose.msra.mxu0 0.0
        %2586 = vmatprep.subr.mxu0 0.0
        %2587 = vmatpush1.xpose.msra.mxu0 0.0
        %2588 = vmatprep.subr.mxu0 0.0
        %2589 = vmatpush1.xpose.msra.mxu0 0.0
        %2590 = vmatprep.subr.mxu0 0.0
        %2591 = vmatpush1.xpose.msra.mxu0 0.0
        %2592 = vmatprep.subr.mxu0 0.0
        %2593 = vmatpush1.xpose.msra.mxu0 0.0
        %2594 = vmatprep.subr.mxu0 0.0
        %2595 = vmatpush1.xpose.msra.mxu0 0.0
        %2596 = vmatprep.subr.mxu0 0.0
        %2597 = vmatpush1.xpose.msra.mxu0 0.0
        %2598 = vmatprep.subr.mxu0 0.0
        %2599 = vmatpush1.xpose.msra.mxu0 0.0
        %2600 = vmatprep.subr.mxu0 0.0
        %2601 = vmatpush1.xpose.msra.mxu0 0.0
        %2602 = vmatprep.subr.mxu0 0.0
        %2603 = vmatpush1.xpose.msra.mxu0 0.0
        %2604 = vmatprep.subr.mxu0 0.0
        %2605 = vmatpush1.xpose.msra.mxu0 0.0
        %2606 = vmatprep.subr.mxu0 0.0
        %2607 = vmatpush1.xpose.msra.mxu0 0.0
        %2608 = vmatprep.subr.mxu0 0.0
        %2609 = vmatpush1.xpose.msra.mxu0 0.0
        %2610 = vmatprep.subr.mxu0 0.0
        %2611 = vmatpush1.xpose.msra.mxu0 0.0
        %2612 = vmatprep.subr.mxu0 0.0
        %2613 = vmatpush1.xpose.msra.mxu0 0.0
        %2614 = vmatprep.subr.mxu0 0.0
        %2615 = vmatpush1.xpose.msra.mxu0 0.0
        %2616 = vmatprep.subr.mxu0 0.0
        %2617 = vmatpush1.xpose.msra.mxu0 0.0
        %2618 = vmatprep.subr.mxu0 0.0
        %2619 = vmatpush1.xpose.msra.mxu0 0.0
        %2620 = vmatprep.subr.mxu0 0.0
        %2621 = vmatpush1.xpose.msra.mxu0 0.0
        %2622 = vmatprep.subr.mxu0 0.0
        %2623 = vmatpush1.xpose.msra.mxu0 0.0
        %2624 = vmatprep.mubr.f32.mxu0 0.0
        %2625 = vmatmul.mubr.f32.gmra.mrb[0].mxu0 %v2555
        %v2626 = vpop.f32.mrb[0].mxu0
        %v2627 = vadd.f32 0.0, %v2626
        %v2628 = vpop.f32.mrb[0].mxu0
        %2629 = vdwg.mxu0
        %v2631 = vsel %vm2001, %v2435, 0
        %v2634 = vsel %vm2001, %v2493, 0
        %2636 = vmatprep.subr.mxu0 0.0
        %2637 = vmatpush1.xpose.msra.mxu0 %v2634
        %2638 = vmatprep.subr.mxu0 0.0
        %2639 = vmatpush1.xpose.msra.mxu0 0.0
        %2640 = vmatprep.subr.mxu0 0.0
        %2641 = vmatpush1.xpose.msra.mxu0 0.0
        %2642 = vmatprep.subr.mxu0 0.0
        %2643 = vmatpush1.xpose.msra.mxu0 0.0
        %2644 = vmatprep.subr.mxu0 0.0
        %2645 = vmatpush1.xpose.msra.mxu0 0.0
        %2646 = vmatprep.subr.mxu0 0.0
        %2647 = vmatpush1.xpose.msra.mxu0 0.0
        %2648 = vmatprep.subr.mxu0 0.0
        %2649 = vmatpush1.xpose.msra.mxu0 0.0
        %2650 = vmatprep.subr.mxu0 0.0
        %2651 = vmatpush1.xpose.msra.mxu0 0.0
        %2652 = vmatprep.subr.mxu0 0.0
        %2653 = vmatpush1.xpose.msra.mxu0 0.0
        %2654 = vmatprep.subr.mxu0 0.0
        %2655 = vmatpush1.xpose.msra.mxu0 0.0
        %2656 = vmatprep.subr.mxu0 0.0
        %2657 = vmatpush1.xpose.msra.mxu0 0.0
        %2658 = vmatprep.subr.mxu0 0.0
        %2659 = vmatpush1.xpose.msra.mxu0 0.0
        %2660 = vmatprep.subr.mxu0 0.0
        %2661 = vmatpush1.xpose.msra.mxu0 0.0
        %2662 = vmatprep.subr.mxu0 0.0
        %2663 = vmatpush1.xpose.msra.mxu0 0.0
        %2664 = vmatprep.subr.mxu0 0.0
        %2665 = vmatpush1.xpose.msra.mxu0 0.0
        %2666 = vmatprep.subr.mxu0 0.0
        %2667 = vmatpush1.xpose.msra.mxu0 0.0
        %2668 = vmatprep.subr.mxu0 0.0
        %2669 = vmatpush1.xpose.msra.mxu0 0.0
        %2670 = vmatprep.subr.mxu0 0.0
        %2671 = vmatpush1.xpose.msra.mxu0 0.0
        %2672 = vmatprep.subr.mxu0 0.0
        %2673 = vmatpush1.xpose.msra.mxu0 0.0
        %2674 = vmatprep.subr.mxu0 0.0
        %2675 = vmatpush1.xpose.msra.mxu0 0.0
        %2676 = vmatprep.subr.mxu0 0.0
        %2677 = vmatpush1.xpose.msra.mxu0 0.0
        %2678 = vmatprep.subr.mxu0 0.0
        %2679 = vmatpush1.xpose.msra.mxu0 0.0
        %2680 = vmatprep.subr.mxu0 0.0
        %2681 = vmatpush1.xpose.msra.mxu0 0.0
        %2682 = vmatprep.subr.mxu0 0.0
        %2683 = vmatpush1.xpose.msra.mxu0 0.0
        %2684 = vmatprep.subr.mxu0 0.0
        %2685 = vmatpush1.xpose.msra.mxu0 0.0
        %2686 = vmatprep.subr.mxu0 0.0
        %2687 = vmatpush1.xpose.msra.mxu0 0.0
        %2688 = vmatprep.subr.mxu0 0.0
        %2689 = vmatpush1.xpose.msra.mxu0 0.0
        %2690 = vmatprep.subr.mxu0 0.0
        %2691 = vmatpush1.xpose.msra.mxu0 0.0
        %2692 = vmatprep.subr.mxu0 0.0
        %2693 = vmatpush1.xpose.msra.mxu0 0.0
        %2694 = vmatprep.subr.mxu0 0.0
        %2695 = vmatpush1.xpose.msra.mxu0 0.0
        %2696 = vmatprep.subr.mxu0 0.0
        %2697 = vmatpush1.xpose.msra.mxu0 0.0
        %2698 = vmatprep.subr.mxu0 0.0
        %2699 = vmatpush1.xpose.msra.mxu0 0.0
        %2700 = vmatprep.mubr.f32.mxu0 0.0
        %2701 = vmatmul.mubr.f32.gmra.mrb[0].mxu0 %v2631
        %v2702 = vpop.f32.mrb[0].mxu0
        %v2703 = vadd.f32 0.0, %v2702
        %v2704 = vpop.f32.mrb[0].mxu0
        %2705 = vdwg.mxu0
        %v2706 = vsel %vm2154, %v2627, -inf
        %2707 = vmax.xlane.f32.xlu0 %v2706
        %v2708 = vpop.xlane.xlu0 %2707
        %v2709 = vsel %vm2154, %v2703, -inf
        %2710 = vmax.xlane.f32.xlu0 %v2709
        %v2711 = vpop.xlane.xlu0 %2710
        %v2712 = vsub.f32 %v2627, %v2708
        %v2713 = vsub.f32 %v2703, %v2711
        %v2714 = vmul.f32 %v2712, 1.442695
        %v2715 = vpow.pop %v2714
        %v2716 = vmul.f32 %v2713, 1.442695
        %v2717 = vpow.pop %v2716
        %v2718 = vsel %vm2154, %v2715, 0.0
        %2719 = vadd.xlane.f32.xlu0 %v2718
        %v2720 = vpop.xlane.xlu0 %2719
        %v2721 = vsel %vm2154, %v2717, 0.0
        %2722 = vadd.xlane.f32.xlu0 %v2721
        %v2723 = vpop.xlane.xlu0 %2722
        %v2724 = vrcp.pop %v2720
        %v2725 = vmul.f32 %v2715, %v2724
        %v2726 = vrcp.pop %v2723
        %v2727 = vmul.f32 %v2717, %v2726
        %v2729 = vsel %vm2154, %v2725, 0
        %2731 = vmatprep.subr.mxu0 0.0
        %2732 = vmatpush1.msra.mxu0 %v2548
        %2733 = vmatprep.subr.mxu0 0.0
        %2734 = vmatpush1.msra.mxu0 0.0
        %2735 = vmatprep.subr.mxu0 0.0
        %2736 = vmatpush1.msra.mxu0 0.0
        %2737 = vmatprep.subr.mxu0 0.0
        %2738 = vmatpush1.msra.mxu0 0.0
        %2739 = vmatprep.subr.mxu0 0.0
        %2740 = vmatpush1.msra.mxu0 0.0
        %2741 = vmatprep.subr.mxu0 0.0
        %2742 = vmatpush1.msra.mxu0 0.0
        %2743 = vmatprep.subr.mxu0 0.0
        %2744 = vmatpush1.msra.mxu0 0.0
        %2745 = vmatprep.subr.mxu0 0.0
        %2746 = vmatpush1.msra.mxu0 0.0
        %2747 = vmatprep.subr.mxu0 0.0
        %2748 = vmatpush1.msra.mxu0 0.0
        %2749 = vmatprep.subr.mxu0 0.0
        %2750 = vmatpush1.msra.mxu0 0.0
        %2751 = vmatprep.subr.mxu0 0.0
        %2752 = vmatpush1.msra.mxu0 0.0
        %2753 = vmatprep.subr.mxu0 0.0
        %2754 = vmatpush1.msra.mxu0 0.0
        %2755 = vmatprep.subr.mxu0 0.0
        %2756 = vmatpush1.msra.mxu0 0.0
        %2757 = vmatprep.subr.mxu0 0.0
        %2758 = vmatpush1.msra.mxu0 0.0
        %2759 = vmatprep.subr.mxu0 0.0
        %2760 = vmatpush1.msra.mxu0 0.0
        %2761 = vmatprep.subr.mxu0 0.0
        %2762 = vmatpush1.msra.mxu0 0.0
        %2763 = vmatprep.subr.mxu0 0.0
        %2764 = vmatpush1.msra.mxu0 0.0
        %2765 = vmatprep.subr.mxu0 0.0
        %2766 = vmatpush1.msra.mxu0 0.0
        %2767 = vmatprep.subr.mxu0 0.0
        %2768 = vmatpush1.msra.mxu0 0.0
        %2769 = vmatprep.subr.mxu0 0.0
        %2770 = vmatpush1.msra.mxu0 0.0
        %2771 = vmatprep.subr.mxu0 0.0
        %2772 = vmatpush1.msra.mxu0 0.0
        %2773 = vmatprep.subr.mxu0 0.0
        %2774 = vmatpush1.msra.mxu0 0.0
        %2775 = vmatprep.subr.mxu0 0.0
        %2776 = vmatpush1.msra.mxu0 0.0
        %2777 = vmatprep.subr.mxu0 0.0
        %2778 = vmatpush1.msra.mxu0 0.0
        %2779 = vmatprep.subr.mxu0 0.0
        %2780 = vmatpush1.msra.mxu0 0.0
        %2781 = vmatprep.subr.mxu0 0.0
        %2782 = vmatpush1.msra.mxu0 0.0
        %2783 = vmatprep.subr.mxu0 0.0
        %2784 = vmatpush1.msra.mxu0 0.0
        %2785 = vmatprep.subr.mxu0 0.0
        %2786 = vmatpush1.msra.mxu0 0.0
        %2787 = vmatprep.subr.mxu0 0.0
        %2788 = vmatpush1.msra.mxu0 0.0
        %2789 = vmatprep.subr.mxu0 0.0
        %2790 = vmatpush1.msra.mxu0 0.0
        %2791 = vmatprep.subr.mxu0 0.0
        %2792 = vmatpush1.msra.mxu0 0.0
        %2793 = vmatprep.subr.mxu0 0.0
        %2794 = vmatpush1.msra.mxu0 0.0
        %2795 = vmatprep.mubr.f32.mxu0 0.0
        %2796 = vmatmul.mubr.f32.gmra.mrb[0].mxu0 %v2729
        %v2797 = vpop.f32.mrb[0].mxu0
        %v2798 = vadd.f32 0.0, %v2797
        %v2799 = vpop.f32.mrb[0].mxu0
        %2800 = vdwg.mxu0
        %v2802 = vsel %vm2154, %v2727, 0
        %2804 = vmatprep.subr.mxu0 0.0
        %2805 = vmatpush1.msra.mxu0 %v2551
        %2806 = vmatprep.subr.mxu0 0.0
        %2807 = vmatpush1.msra.mxu0 0.0
        %2808 = vmatprep.subr.mxu0 0.0
        %2809 = vmatpush1.msra.mxu0 0.0
        %2810 = vmatprep.subr.mxu0 0.0
        %2811 = vmatpush1.msra.mxu0 0.0
        %2812 = vmatprep.subr.mxu0 0.0
        %2813 = vmatpush1.msra.mxu0 0.0
        %2814 = vmatprep.subr.mxu0 0.0
        %2815 = vmatpush1.msra.mxu0 0.0
        %2816 = vmatprep.subr.mxu0 0.0
        %2817 = vmatpush1.msra.mxu0 0.0
        %2818 = vmatprep.subr.mxu0 0.0
        %2819 = vmatpush1.msra.mxu0 0.0
        %2820 = vmatprep.subr.mxu0 0.0
        %2821 = vmatpush1.msra.mxu0 0.0
        %2822 = vmatprep.subr.mxu0 0.0
        %2823 = vmatpush1.msra.mxu0 0.0
        %2824 = vmatprep.subr.mxu0 0.0
        %2825 = vmatpush1.msra.mxu0 0.0
        %2826 = vmatprep.subr.mxu0 0.0
        %2827 = vmatpush1.msra.mxu0 0.0
        %2828 = vmatprep.subr.mxu0 0.0
        %2829 = vmatpush1.msra.mxu0 0.0
        %2830 = vmatprep.subr.mxu0 0.0
        %2831 = vmatpush1.msra.mxu0 0.0
        %2832 = vmatprep.subr.mxu0 0.0
        %2833 = vmatpush1.msra.mxu0 0.0
        %2834 = vmatprep.subr.mxu0 0.0
        %2835 = vmatpush1.msra.mxu0 0.0
        %2836 = vmatprep.subr.mxu0 0.0
        %2837 = vmatpush1.msra.mxu0 0.0
        %2838 = vmatprep.subr.mxu0 0.0
        %2839 = vmatpush1.msra.mxu0 0.0
        %2840 = vmatprep.subr.mxu0 0.0
        %2841 = vmatpush1.msra.mxu0 0.0
        %2842 = vmatprep.subr.mxu0 0.0
        %2843 = vmatpush1.msra.mxu0 0.0
        %2844 = vmatprep.subr.mxu0 0.0
        %2845 = vmatpush1.msra.mxu0 0.0
        %2846 = vmatprep.subr.mxu0 0.0
        %2847 = vmatpush1.msra.mxu0 0.0
        %2848 = vmatprep.subr.mxu0 0.0
        %2849 = vmatpush1.msra.mxu0 0.0
        %2850 = vmatprep.subr.mxu0 0.0
        %2851 = vmatpush1.msra.mxu0 0.0
        %2852 = vmatprep.subr.mxu0 0.0
        %2853 = vmatpush1.msra.mxu0 0.0
        %2854 = vmatprep.subr.mxu0 0.0
        %2855 = vmatpush1.msra.mxu0 0.0
        %2856 = vmatprep.subr.mxu0 0.0
        %2857 = vmatpush1.msra.mxu0 0.0
        %2858 = vmatprep.subr.mxu0 0.0
        %2859 = vmatpush1.msra.mxu0 0.0
        %2860 = vmatprep.subr.mxu0 0.0
        %2861 = vmatpush1.msra.mxu0 0.0
        %2862 = vmatprep.subr.mxu0 0.0
        %2863 = vmatpush1.msra.mxu0 0.0
        %2864 = vmatprep.subr.mxu0 0.0
        %2865 = vmatpush1.msra.mxu0 0.0
        %2866 = vmatprep.subr.mxu0 0.0
        %2867 = vmatpush1.msra.mxu0 0.0
        %2868 = vmatprep.mubr.f32.mxu0 0.0
        %2869 = vmatmul.mubr.f32.gmra.mrb[0].mxu0 %v2802
        %v2870 = vpop.f32.mrb[0].mxu0
        %v2871 = vadd.f32 0.0, %v2870
        %v2872 = vpop.f32.mrb[0].mxu0
        %2873 = vdwg.mxu0
        %v2874 = vpack.c.bf16 %v2871, %v2798
        %s2875 = scalar_lea.vmem %s1062, 32 [#allocation18]
        %v2876 = vld [vmem:[%s2875] sm:$0xf]
        %v2877 = vld [vmem:[%s2875 + $0x4] sm:$0xf]
        %v2878 = vld [vmem:[%s2875 + $0x8] sm:$0xf]
        %v2879 = vld [vmem:[%s2875 + $0xc] sm:$0xf]
        %v2880 = vld [vmem:[%s2875 + $0x10] sm:$0xf]
        %v2881 = vld [vmem:[%s2875 + $0x14] sm:$0xf]
        %v2882 = vld [vmem:[%s2875 + $0x18] sm:$0xf]
        %v2883 = vld [vmem:[%s2875 + $0x1c] sm:$0xf]
        %v2892 = vunpack.c.l.b16 %v2876
        %v2893 = vunpack.c.l.b16 %v2877
        %v2894 = vunpack.c.l.b16 %v2878
        %v2895 = vunpack.c.l.b16 %v2879
        %v2896 = vunpack.c.l.b16 %v2880
        %v2897 = vunpack.c.l.b16 %v2881
        %v2898 = vunpack.c.l.b16 %v2882
        %v2899 = vunpack.c.l.b16 %v2883
        %v2900 = vpack.c.b16 %v2893, %v2892
        %v2901 = vpack.c.b16 %v2895, %v2894
        %v2902 = vpack.c.b16 %v2897, %v2896
        %v2903 = vpack.c.b16 %v2899, %v2898
        %v2909 = vsel %vm2001, %v2874, 0
        %2911 = vmatprep.subr.bf16.mxu0 0
        %2912 = vmatpush1.bf16.msra.mxu0 %v2900
        %2913 = vmatprep.subr.bf16.mxu0 0
        %2914 = vmatpush1.bf16.msra.mxu0 %v2901
        %2915 = vmatprep.subr.bf16.mxu0 0
        %2916 = vmatpush1.bf16.msra.mxu0 %v2902
        %2917 = vmatprep.subr.bf16.mxu0 0
        %2918 = vmatpush1.bf16.msra.mxu0 %v2903
        %2919 = vmatprep.subr.bf16.mxu0 0
        %2920 = vmatpush1.bf16.msra.mxu0 0
        %2921 = vmatprep.subr.bf16.mxu0 0
        %2922 = vmatpush1.bf16.msra.mxu0 0
        %2923 = vmatprep.subr.bf16.mxu0 0
        %2924 = vmatpush1.bf16.msra.mxu0 0
        %2925 = vmatprep.subr.bf16.mxu0 0
        %2926 = vmatpush1.bf16.msra.mxu0 0
        %2927 = vmatprep.subr.bf16.mxu0 0
        %2928 = vmatpush1.bf16.msra.mxu0 0
        %2929 = vmatprep.subr.bf16.mxu0 0
        %2930 = vmatpush1.bf16.msra.mxu0 0
        %2931 = vmatprep.subr.bf16.mxu0 0
        %2932 = vmatpush1.bf16.msra.mxu0 0
        %2933 = vmatprep.subr.bf16.mxu0 0
        %2934 = vmatpush1.bf16.msra.mxu0 0
        %2935 = vmatprep.subr.bf16.mxu0 0
        %2936 = vmatpush1.bf16.msra.mxu0 0
        %2937 = vmatprep.subr.bf16.mxu0 0
        %2938 = vmatpush1.bf16.msra.mxu0 0
        %2939 = vmatprep.subr.bf16.mxu0 0
        %2940 = vmatpush1.bf16.msra.mxu0 0
        %2941 = vmatprep.subr.bf16.mxu0 0
        %2942 = vmatpush1.bf16.msra.mxu0 0
        %2943 = vmatprep.mubr.bf16.mxu0 0
        %2944 = vmatmul.mubr.bf16.gmra.mrb[0].mxu0 %v2909
        %v2945 = vpop.f32.mrb[0].mxu0
        %v2946 = vadd.f32 0.0, %v2945
        %v2947 = vpop.f32.mrb[0].mxu0
        %v2948 = vpop.f32.mrb[0].mxu0
        %v2949 = vadd.f32 0.0, %v2948
        %v2950 = vpop.f32.mrb[0].mxu0
        %2951 = vdwg.mxu0
        %v2960 = vunpack.c.l.b16 %v2324
        %v2961 = vunpack.c.l.b16 %v2325
        %v2962 = vunpack.c.l.b16 %v2326
        %v2963 = vunpack.c.l.b16 %v2327
        %v2964 = vunpack.c.l.b16 %v2328
        %v2965 = vunpack.c.l.b16 %v2329
        %v2966 = vunpack.c.l.b16 %v2330
        %v2967 = vunpack.c.l.b16 %v2331
        %v2968 = vpack.c.b16 %v2961, %v2960
        %v2969 = vpack.c.b16 %v2963, %v2962
        %v2970 = vpack.c.b16 %v2965, %v2964
        %v2971 = vpack.c.b16 %v2967, %v2966
        %v2977 = vsel %vm2001, %v2323, 0
        %2979 = vmatprep.subr.bf16.mxu0 0
        %2980 = vmatpush1.bf16.msra.mxu0 %v2968
        %2981 = vmatprep.subr.bf16.mxu0 0
        %2982 = vmatpush1.bf16.msra.mxu0 %v2969
        %2983 = vmatprep.subr.bf16.mxu0 0
        %2984 = vmatpush1.bf16.msra.mxu0 %v2970
        %2985 = vmatprep.subr.bf16.mxu0 0
        %2986 = vmatpush1.bf16.msra.mxu0 %v2971
        %2987 = vmatprep.subr.bf16.mxu0 0
        %2988 = vmatpush1.bf16.msra.mxu0 0
        %2989 = vmatprep.subr.bf16.mxu0 0
        %2990 = vmatpush1.bf16.msra.mxu0 0
        %2991 = vmatprep.subr.bf16.mxu0 0
        %2992 = vmatpush1.bf16.msra.mxu0 0
        %2993 = vmatprep.subr.bf16.mxu0 0
        %2994 = vmatpush1.bf16.msra.mxu0 0
        %2995 = vmatprep.subr.bf16.mxu0 0
        %2996 = vmatpush1.bf16.msra.mxu0 0
        %2997 = vmatprep.subr.bf16.mxu0 0
        %2998 = vmatpush1.bf16.msra.mxu0 0
        %2999 = vmatprep.subr.bf16.mxu0 0
        %3000 = vmatpush1.bf16.msra.mxu0 0
        %3001 = vmatprep.subr.bf16.mxu0 0
        %3002 = vmatpush1.bf16.msra.mxu0 0
        %3003 = vmatprep.subr.bf16.mxu0 0
        %3004 = vmatpush1.bf16.msra.mxu0 0
        %3005 = vmatprep.subr.bf16.mxu0 0
        %3006 = vmatpush1.bf16.msra.mxu0 0
        %3007 = vmatprep.subr.bf16.mxu0 0
        %3008 = vmatpush1.bf16.msra.mxu0 0
        %3009 = vmatprep.subr.bf16.mxu0 0
        %3010 = vmatpush1.bf16.msra.mxu0 0
        %3011 = vmatprep.mubr.bf16.mxu0 0
        %3012 = vmatmul.mubr.bf16.gmra.mrb[0].mxu0 %v2977
        %v3013 = vpop.f32.mrb[0].mxu0
        %v3014 = vadd.f32 %v2946, %v3013
        %v3015 = vpop.f32.mrb[0].mxu0
        %v3016 = vpop.f32.mrb[0].mxu0
        %v3017 = vadd.f32 %v2949, %v3016
        %v3018 = vpop.f32.mrb[0].mxu0
        %3019 = vdwg.mxu0
        %v3020 = vadd.f32 %v1731, %v3014
        %v3021 = vadd.f32 %v1732, %v3017
        %v3022 = vld [vmem:[%s1070] sm:$0x1]
        %v3024 = vlaneseq
        %v3025 = vshrl.u32 %v3024, 7
        %v3026 = vsub.s32 0, %v3025
        %v3027 = vrot.slane %v3022, %v3026
        %v3029 = vadd.f32 %v3020, %v3027
        %v3030 = vadd.f32 %v3021, %v3027
        %v3031 = vld [vmem:[%s1078] sm:$0x1]
        %v3032 = vld [vmem:[%s1086] sm:$0x1]
        %3033 = vadd.xlane.f32.xlu0 %v3029
        %v3034 = vpop.xlane.xlu0 %3033
        %3035 = vadd.xlane.f32.xlu0 %v3030
        %v3036 = vpop.xlane.xlu0 %3035
        %v3037 = vmul.f32 %v3034, %v1739
        %v3038 = vmul.f32 %v3036, %v1739
        %v3039 = vsub.f32 %v3029, %v3037
        %v3040 = vsub.f32 %v3030, %v3038
        %v3041 = vmul.f32 %v3039, %v3039
        %v3042 = vmul.f32 %v3040, %v3040
        %3043 = vadd.xlane.f32.xlu0 %v3041
        %v3044 = vpop.xlane.xlu0 %3043
        %3045 = vadd.xlane.f32.xlu0 %v3042
        %v3046 = vpop.xlane.xlu0 %3045
        %v3047 = vmul.f32 %v3044, %v1739
        %v3048 = vmul.f32 %v3046, %v1739
        %v3049 = vadd.f32 %v3047, 1e-05
        %v3050 = vadd.f32 %v3048, 1e-05
        %v3051 = vrsqrt.pop %v3049
        %v3052 = vrsqrt.pop %v3050
        %v3053 = vmul.f32 %v3039, %v3051
        %v3054 = vmul.f32 %v3040, %v3052
        %v3056 = vlaneseq
        %v3057 = vshrl.u32 %v3056, 7
        %v3058 = vsub.s32 0, %v3057
        %v3059 = vrot.slane %v3031, %v3058
        %v3061 = vmul.f32 %v3053, %v3059
        %v3062 = vmul.f32 %v3054, %v3059
        %v3064 = vlaneseq
        %v3065 = vshrl.u32 %v3064, 7
        %v3066 = vsub.s32 0, %v3065
        %v3067 = vrot.slane %v3032, %v3066
        %v3069 = vadd.f32 %v3061, %v3067
        %v3070 = vadd.f32 %v3062, %v3067
        %v3071 = vpack.c.bf16 %v3070, %v3069
        %v3072 = vld [vmem:[%s1248] sm:$0xff]
        %v3073 = vld [vmem:[%s1248 + $0x8] sm:$0xff]
        %v3074 = vld [vmem:[%s1248 + $0x10] sm:$0xff]
        %v3075 = vld [vmem:[%s1248 + $0x18] sm:$0xff]
        %v3076 = vld [vmem:[%s1248 + $0x20] sm:$0xff]
        %v3077 = vld [vmem:[%s1248 + $0x28] sm:$0xff]
        %v3078 = vld [vmem:[%s1248 + $0x30] sm:$0xff]
        %v3079 = vld [vmem:[%s1248 + $0x38] sm:$0xff]
        %v3080 = vld [vmem:[%s1248 + $0x40] sm:$0xff]
        %v3081 = vld [vmem:[%s1248 + $0x48] sm:$0xff]
        %v3082 = vld [vmem:[%s1248 + $0x50] sm:$0xff]
        %v3083 = vld [vmem:[%s1248 + $0x58] sm:$0xff]
        %v3084 = vld [vmem:[%s1248 + $0x60] sm:$0xff]
        %v3085 = vld [vmem:[%s1248 + $0x68] sm:$0xff]
        %v3086 = vld [vmem:[%s1248 + $0x70] sm:$0xff]
        %v3087 = vld [vmem:[%s1248 + $0x78] sm:$0xff]
        %v3088 = vld [vmem:[%s1248 + $0x80] sm:$0xff]
        %v3089 = vld [vmem:[%s1248 + $0x88] sm:$0xff]
        %v3090 = vld [vmem:[%s1248 + $0x90] sm:$0xff]
        %v3091 = vld [vmem:[%s1248 + $0x98] sm:$0xff]
        %v3092 = vld [vmem:[%s1248 + $0xa0] sm:$0xff]
        %v3093 = vld [vmem:[%s1248 + $0xa8] sm:$0xff]
        %v3094 = vld [vmem:[%s1248 + $0xb0] sm:$0xff]
        %v3095 = vld [vmem:[%s1248 + $0xb8] sm:$0xff]
        %v3096 = vld [vmem:[%s1248 + $0xc0] sm:$0xff]
        %v3097 = vld [vmem:[%s1248 + $0xc8] sm:$0xff]
        %v3098 = vld [vmem:[%s1248 + $0xd0] sm:$0xff]
        %v3099 = vld [vmem:[%s1248 + $0xd8] sm:$0xff]
        %v3100 = vld [vmem:[%s1248 + $0xe0] sm:$0xff]
        %v3101 = vld [vmem:[%s1248 + $0xe8] sm:$0xff]
        %v3102 = vld [vmem:[%s1248 + $0xf0] sm:$0xff]
        %v3103 = vld [vmem:[%s1248 + $0xf8] sm:$0xff]
        %v3104 = vld [vmem:[%s1095] sm:$0xf]
        %v3106 = vlaneseq
        %v3107 = vshrl.u32 %v3106, 7
        %v3108 = vsub.s32 0, %v3107
        %v3109 = vrot.slane %v3104, %v3108
        %v3110 = vlaneseq
        %v3111 = vshrl.u32 %v3110, 7
        %v3112 = vsub.s32 1, %v3111
        %v3113 = vrot.slane %v3104, %v3112
        %v3114 = vlaneseq
        %v3115 = vshrl.u32 %v3114, 7
        %v3116 = vsub.s32 2, %v3115
        %v3117 = vrot.slane %v3104, %v3116
        %v3118 = vlaneseq
        %v3119 = vshrl.u32 %v3118, 7
        %v3120 = vsub.s32 3, %v3119
        %v3121 = vrot.slane %v3104, %v3120
        %v3158 = vunpack.c.l.b16 %v3072
        %v3159 = vunpack.c.h.b16 %v3072
        %v3160 = vunpack.c.l.b16 %v3073
        %v3161 = vunpack.c.h.b16 %v3073
        %v3162 = vunpack.c.l.b16 %v3074
        %v3163 = vunpack.c.h.b16 %v3074
        %v3164 = vunpack.c.l.b16 %v3075
        %v3165 = vunpack.c.h.b16 %v3075
        %v3166 = vunpack.c.l.b16 %v3076
        %v3167 = vunpack.c.h.b16 %v3076
        %v3168 = vunpack.c.l.b16 %v3077
        %v3169 = vunpack.c.h.b16 %v3077
        %v3170 = vunpack.c.l.b16 %v3078
        %v3171 = vunpack.c.h.b16 %v3078
        %v3172 = vunpack.c.l.b16 %v3079
        %v3173 = vunpack.c.h.b16 %v3079
        %v3174 = vunpack.c.l.b16 %v3080
        %v3175 = vunpack.c.h.b16 %v3080
        %v3176 = vunpack.c.l.b16 %v3081
        %v3177 = vunpack.c.h.b16 %v3081
        %v3178 = vunpack.c.l.b16 %v3082
        %v3179 = vunpack.c.h.b16 %v3082
        %v3180 = vunpack.c.l.b16 %v3083
        %v3181 = vunpack.c.h.b16 %v3083
        %v3182 = vunpack.c.l.b16 %v3084
        %v3183 = vunpack.c.h.b16 %v3084
        %v3184 = vunpack.c.l.b16 %v3085
        %v3185 = vunpack.c.h.b16 %v3085
        %v3186 = vunpack.c.l.b16 %v3086
        %v3187 = vunpack.c.h.b16 %v3086
        %v3188 = vunpack.c.l.b16 %v3087
        %v3189 = vunpack.c.h.b16 %v3087
        %v3190 = vunpack.c.l.b16 %v3088
        %v3191 = vunpack.c.h.b16 %v3088
        %v3192 = vunpack.c.l.b16 %v3089
        %v3193 = vunpack.c.h.b16 %v3089
        %v3194 = vunpack.c.l.b16 %v3090
        %v3195 = vunpack.c.h.b16 %v3090
        %v3196 = vunpack.c.l.b16 %v3091
        %v3197 = vunpack.c.h.b16 %v3091
        %v3198 = vunpack.c.l.b16 %v3092
        %v3199 = vunpack.c.h.b16 %v3092
        %v3200 = vunpack.c.l.b16 %v3093
        %v3201 = vunpack.c.h.b16 %v3093
        %v3202 = vunpack.c.l.b16 %v3094
        %v3203 = vunpack.c.h.b16 %v3094
        %v3204 = vunpack.c.l.b16 %v3095
        %v3205 = vunpack.c.h.b16 %v3095
        %v3206 = vunpack.c.l.b16 %v3096
        %v3207 = vunpack.c.h.b16 %v3096
        %v3208 = vunpack.c.l.b16 %v3097
        %v3209 = vunpack.c.h.b16 %v3097
        %v3210 = vunpack.c.l.b16 %v3098
        %v3211 = vunpack.c.h.b16 %v3098
        %v3212 = vunpack.c.l.b16 %v3099
        %v3213 = vunpack.c.h.b16 %v3099
        %v3214 = vunpack.c.l.b16 %v3100
        %v3215 = vunpack.c.h.b16 %v3100
        %v3216 = vunpack.c.l.b16 %v3101
        %v3217 = vunpack.c.h.b16 %v3101
        %v3218 = vunpack.c.l.b16 %v3102
        %v3219 = vunpack.c.h.b16 %v3102
        %v3220 = vunpack.c.l.b16 %v3103
        %v3221 = vunpack.c.h.b16 %v3103
        %v3222 = vpack.c.b16 %v3162, %v3158
        %v3223 = vpack.c.b16 %v3163, %v3159
        %v3224 = vpack.c.b16 %v3164, %v3160
        %v3225 = vpack.c.b16 %v3165, %v3161
        %v3226 = vpack.c.b16 %v3170, %v3166
        %v3227 = vpack.c.b16 %v3171, %v3167
        %v3228 = vpack.c.b16 %v3172, %v3168
        %v3229 = vpack.c.b16 %v3173, %v3169
        %v3230 = vpack.c.b16 %v3178, %v3174
        %v3231 = vpack.c.b16 %v3179, %v3175
        %v3232 = vpack.c.b16 %v3180, %v3176
        %v3233 = vpack.c.b16 %v3181, %v3177
        %v3234 = vpack.c.b16 %v3186, %v3182
        %v3235 = vpack.c.b16 %v3187, %v3183
        %v3236 = vpack.c.b16 %v3188, %v3184
        %v3237 = vpack.c.b16 %v3189, %v3185
        %v3238 = vpack.c.b16 %v3194, %v3190
        %v3239 = vpack.c.b16 %v3195, %v3191
        %v3240 = vpack.c.b16 %v3196, %v3192
        %v3241 = vpack.c.b16 %v3197, %v3193
        %v3242 = vpack.c.b16 %v3202, %v3198
        %v3243 = vpack.c.b16 %v3203, %v3199
        %v3244 = vpack.c.b16 %v3204, %v3200
        %v3245 = vpack.c.b16 %v3205, %v3201
        %v3246 = vpack.c.b16 %v3210, %v3206
        %v3247 = vpack.c.b16 %v3211, %v3207
        %v3248 = vpack.c.b16 %v3212, %v3208
        %v3249 = vpack.c.b16 %v3213, %v3209
        %v3250 = vpack.c.b16 %v3218, %v3214
        %v3251 = vpack.c.b16 %v3219, %v3215
        %v3252 = vpack.c.b16 %v3220, %v3216
        %v3253 = vpack.c.b16 %v3221, %v3217
        %3286 = vmatprep.subr.bf16.mxu0 %v3223
        %3287 = vmatpush1.bf16.msra.mxu0 %v3222
        %3288 = vmatprep.subr.bf16.mxu0 %v3227
        %3289 = vmatpush1.bf16.msra.mxu0 %v3226
        %3290 = vmatprep.subr.bf16.mxu0 %v3231
        %3291 = vmatpush1.bf16.msra.mxu0 %v3230
        %3292 = vmatprep.subr.bf16.mxu0 %v3235
        %3293 = vmatpush1.bf16.msra.mxu0 %v3234
        %3294 = vmatprep.subr.bf16.mxu0 %v3239
        %3295 = vmatpush1.bf16.msra.mxu0 %v3238
        %3296 = vmatprep.subr.bf16.mxu0 %v3243
        %3297 = vmatpush1.bf16.msra.mxu0 %v3242
        %3298 = vmatprep.subr.bf16.mxu0 %v3247
        %3299 = vmatpush1.bf16.msra.mxu0 %v3246
        %3300 = vmatprep.subr.bf16.mxu0 %v3251
        %3301 = vmatpush1.bf16.msra.mxu0 %v3250
        %3302 = vmatprep.subr.bf16.mxu0 0
        %3303 = vmatpush1.bf16.msra.mxu0 0
        %3304 = vmatprep.subr.bf16.mxu0 0
        %3305 = vmatpush1.bf16.msra.mxu0 0
        %3306 = vmatprep.subr.bf16.mxu0 0
        %3307 = vmatpush1.bf16.msra.mxu0 0
        %3308 = vmatprep.subr.bf16.mxu0 0
        %3309 = vmatpush1.bf16.msra.mxu0 0
        %3310 = vmatprep.subr.bf16.mxu0 0
        %3311 = vmatpush1.bf16.msra.mxu0 0
        %3312 = vmatprep.subr.bf16.mxu0 0
        %3313 = vmatpush1.bf16.msra.mxu0 0
        %3314 = vmatprep.subr.bf16.mxu0 0
        %3315 = vmatpush1.bf16.msra.mxu0 0
        %3316 = vmatprep.subr.bf16.mxu0 0
        %3317 = vmatpush1.bf16.msra.mxu0 0
        %3318 = vmatprep.mubr.bf16.mxu0 0
        %3319 = vmatmul.mubr.bf16.gmra.mrb[0].mxu0 %v3071
        %v3320 = vpop.f32.mrb[0].mxu0
        %v3321 = vadd.f32 %v3109, %v3320
        %v3322 = vpop.f32.mrb[0].mxu0
        %v3323 = vadd.f32 %v3113, %v3322
        %v3324 = vpop.f32.mrb[0].mxu0
        %v3325 = vadd.f32 %v3109, %v3324
        %v3326 = vpop.f32.mrb[0].mxu0
        %v3327 = vadd.f32 %v3113, %v3326
        %3328 = vdwg.mxu0
        %3329 = vmatprep.subr.bf16.mxu0 %v3225
        %3330 = vmatpush1.bf16.msra.mxu0 %v3224
        %3331 = vmatprep.subr.bf16.mxu0 %v3229
        %3332 = vmatpush1.bf16.msra.mxu0 %v3228
        %3333 = vmatprep.subr.bf16.mxu0 %v3233
        %3334 = vmatpush1.bf16.msra.mxu0 %v3232
        %3335 = vmatprep.subr.bf16.mxu0 %v3237
        %3336 = vmatpush1.bf16.msra.mxu0 %v3236
        %3337 = vmatprep.subr.bf16.mxu0 %v3241
        %3338 = vmatpush1.bf16.msra.mxu0 %v3240
        %3339 = vmatprep.subr.bf16.mxu0 %v3245
        %3340 = vmatpush1.bf16.msra.mxu0 %v3244
        %3341 = vmatprep.subr.bf16.mxu0 %v3249
        %3342 = vmatpush1.bf16.msra.mxu0 %v3248
        %3343 = vmatprep.subr.bf16.mxu0 %v3253
        %3344 = vmatpush1.bf16.msra.mxu0 %v3252
        %3345 = vmatprep.subr.bf16.mxu0 0
        %3346 = vmatpush1.bf16.msra.mxu0 0
        %3347 = vmatprep.subr.bf16.mxu0 0
        %3348 = vmatpush1.bf16.msra.mxu0 0
        %3349 = vmatprep.subr.bf16.mxu0 0
        %3350 = vmatpush1.bf16.msra.mxu0 0
        %3351 = vmatprep.subr.bf16.mxu0 0
        %3352 = vmatpush1.bf16.msra.mxu0 0
        %3353 = vmatprep.subr.bf16.mxu0 0
        %3354 = vmatpush1.bf16.msra.mxu0 0
        %3355 = vmatprep.subr.bf16.mxu0 0
        %3356 = vmatpush1.bf16.msra.mxu0 0
        %3357 = vmatprep.subr.bf16.mxu0 0
        %3358 = vmatpush1.bf16.msra.mxu0 0
        %3359 = vmatprep.subr.bf16.mxu0 0
        %3360 = vmatpush1.bf16.msra.mxu0 0
        %3361 = vmatprep.mubr.bf16.mxu0 0
        %3362 = vmatmul.mubr.bf16.gmra.mrb[0].mxu0 %v3071
        %v3363 = vpop.f32.mrb[0].mxu0
        %v3364 = vadd.f32 %v3117, %v3363
        %v3365 = vpop.f32.mrb[0].mxu0
        %v3366 = vadd.f32 %v3121, %v3365
        %v3367 = vpop.f32.mrb[0].mxu0
        %v3368 = vadd.f32 %v3117, %v3367
        %v3369 = vpop.f32.mrb[0].mxu0
        %v3370 = vadd.f32 %v3121, %v3369
        %3371 = vdwg.mxu0
        %vm3372 = vcmp.ge.f32.partialorder %v3321, 0.0
        %vm3373 = vcmp.ge.f32.partialorder %v3323, 0.0
        %vm3374 = vcmp.ge.f32.partialorder %v3364, 0.0
        %vm3375 = vcmp.ge.f32.partialorder %v3366, 0.0
        %vm3376 = vcmp.ge.f32.partialorder %v3325, 0.0
        %vm3377 = vcmp.ge.f32.partialorder %v3327, 0.0
        %vm3378 = vcmp.ge.f32.partialorder %v3368, 0.0
        %vm3379 = vcmp.ge.f32.partialorder %v3370, 0.0
        %v3380 = vmul.f32 %v3321, 0.01
        %v3381 = vmul.f32 %v3323, 0.01
        %v3382 = vmul.f32 %v3364, 0.01
        %v3383 = vmul.f32 %v3366, 0.01
        %v3384 = vmul.f32 %v3325, 0.01
        %v3385 = vmul.f32 %v3327, 0.01
        %v3386 = vmul.f32 %v3368, 0.01
        %v3387 = vmul.f32 %v3370, 0.01
        %v3388 = vsel %vm3372, %v3321, %v3380
        %v3389 = vsel %vm3373, %v3323, %v3381
        %v3390 = vsel %vm3374, %v3364, %v3382
        %v3391 = vsel %vm3375, %v3366, %v3383
        %v3392 = vsel %vm3376, %v3325, %v3384
        %v3393 = vsel %vm3377, %v3327, %v3385
        %v3394 = vsel %vm3378, %v3368, %v3386
        %v3395 = vsel %vm3379, %v3370, %v3387
        %v3396 = vpack.c.bf16 %v3392, %v3388
        %v3397 = vpack.c.bf16 %v3393, %v3389
        %v3398 = vpack.c.bf16 %v3394, %v3390
        %v3399 = vpack.c.bf16 %v3395, %v3391
        %v3400 = vld [vmem:[%s1104] sm:$0xf]
        %v3401 = vld [vmem:[%s1104 + $0x4] sm:$0xf]
        %v3402 = vld [vmem:[%s1104 + $0x8] sm:$0xf]
        %v3403 = vld [vmem:[%s1104 + $0xc] sm:$0xf]
        %v3404 = vld [vmem:[%s1104 + $0x10] sm:$0xf]
        %v3405 = vld [vmem:[%s1104 + $0x14] sm:$0xf]
        %v3406 = vld [vmem:[%s1104 + $0x18] sm:$0xf]
        %v3407 = vld [vmem:[%s1104 + $0x1c] sm:$0xf]
        %v3408 = vld [vmem:[%s1104 + $0x20] sm:$0xf]
        %v3409 = vld [vmem:[%s1104 + $0x24] sm:$0xf]
        %v3410 = vld [vmem:[%s1104 + $0x28] sm:$0xf]
        %v3411 = vld [vmem:[%s1104 + $0x2c] sm:$0xf]
        %v3412 = vld [vmem:[%s1104 + $0x30] sm:$0xf]
        %v3413 = vld [vmem:[%s1104 + $0x34] sm:$0xf]
        %v3414 = vld [vmem:[%s1104 + $0x38] sm:$0xf]
        %v3415 = vld [vmem:[%s1104 + $0x3c] sm:$0xf]
        %v3416 = vld [vmem:[%s1104 + $0x40] sm:$0xf]
        %v3417 = vld [vmem:[%s1104 + $0x44] sm:$0xf]
        %v3418 = vld [vmem:[%s1104 + $0x48] sm:$0xf]
        %v3419 = vld [vmem:[%s1104 + $0x4c] sm:$0xf]
        %v3420 = vld [vmem:[%s1104 + $0x50] sm:$0xf]
        %v3421 = vld [vmem:[%s1104 + $0x54] sm:$0xf]
        %v3422 = vld [vmem:[%s1104 + $0x58] sm:$0xf]
        %v3423 = vld [vmem:[%s1104 + $0x5c] sm:$0xf]
        %v3424 = vld [vmem:[%s1104 + $0x60] sm:$0xf]
        %v3425 = vld [vmem:[%s1104 + $0x64] sm:$0xf]
        %v3426 = vld [vmem:[%s1104 + $0x68] sm:$0xf]
        %v3427 = vld [vmem:[%s1104 + $0x6c] sm:$0xf]
        %v3428 = vld [vmem:[%s1104 + $0x70] sm:$0xf]
        %v3429 = vld [vmem:[%s1104 + $0x74] sm:$0xf]
        %v3430 = vld [vmem:[%s1104 + $0x78] sm:$0xf]
        %v3431 = vld [vmem:[%s1104 + $0x7c] sm:$0xf]
        %v3432 = vld [vmem:[%s1104 + $0x80] sm:$0xf]
        %v3433 = vld [vmem:[%s1104 + $0x84] sm:$0xf]
        %v3434 = vld [vmem:[%s1104 + $0x88] sm:$0xf]
        %v3435 = vld [vmem:[%s1104 + $0x8c] sm:$0xf]
        %v3436 = vld [vmem:[%s1104 + $0x90] sm:$0xf]
        %v3437 = vld [vmem:[%s1104 + $0x94] sm:$0xf]
        %v3438 = vld [vmem:[%s1104 + $0x98] sm:$0xf]
        %v3439 = vld [vmem:[%s1104 + $0x9c] sm:$0xf]
        %v3440 = vld [vmem:[%s1104 + $0xa0] sm:$0xf]
        %v3441 = vld [vmem:[%s1104 + $0xa4] sm:$0xf]
        %v3442 = vld [vmem:[%s1104 + $0xa8] sm:$0xf]
        %v3443 = vld [vmem:[%s1104 + $0xac] sm:$0xf]
        %v3444 = vld [vmem:[%s1104 + $0xb0] sm:$0xf]
        %v3445 = vld [vmem:[%s1104 + $0xb4] sm:$0xf]
        %v3446 = vld [vmem:[%s1104 + $0xb8] sm:$0xf]
        %v3447 = vld [vmem:[%s1104 + $0xbc] sm:$0xf]
        %v3448 = vld [vmem:[%s1104 + $0xc0] sm:$0xf]
        %v3449 = vld [vmem:[%s1104 + $0xc4] sm:$0xf]
        %v3450 = vld [vmem:[%s1104 + $0xc8] sm:$0xf]
        %v3451 = vld [vmem:[%s1104 + $0xcc] sm:$0xf]
        %v3452 = vld [vmem:[%s1104 + $0xd0] sm:$0xf]
        %v3453 = vld [vmem:[%s1104 + $0xd4] sm:$0xf]
        %v3454 = vld [vmem:[%s1104 + $0xd8] sm:$0xf]
        %v3455 = vld [vmem:[%s1104 + $0xdc] sm:$0xf]
        %v3456 = vld [vmem:[%s1104 + $0xe0] sm:$0xf]
        %v3457 = vld [vmem:[%s1104 + $0xe4] sm:$0xf]
        %v3458 = vld [vmem:[%s1104 + $0xe8] sm:$0xf]
        %v3459 = vld [vmem:[%s1104 + $0xec] sm:$0xf]
        %v3460 = vld [vmem:[%s1104 + $0xf0] sm:$0xf]
        %v3461 = vld [vmem:[%s1104 + $0xf4] sm:$0xf]
        %v3462 = vld [vmem:[%s1104 + $0xf8] sm:$0xf]
        %v3463 = vld [vmem:[%s1104 + $0xfc] sm:$0xf]
        %v3528 = vunpack.c.l.b16 %v3400
        %v3529 = vunpack.c.l.b16 %v3401
        %v3530 = vunpack.c.l.b16 %v3402
        %v3531 = vunpack.c.l.b16 %v3403
        %v3532 = vunpack.c.l.b16 %v3404
        %v3533 = vunpack.c.l.b16 %v3405
        %v3534 = vunpack.c.l.b16 %v3406
        %v3535 = vunpack.c.l.b16 %v3407
        %v3536 = vunpack.c.l.b16 %v3408
        %v3537 = vunpack.c.l.b16 %v3409
        %v3538 = vunpack.c.l.b16 %v3410
        %v3539 = vunpack.c.l.b16 %v3411
        %v3540 = vunpack.c.l.b16 %v3412
        %v3541 = vunpack.c.l.b16 %v3413
        %v3542 = vunpack.c.l.b16 %v3414
        %v3543 = vunpack.c.l.b16 %v3415
        %v3544 = vunpack.c.l.b16 %v3416
        %v3545 = vunpack.c.l.b16 %v3417
        %v3546 = vunpack.c.l.b16 %v3418
        %v3547 = vunpack.c.l.b16 %v3419
        %v3548 = vunpack.c.l.b16 %v3420
        %v3549 = vunpack.c.l.b16 %v3421
        %v3550 = vunpack.c.l.b16 %v3422
        %v3551 = vunpack.c.l.b16 %v3423
        %v3552 = vunpack.c.l.b16 %v3424
        %v3553 = vunpack.c.l.b16 %v3425
        %v3554 = vunpack.c.l.b16 %v3426
        %v3555 = vunpack.c.l.b16 %v3427
        %v3556 = vunpack.c.l.b16 %v3428
        %v3557 = vunpack.c.l.b16 %v3429
        %v3558 = vunpack.c.l.b16 %v3430
        %v3559 = vunpack.c.l.b16 %v3431
        %v3560 = vunpack.c.l.b16 %v3432
        %v3561 = vunpack.c.l.b16 %v3433
        %v3562 = vunpack.c.l.b16 %v3434
        %v3563 = vunpack.c.l.b16 %v3435
        %v3564 = vunpack.c.l.b16 %v3436
        %v3565 = vunpack.c.l.b16 %v3437
        %v3566 = vunpack.c.l.b16 %v3438
        %v3567 = vunpack.c.l.b16 %v3439
        %v3568 = vunpack.c.l.b16 %v3440
        %v3569 = vunpack.c.l.b16 %v3441
        %v3570 = vunpack.c.l.b16 %v3442
        %v3571 = vunpack.c.l.b16 %v3443
        %v3572 = vunpack.c.l.b16 %v3444
        %v3573 = vunpack.c.l.b16 %v3445
        %v3574 = vunpack.c.l.b16 %v3446
        %v3575 = vunpack.c.l.b16 %v3447
        %v3576 = vunpack.c.l.b16 %v3448
        %v3577 = vunpack.c.l.b16 %v3449
        %v3578 = vunpack.c.l.b16 %v3450
        %v3579 = vunpack.c.l.b16 %v3451
        %v3580 = vunpack.c.l.b16 %v3452
        %v3581 = vunpack.c.l.b16 %v3453
        %v3582 = vunpack.c.l.b16 %v3454
        %v3583 = vunpack.c.l.b16 %v3455
        %v3584 = vunpack.c.l.b16 %v3456
        %v3585 = vunpack.c.l.b16 %v3457
        %v3586 = vunpack.c.l.b16 %v3458
        %v3587 = vunpack.c.l.b16 %v3459
        %v3588 = vunpack.c.l.b16 %v3460
        %v3589 = vunpack.c.l.b16 %v3461
        %v3590 = vunpack.c.l.b16 %v3462
        %v3591 = vunpack.c.l.b16 %v3463
        %v3592 = vpack.c.b16 %v3529, %v3528
        %v3593 = vpack.c.b16 %v3531, %v3530
        %v3594 = vpack.c.b16 %v3533, %v3532
        %v3595 = vpack.c.b16 %v3535, %v3534
        %v3596 = vpack.c.b16 %v3537, %v3536
        %v3597 = vpack.c.b16 %v3539, %v3538
        %v3598 = vpack.c.b16 %v3541, %v3540
        %v3599 = vpack.c.b16 %v3543, %v3542
        %v3600 = vpack.c.b16 %v3545, %v3544
        %v3601 = vpack.c.b16 %v3547, %v3546
        %v3602 = vpack.c.b16 %v3549, %v3548
        %v3603 = vpack.c.b16 %v3551, %v3550
        %v3604 = vpack.c.b16 %v3553, %v3552
        %v3605 = vpack.c.b16 %v3555, %v3554
        %v3606 = vpack.c.b16 %v3557, %v3556
        %v3607 = vpack.c.b16 %v3559, %v3558
        %v3608 = vpack.c.b16 %v3561, %v3560
        %v3609 = vpack.c.b16 %v3563, %v3562
        %v3610 = vpack.c.b16 %v3565, %v3564
        %v3611 = vpack.c.b16 %v3567, %v3566
        %v3612 = vpack.c.b16 %v3569, %v3568
        %v3613 = vpack.c.b16 %v3571, %v3570
        %v3614 = vpack.c.b16 %v3573, %v3572
        %v3615 = vpack.c.b16 %v3575, %v3574
        %v3616 = vpack.c.b16 %v3577, %v3576
        %v3617 = vpack.c.b16 %v3579, %v3578
        %v3618 = vpack.c.b16 %v3581, %v3580
        %v3619 = vpack.c.b16 %v3583, %v3582
        %v3620 = vpack.c.b16 %v3585, %v3584
        %v3621 = vpack.c.b16 %v3587, %v3586
        %v3622 = vpack.c.b16 %v3589, %v3588
        %v3623 = vpack.c.b16 %v3591, %v3590
        %3656 = vmatprep.subr.bf16.mxu0 0
        %3657 = vmatpush1.bf16.msra.mxu0 %v3592
        %3658 = vmatprep.subr.bf16.mxu0 0
        %3659 = vmatpush1.bf16.msra.mxu0 %v3593
        %3660 = vmatprep.subr.bf16.mxu0 0
        %3661 = vmatpush1.bf16.msra.mxu0 %v3594
        %3662 = vmatprep.subr.bf16.mxu0 0
        %3663 = vmatpush1.bf16.msra.mxu0 %v3595
        %3664 = vmatprep.subr.bf16.mxu0 0
        %3665 = vmatpush1.bf16.msra.mxu0 %v3596
        %3666 = vmatprep.subr.bf16.mxu0 0
        %3667 = vmatpush1.bf16.msra.mxu0 %v3597
        %3668 = vmatprep.subr.bf16.mxu0 0
        %3669 = vmatpush1.bf16.msra.mxu0 %v3598
        %3670 = vmatprep.subr.bf16.mxu0 0
        %3671 = vmatpush1.bf16.msra.mxu0 %v3599
        %3672 = vmatprep.subr.bf16.mxu0 0
        %3673 = vmatpush1.bf16.msra.mxu0 %v3600
        %3674 = vmatprep.subr.bf16.mxu0 0
        %3675 = vmatpush1.bf16.msra.mxu0 %v3601
        %3676 = vmatprep.subr.bf16.mxu0 0
        %3677 = vmatpush1.bf16.msra.mxu0 %v3602
        %3678 = vmatprep.subr.bf16.mxu0 0
        %3679 = vmatpush1.bf16.msra.mxu0 %v3603
        %3680 = vmatprep.subr.bf16.mxu0 0
        %3681 = vmatpush1.bf16.msra.mxu0 %v3604
        %3682 = vmatprep.subr.bf16.mxu0 0
        %3683 = vmatpush1.bf16.msra.mxu0 %v3605
        %3684 = vmatprep.subr.bf16.mxu0 0
        %3685 = vmatpush1.bf16.msra.mxu0 %v3606
        %3686 = vmatprep.subr.bf16.mxu0 0
        %3687 = vmatpush1.bf16.msra.mxu0 %v3607
        %3688 = vmatprep.mubr.bf16.mxu0 %v3397
        %3689 = vmatmul.mubr.bf16.gmra.mrb[0].mxu0 %v3396
        %v3690 = vpop.f32.mrb[0].mxu0
        %v3691 = vadd.f32 0.0, %v3690
        %v3692 = vpop.f32.mrb[0].mxu0
        %v3693 = vpop.f32.mrb[0].mxu0
        %v3694 = vadd.f32 0.0, %v3693
        %v3695 = vpop.f32.mrb[0].mxu0
        %3696 = vdwg.mxu0
        %3697 = vmatprep.subr.bf16.mxu0 0
        %3698 = vmatpush1.bf16.msra.mxu0 %v3608
        %3699 = vmatprep.subr.bf16.mxu0 0
        %3700 = vmatpush1.bf16.msra.mxu0 %v3609
        %3701 = vmatprep.subr.bf16.mxu0 0
        %3702 = vmatpush1.bf16.msra.mxu0 %v3610
        %3703 = vmatprep.subr.bf16.mxu0 0
        %3704 = vmatpush1.bf16.msra.mxu0 %v3611
        %3705 = vmatprep.subr.bf16.mxu0 0
        %3706 = vmatpush1.bf16.msra.mxu0 %v3612
        %3707 = vmatprep.subr.bf16.mxu0 0
        %3708 = vmatpush1.bf16.msra.mxu0 %v3613
        %3709 = vmatprep.subr.bf16.mxu0 0
        %3710 = vmatpush1.bf16.msra.mxu0 %v3614
        %3711 = vmatprep.subr.bf16.mxu0 0
        %3712 = vmatpush1.bf16.msra.mxu0 %v3615
        %3713 = vmatprep.subr.bf16.mxu0 0
        %3714 = vmatpush1.bf16.msra.mxu0 %v3616
        %3715 = vmatprep.subr.bf16.mxu0 0
        %3716 = vmatpush1.bf16.msra.mxu0 %v3617
        %3717 = vmatprep.subr.bf16.mxu0 0
        %3718 = vmatpush1.bf16.msra.mxu0 %v3618
        %3719 = vmatprep.subr.bf16.mxu0 0
        %3720 = vmatpush1.bf16.msra.mxu0 %v3619
        %3721 = vmatprep.subr.bf16.mxu0 0
        %3722 = vmatpush1.bf16.msra.mxu0 %v3620
        %3723 = vmatprep.subr.bf16.mxu0 0
        %3724 = vmatpush1.bf16.msra.mxu0 %v3621
        %3725 = vmatprep.subr.bf16.mxu0 0
        %3726 = vmatpush1.bf16.msra.mxu0 %v3622
        %3727 = vmatprep.subr.bf16.mxu0 0
        %3728 = vmatpush1.bf16.msra.mxu0 %v3623
        %3729 = vmatprep.mubr.bf16.mxu0 %v3399
        %3730 = vmatmul.mubr.bf16.gmra.mrb[0].mxu0 %v3398
        %v3731 = vpop.f32.mrb[0].mxu0
        %v3732 = vadd.f32 %v3691, %v3731
        %v3733 = vpop.f32.mrb[0].mxu0
        %v3734 = vpop.f32.mrb[0].mxu0
        %v3735 = vadd.f32 %v3694, %v3734
        %v3736 = vpop.f32.mrb[0].mxu0
        %3737 = vdwg.mxu0
        %v3738 = vadd.f32 %v3029, %v3732
        %v3739 = vadd.f32 %v3030, %v3735
        %v3740 = vld [vmem:[%s1112] sm:$0x1]
        %v3742 = vlaneseq
        %v3743 = vshrl.u32 %v3742, 7
        %v3744 = vsub.s32 0, %v3743
        %v3745 = vrot.slane %v3740, %v3744
        %v3747 = vadd.f32 %v3738, %v3745
        %v3748 = vadd.f32 %v3739, %v3745
        %3749 = vst [vmem:[#allocation2] sm:$0xff] %v3747
        %3750 = vst [vmem:[#allocation2 + $0x8] sm:$0xff] %v3748
        %p3751 = scmp.eq.s32.totalorder %s57, 1
        // Predicated region
        $region193: #{multi_attention_net.1} parent=123 // pred_check
          %p3752 = pneg %p3751
        $region194: #{multi_attention_net.1} parent=123 // pred_check_branch
          %3754 = sbr.rel (%p3752) target = $region196
        $region195: #{multi_attention_net.1} parent=123 // pred_region
          %vm3755 = vcmp.ge.f32.partialorder %v3747, 0.0
          %vm3756 = vcmp.ge.f32.partialorder %v3748, 0.0
          %v3757 = vmul.f32 %v3747, 0.2
          %v3758 = vmul.f32 %v3748, 0.2
          %v3759 = vsel %vm3755, %v3747, %v3757
          %v3760 = vsel %vm3756, %v3748, %v3758
          %v3761 = vld [vmem:[%s24] sm:$0xff]
          %v3762 = vld [vmem:[%s24 + $0x8] sm:$0xff]
          %v3763 = vld [vmem:[%s24 + $0x10] sm:$0xff]
          %v3764 = vld [vmem:[%s24 + $0x18] sm:$0xff]
          %v3765 = vld [vmem:[%s24 + $0x20] sm:$0xff]
          %v3766 = vld [vmem:[%s24 + $0x28] sm:$0xff]
          %v3767 = vld [vmem:[%s24 + $0x30] sm:$0xff]
          %v3768 = vld [vmem:[%s24 + $0x38] sm:$0xff]
          %v3769 = vld [vmem:[%s24 + $0x40] sm:$0xff]
          %v3770 = vld [vmem:[%s24 + $0x48] sm:$0xff]
          %v3771 = vld [vmem:[%s24 + $0x50] sm:$0xff]
          %v3772 = vld [vmem:[%s24 + $0x58] sm:$0xff]
          %v3773 = vld [vmem:[%s24 + $0x60] sm:$0xff]
          %v3774 = vld [vmem:[%s24 + $0x68] sm:$0xff]
          %v3775 = vld [vmem:[%s24 + $0x70] sm:$0xff]
          %v3776 = vld [vmem:[%s24 + $0x78] sm:$0xff]
          %v3777 = vld [vmem:[#allocation28] sm:$0x1]
          %v3779 = vlaneseq
          %v3780 = vshrl.u32 %v3779, 7
          %v3781 = vsub.s32 0, %v3780
          %v3782 = vrot.slane %v3777, %v3781
          %3784 = vmatprep.subr.mxu0 0.0
          %3785 = vmatpush1.msra.mxu0 %v3761
          %3786 = vmatprep.subr.mxu0 0.0
          %3787 = vmatpush1.msra.mxu0 %v3762
          %3788 = vmatprep.subr.mxu0 0.0
          %3789 = vmatpush1.msra.mxu0 %v3763
          %3790 = vmatprep.subr.mxu0 0.0
          %3791 = vmatpush1.msra.mxu0 %v3764
          %3792 = vmatprep.subr.mxu0 0.0
          %3793 = vmatpush1.msra.mxu0 %v3765
          %3794 = vmatprep.subr.mxu0 0.0
          %3795 = vmatpush1.msra.mxu0 %v3766
          %3796 = vmatprep.subr.mxu0 0.0
          %3797 = vmatpush1.msra.mxu0 %v3767
          %3798 = vmatprep.subr.mxu0 0.0
          %3799 = vmatpush1.msra.mxu0 %v3768
          %3800 = vmatprep.subr.mxu0 0.0
          %3801 = vmatpush1.msra.mxu0 %v3769
          %3802 = vmatprep.subr.mxu0 0.0
          %3803 = vmatpush1.msra.mxu0 %v3770
          %3804 = vmatprep.subr.mxu0 0.0
          %3805 = vmatpush1.msra.mxu0 %v3771
          %3806 = vmatprep.subr.mxu0 0.0
          %3807 = vmatpush1.msra.mxu0 %v3772
          %3808 = vmatprep.subr.mxu0 0.0
          %3809 = vmatpush1.msra.mxu0 %v3773
          %3810 = vmatprep.subr.mxu0 0.0
          %3811 = vmatpush1.msra.mxu0 %v3774
          %3812 = vmatprep.subr.mxu0 0.0
          %3813 = vmatpush1.msra.mxu0 %v3775
          %3814 = vmatprep.subr.mxu0 0.0
          %3815 = vmatpush1.msra.mxu0 %v3776
          %3816 = vmatprep.subr.mxu0 0.0
          %3817 = vmatpush1.msra.mxu0 0.0
          %3818 = vmatprep.subr.mxu0 0.0
          %3819 = vmatpush1.msra.mxu0 0.0
          %3820 = vmatprep.subr.mxu0 0.0
          %3821 = vmatpush1.msra.mxu0 0.0
          %3822 = vmatprep.subr.mxu0 0.0
          %3823 = vmatpush1.msra.mxu0 0.0
          %3824 = vmatprep.subr.mxu0 0.0
          %3825 = vmatpush1.msra.mxu0 0.0
          %3826 = vmatprep.subr.mxu0 0.0
          %3827 = vmatpush1.msra.mxu0 0.0
          %3828 = vmatprep.subr.mxu0 0.0
          %3829 = vmatpush1.msra.mxu0 0.0
          %3830 = vmatprep.subr.mxu0 0.0
          %3831 = vmatpush1.msra.mxu0 0.0
          %3832 = vmatprep.subr.mxu0 0.0
          %3833 = vmatpush1.msra.mxu0 0.0
          %3834 = vmatprep.subr.mxu0 0.0
          %3835 = vmatpush1.msra.mxu0 0.0
          %3836 = vmatprep.subr.mxu0 0.0
          %3837 = vmatpush1.msra.mxu0 0.0
          %3838 = vmatprep.subr.mxu0 0.0
          %3839 = vmatpush1.msra.mxu0 0.0
          %3840 = vmatprep.subr.mxu0 0.0
          %3841 = vmatpush1.msra.mxu0 0.0
          %3842 = vmatprep.subr.mxu0 0.0
          %3843 = vmatpush1.msra.mxu0 0.0
          %3844 = vmatprep.subr.mxu0 0.0
          %3845 = vmatpush1.msra.mxu0 0.0
          %3846 = vmatprep.subr.mxu0 0.0
          %3847 = vmatpush1.msra.mxu0 0.0
          %3848 = vmatprep.mubr.f32.mxu0 0.0
          %3849 = vmatmul.mubr.f32.gmra.mrb[0].mxu0 %v3759
          %v3850 = vpop.f32.mrb[0].mxu0
          %v3851 = vadd.f32 %v3782, %v3850
          %v3852 = vpop.f32.mrb[0].mxu0
          %3853 = vmatprep.mubr.f32.mxu0 0.0
          %3854 = vmatmul.mubr.f32.gmra.mrb[0].mxu0 %v3760
          %v3855 = vpop.f32.mrb[0].mxu0
          %v3856 = vadd.f32 %v3782, %v3855
          %v3857 = vpop.f32.mrb[0].mxu0
          %3858 = vdwg.mxu0
          %vm3859 = vcmask 130048
          %3860 = vst.msk [vmem:[#allocation30] sm:$0xff] %vm3859, %v3851
          %3861 = vst.msk [vmem:[#allocation30 + $0x8] sm:$0xff] %vm3859, %v3856
        $region196: #{multi_attention_net.1} parent=123 // pred_fallthru
          _
        // Predicated region
        $region197: #{multi_attention_net.1} parent=123 // pred_check
          %p3862 = pneg %p681
        $region198: #{multi_attention_net.1} parent=123 // pred_check_branch
          %3864 = sbr.rel (%p3862) target = $region200
        $region199: #{multi_attention_net.1} parent=123 // pred_region
          %s3866 = ssub.s32 256, 256
          %3867 = vsyncadd [#allocation6], %s3866
          %s3868 = sshll.u32 [#allocation30], 4
          %s3869 = int_to_ptr.vmem [resolvable:$true] %s3868
          %3874 = dma.vmem_to_hbm [thread:$0]  %s3869, 256, %s26, [#allocation6], 128, 128, 8
        $region200: #{multi_attention_net.1} parent=123 // pred_fallthru
          _
        // Predicated region
        $region201: #{multi_attention_net.1} parent=123 // pred_check
          %p3875 = pneg %p681
        $region202: #{multi_attention_net.1} parent=123 // pred_check_branch
          %3877 = sbr.rel (%p3875) target = $region204
        $region203: #{multi_attention_net.1} parent=123 // pred_region
          %3878 = dma.done [#allocation6], 256
        $region204: #{multi_attention_net.1} parent=123 // pred_fallthru
          _
      $region124: #{multi_attention_net.1} parent=5 // pred_fallthru
        _
      %p3879 = scmp.le.s32.totalorder 2, %s52
      // Predicated region
      $region205: #{multi_attention_net.1} parent=5 // pred_check
        %p3880 = pneg %p3879
      $region206: #{multi_attention_net.1} parent=5 // pred_check_branch
        %3882 = sbr.rel (%p3880) target = $region208
      $region207: #{multi_attention_net.1} parent=5 // pred_region
        %s3883 = ssub.s32 %s52, 2
      $region208: #{multi_attention_net.1} parent=5 // pred_fallthru
        _
    $region6: #{multi_attention_net.1} parent=1 // loop_footer
      %s56 = sadd.s32 1, %s52
    $region7: #{multi_attention_net.1} parent=1 // loop_footer_branch
      %51 = sbr.rel target = $region3
    $region8: #{multi_attention_net.1} parent=1 // loop_exit
      _
    %3884 = vsyncpa [#allocation5], 1
    %s3885 = scalar_lea.sflag [#allocation5], 1
    %3886 = vsyncpa %s3885, 1
    %3887 = vsyncpa [#allocation8], 1
    %3888 = vsyncpa [#allocation11], 1
    %3889 = vsyncpa [#allocation14], 1
    %s3890 = scalar_lea.sflag [#allocation14], 1
    %3891 = vsyncpa %s3890, 1
    %3892 = vsyncpa [#allocation17], 1
    %s3893 = scalar_lea.sflag [#allocation17], 1
    %3894 = vsyncpa %s3893, 1
    %3895 = vsyncpa [#allocation20], 1
    %s3896 = scalar_lea.sflag [#allocation20], 1
    %3897 = vsyncpa %s3896, 1
    %3898 = vsyncpa [#allocation23], 1
    %s3899 = scalar_lea.sflag [#allocation23], 1
    %3900 = vsyncpa %s3899, 1
    %3901 = vsyncpa [#allocation26], 1
    %s3902 = scalar_lea.sflag [#allocation26], 1
    %3903 = vsyncpa %s3902, 1
    %3904 = vsyncpa [#allocation29], 1
    %3905 = vsyncpa [#allocation6], 1
    %s3906 = scalar_lea.sflag [#allocation6], 1
    %3907 = vsyncpa %s3906, 1

</llo_original>
